<compile_context>
chip_gen: v5e
topology: v5e:2x2
jax: 0.10.0
libtpu: 0.0.40
codegen_flags: <defaults>
</compile_context>

<pallas_src>
import functools

import jax
import jax.numpy as jnp
from jax.experimental import pallas as pl
from jax.experimental.pallas import tpu as pltpu


# ----------------------------------------------------------------------------
# Fused kernel:  out = relu(conv3x3(x) + shift) @ W2 + b2     (BN scale folded in W1)
# ----------------------------------------------------------------------------
def _decoder_kernel(xf_ref, w1_ref, shift_ref, w2_ref, b2_ref, o_ref, *, H, W, C):
    """One image per grid step.

    xf_ref   : (1, (H+3)*(W+2), C) f32   halo-padded image, row-major flattened
    w1_ref   : (9, C, C)           bf16  conv1 taps (dy*3+dx, Cin, Cout), BN scale folded
    shift_ref: (1, C)              f32   folded BN shift (beta - mean*scale)
    w2_ref   : (C, NP)             bf16  conv2 weight, classes zero-padded to NP=128
    b2_ref   : (1, NP)             f32   conv2 bias (zero-padded)
    o_ref    : (1, H*(W+2), NP)    f32   "wide-row" output (junk cols sliced off outside)
    """
    Wp = W + 2
    Mw = H * Wp

    # conv1 as 9 accumulated MXU matmuls over contiguous row-shifted slices.
    acc = None
    for dy in range(3):
        for dx in range(3):
            start = dy * Wp + dx                                  # static offset
            lhs = xf_ref[0, start:start + Mw, :].astype(jnp.bfloat16)   # (Mw, C)
            part = jnp.dot(lhs, w1_ref[dy * 3 + dx],
                           preferred_element_type=jnp.float32)
            acc = part if acc is None else acc + part

    # BN (scale already folded into w1) + ReLU, in f32 on the VPU.
    z = jnp.maximum(acc + shift_ref[...], 0.0)

    # 1x1 conv on the VMEM-resident activation; lane-dense N = 128.
    # TODO(synk): PyTorch runs this GEMM in f32; here bf16 inputs / f32 accumulation.
    y = jnp.dot(z.astype(jnp.bfloat16), w2_ref[...],
                preferred_element_type=jnp.float32) + b2_ref[...]
    o_ref[0, :, :] = y.astype(o_ref.dtype)


# ----------------------------------------------------------------------------
# Forward pass (NHWC in / NHWC out; layout chosen to avoid NCHW<->NHWC transposes)
# ----------------------------------------------------------------------------
@functools.partial(jax.jit, static_argnames=("num_classes",))
def decoder_forward(x_nhwc, params, *, num_classes):
    B, H, W, C = x_nhwc.shape
    Wp = W + 2
    Mw = H * Wp
    NP = 128
    assert num_classes <= NP

    # Halo pad for the 3x3 conv (pad=1); one extra bottom row keeps the last tap's
    # wide-row slice in bounds.  Flatten is a pure metadata op.
    xp = jnp.pad(x_nhwc, ((0, 0), (1, 2), (1, 1), (0, 0)))
    xf = xp.reshape(B, (H + 3) * Wp, C)

    # Fold BN scale into conv1 output channels (f32 fold, then bf16 cast).
    w1f = (params["w1"] * params["bn_scale"].reshape(1, 1, C)).astype(jnp.bfloat16)
    shift = params["bn_shift"]                                     # (1, C) f32

    # Lane-dense final GEMM: pad the class dimension to 128.
    w2p = jnp.pad(params["w2"], ((0, 0), (0, NP - num_classes))).astype(jnp.bfloat16)
    b2p = jnp.pad(params["b2"], ((0, NP - num_classes),)).reshape(1, NP)

    kernel = functools.partial(_decoder_kernel, H=H, W=W, C=C)
    out_wide = pl.pallas_call(
        kernel,
        # f32 output keeps module semantics; switch to bf16 here to halve writeback
        # if downstream (upsample/argmax) tolerates it.
        out_shape=jax.ShapeDtypeStruct((B, Mw, NP), jnp.float32),
        grid=(B,),
        in_specs=[
            pl.BlockSpec((1, (H + 3) * Wp, C), lambda b: (b, 0, 0)),
            # Constant-index operands: block index never changes, so Pallas keeps
            # them VMEM-resident and does not re-issue their DMAs per grid step.
            pl.BlockSpec((9, C, C), lambda b: (0, 0, 0)),
            pl.BlockSpec((1, C), lambda b: (0, 0)),
            pl.BlockSpec((C, NP), lambda b: (0, 0)),
            pl.BlockSpec((1, NP), lambda b: (0, 0)),
        ],
        out_specs=pl.BlockSpec((1, Mw, NP), lambda b: (b, 0, 0)),
        compiler_params=pltpu.CompilerParams(
            dimension_semantics=("parallel",)),
    )(xf, w1f, shift, w2p, b2p)

    # Drop the 2 junk columns per row and the padded classes (cheap, fuses in XLA).
    return out_wide.reshape(B, H, Wp, NP)[:, :, :W, :num_classes]


# ----------------------------------------------------------------------------
# Parameters (deterministic synthetic init; shapes follow the PyTorch module)
# ----------------------------------------------------------------------------
def _bn_fold(key, c, eps=1e-5):
    k0, k1, k2, k3 = jax.random.split(key, 4)
    gamma = jax.random.uniform(k0, (c,), jnp.float32, 0.5, 1.5)
    beta = 0.1 * jax.random.normal(k1, (c,), jnp.float32)
    mean = 0.1 * jax.random.normal(k2, (c,), jnp.float32)
    var = jax.random.uniform(k3, (c,), jnp.float32, 0.5, 1.5)
    scale = gamma / jnp.sqrt(var + eps)
    shift = beta - mean * scale
    return scale.reshape(1, c), shift.reshape(1, c)


def init_params(key, num_classes, c=256):
    ks = jax.random.split(key, 4)
    p = {}
    # conv1: Conv2d(256, 256, 3, padding=1, bias=False); taps laid out (dy*3+dx, Cin, Cout)
    p["w1"] = jax.random.normal(ks[0], (9, c, c), jnp.float32) / jnp.sqrt(9.0 * c)
    # bn1 (inference form, folded)
    p["bn_scale"], p["bn_shift"] = _bn_fold(ks[1], c)
    # conv2: Conv2d(256, num_classes, 1) with bias
    p["w2"] = jax.random.normal(ks[2], (c, num_classes), jnp.float32) / jnp.sqrt(float(c))
    p["b2"] = 0.01 * jax.random.normal(ks[3], (num_classes,), jnp.float32)
    return p


# ----------------------------------------------------------------------------
# Pure-JAX reference (independent formulation, full f32 with HIGHEST precision,
# unfolded BN scale) — checks both the conv lowering and the BN-fold optimization.
# ----------------------------------------------------------------------------
def reference(x_nhwc, params, num_classes):
    B, H, W, C = x_nhwc.shape
    xp = jnp.pad(x_nhwc, ((0, 0), (1, 1), (1, 1), (0, 0)))
    acc = jnp.zeros((B, H, W, C), jnp.float32)
    for dy in range(3):
        for dx in range(3):
            acc = acc + jnp.einsum("bhwc,cd->bhwd",
                                   xp[:, dy:dy + H, dx:dx + W, :],
                                   params["w1"][dy * 3 + dx],
                                   precision=jax.lax.Precision.HIGHEST)
    z = jnp.maximum(acc * params["bn_scale"] + params["bn_shift"], 0.0)
    y = jnp.einsum("bhwc,cd->bhwd", z, params["w2"],
                   precision=jax.lax.Precision.HIGHEST) + params["b2"]
    return y


if __name__ == "__main__":
    num_classes = 21
    B, H, W, C = 2, 8, 8, 256  # Decoder input: 256-channel feature map (NHWC)

    key = jax.random.PRNGKey(0)
    k_feat, k_par = jax.random.split(key)
    x = jax.random.normal(k_feat, (B, H, W, C), jnp.float32)
    params = init_params(k_par, num_classes, c=C)

    out = jax.block_until_ready(decoder_forward(x, params, num_classes=num_classes))
    assert out.shape == (B, H, W, num_classes), out.shape

    ref = jax.block_until_ready(reference(x, params, num_classes))
    max_err = float(jnp.max(jnp.abs(out.astype(jnp.float32) - ref)))
    assert max_err < 5e-2, f"max abs error too large: {max_err}"

    print("KERNEL_OK")
</pallas_src>

<mosaic_0001>
module attributes {stable_mosaic.version = 11 : i64} {
  func.func @_decoder_kernel(%arg0: i32, %arg1: memref<1x110x256xf32, #tpu.memory_space<vmem>>, %arg2: memref<9x256x256xbf16, #tpu.memory_space<vmem>>, %arg3: memref<1x256xf32, #tpu.memory_space<vmem>>, %arg4: memref<256x128xbf16, #tpu.memory_space<vmem>>, %arg5: memref<1x128xf32, #tpu.memory_space<vmem>>, %arg6: memref<1x80x128xf32, #tpu.memory_space<vmem>>) attributes {dimension_semantics = [#tpu.dimension_semantics<parallel>], iteration_bounds = array<i64: 2>, scalar_prefetch = 0 : i64, scratch_operands = 0 : i64, tpu.core_type = #tpu.core_type<tc>, window_params = [{transform_indices = @transform_0, window_bounds = array<i64: 1, 110, 256>}, {pipeline_mode = #tpu.pipeline_mode<synchronous>, transform_indices = @transform_1, window_bounds = array<i64: 9, 256, 256>}, {pipeline_mode = #tpu.pipeline_mode<synchronous>, transform_indices = @transform_2, window_bounds = array<i64: 1, 256>}, {pipeline_mode = #tpu.pipeline_mode<synchronous>, transform_indices = @transform_3, window_bounds = array<i64: 256, 128>}, {pipeline_mode = #tpu.pipeline_mode<synchronous>, transform_indices = @transform_4, window_bounds = array<i64: 1, 128>}, {transform_indices = @transform_5, window_bounds = array<i64: 1, 80, 128>}]} {
    %c0 = arith.constant 0 : index
    %c0_0 = arith.constant 0 : index
    %c0_1 = arith.constant 0 : index
    %0 = vector.load %arg1[%c0, %c0_0, %c0_1] : memref<1x110x256xf32, #tpu.memory_space<vmem>>, vector<1x80x256xf32>
    %1 = vector.shape_cast %0 : vector<1x80x256xf32> to vector<80x256xf32>
    %2 = arith.truncf %1 : vector<80x256xf32> to vector<80x256xbf16>
    %c0_2 = arith.constant 0 : index
    %c0_3 = arith.constant 0 : index
    %c0_4 = arith.constant 0 : index
    %3 = vector.load %arg2[%c0_2, %c0_3, %c0_4] : memref<9x256x256xbf16, #tpu.memory_space<vmem>>, vector<1x256x256xbf16>
    %4 = vector.shape_cast %3 : vector<1x256x256xbf16> to vector<256x256xbf16>
    %cst = arith.constant dense<0.000000e+00> : vector<80x256xf32>
    %5 = tpu.matmul %2, %4, %cst {dimension_numbers = #tpu.dot_dimension_numbers<[1], [0], [0], [1], [0, 0, 1, 1], [], []>} : vector<80x256xbf16>, vector<256x256xbf16>, vector<80x256xf32> -> vector<80x256xf32>
    %c0_5 = arith.constant 0 : index
    %c1 = arith.constant 1 : index
    %c0_6 = arith.constant 0 : index
    %6 = vector.load %arg1[%c0_5, %c1, %c0_6] : memref<1x110x256xf32, #tpu.memory_space<vmem>>, vector<1x80x256xf32>
    %7 = vector.shape_cast %6 : vector<1x80x256xf32> to vector<80x256xf32>
    %8 = arith.truncf %7 : vector<80x256xf32> to vector<80x256xbf16>
    %c1_7 = arith.constant 1 : index
    %c0_8 = arith.constant 0 : index
    %c0_9 = arith.constant 0 : index
    %9 = vector.load %arg2[%c1_7, %c0_8, %c0_9] : memref<9x256x256xbf16, #tpu.memory_space<vmem>>, vector<1x256x256xbf16>
    %10 = vector.shape_cast %9 : vector<1x256x256xbf16> to vector<256x256xbf16>
    %cst_10 = arith.constant dense<0.000000e+00> : vector<80x256xf32>
    %11 = tpu.matmul %8, %10, %cst_10 {dimension_numbers = #tpu.dot_dimension_numbers<[1], [0], [0], [1], [0, 0, 1, 1], [], []>} : vector<80x256xbf16>, vector<256x256xbf16>, vector<80x256xf32> -> vector<80x256xf32>
    %12 = arith.addf %5, %11 : vector<80x256xf32>
    %c0_11 = arith.constant 0 : index
    %c2 = arith.constant 2 : index
    %c0_12 = arith.constant 0 : index
    %13 = vector.load %arg1[%c0_11, %c2, %c0_12] : memref<1x110x256xf32, #tpu.memory_space<vmem>>, vector<1x80x256xf32>
    %14 = vector.shape_cast %13 : vector<1x80x256xf32> to vector<80x256xf32>
    %15 = arith.truncf %14 : vector<80x256xf32> to vector<80x256xbf16>
    %c2_13 = arith.constant 2 : index
    %c0_14 = arith.constant 0 : index
    %c0_15 = arith.constant 0 : index
    %16 = vector.load %arg2[%c2_13, %c0_14, %c0_15] : memref<9x256x256xbf16, #tpu.memory_space<vmem>>, vector<1x256x256xbf16>
    %17 = vector.shape_cast %16 : vector<1x256x256xbf16> to vector<256x256xbf16>
    %cst_16 = arith.constant dense<0.000000e+00> : vector<80x256xf32>
    %18 = tpu.matmul %15, %17, %cst_16 {dimension_numbers = #tpu.dot_dimension_numbers<[1], [0], [0], [1], [0, 0, 1, 1], [], []>} : vector<80x256xbf16>, vector<256x256xbf16>, vector<80x256xf32> -> vector<80x256xf32>
    %19 = arith.addf %12, %18 : vector<80x256xf32>
    %c0_17 = arith.constant 0 : index
    %c10 = arith.constant 10 : index
    %c0_18 = arith.constant 0 : index
    %20 = vector.load %arg1[%c0_17, %c10, %c0_18] : memref<1x110x256xf32, #tpu.memory_space<vmem>>, vector<1x80x256xf32>
    %21 = vector.shape_cast %20 : vector<1x80x256xf32> to vector<80x256xf32>
    %22 = arith.truncf %21 : vector<80x256xf32> to vector<80x256xbf16>
    %c3 = arith.constant 3 : index
    %c0_19 = arith.constant 0 : index
    %c0_20 = arith.constant 0 : index
    %23 = vector.load %arg2[%c3, %c0_19, %c0_20] : memref<9x256x256xbf16, #tpu.memory_space<vmem>>, vector<1x256x256xbf16>
    %24 = vector.shape_cast %23 : vector<1x256x256xbf16> to vector<256x256xbf16>
    %cst_21 = arith.constant dense<0.000000e+00> : vector<80x256xf32>
    %25 = tpu.matmul %22, %24, %cst_21 {dimension_numbers = #tpu.dot_dimension_numbers<[1], [0], [0], [1], [0, 0, 1, 1], [], []>} : vector<80x256xbf16>, vector<256x256xbf16>, vector<80x256xf32> -> vector<80x256xf32>
    %26 = arith.addf %19, %25 : vector<80x256xf32>
    %c0_22 = arith.constant 0 : index
    %c11 = arith.constant 11 : index
    %c0_23 = arith.constant 0 : index
    %27 = vector.load %arg1[%c0_22, %c11, %c0_23] : memref<1x110x256xf32, #tpu.memory_space<vmem>>, vector<1x80x256xf32>
    %28 = vector.shape_cast %27 : vector<1x80x256xf32> to vector<80x256xf32>
    %29 = arith.truncf %28 : vector<80x256xf32> to vector<80x256xbf16>
    %c4 = arith.constant 4 : index
    %c0_24 = arith.constant 0 : index
    %c0_25 = arith.constant 0 : index
    %30 = vector.load %arg2[%c4, %c0_24, %c0_25] : memref<9x256x256xbf16, #tpu.memory_space<vmem>>, vector<1x256x256xbf16>
    %31 = vector.shape_cast %30 : vector<1x256x256xbf16> to vector<256x256xbf16>
    %cst_26 = arith.constant dense<0.000000e+00> : vector<80x256xf32>
    %32 = tpu.matmul %29, %31, %cst_26 {dimension_numbers = #tpu.dot_dimension_numbers<[1], [0], [0], [1], [0, 0, 1, 1], [], []>} : vector<80x256xbf16>, vector<256x256xbf16>, vector<80x256xf32> -> vector<80x256xf32>
    %33 = arith.addf %26, %32 : vector<80x256xf32>
    %c0_27 = arith.constant 0 : index
    %c12 = arith.constant 12 : index
    %c0_28 = arith.constant 0 : index
    %34 = vector.load %arg1[%c0_27, %c12, %c0_28] : memref<1x110x256xf32, #tpu.memory_space<vmem>>, vector<1x80x256xf32>
    %35 = vector.shape_cast %34 : vector<1x80x256xf32> to vector<80x256xf32>
    %36 = arith.truncf %35 : vector<80x256xf32> to vector<80x256xbf16>
    %c5 = arith.constant 5 : index
    %c0_29 = arith.constant 0 : index
    %c0_30 = arith.constant 0 : index
    %37 = vector.load %arg2[%c5, %c0_29, %c0_30] : memref<9x256x256xbf16, #tpu.memory_space<vmem>>, vector<1x256x256xbf16>
    %38 = vector.shape_cast %37 : vector<1x256x256xbf16> to vector<256x256xbf16>
    %cst_31 = arith.constant dense<0.000000e+00> : vector<80x256xf32>
    %39 = tpu.matmul %36, %38, %cst_31 {dimension_numbers = #tpu.dot_dimension_numbers<[1], [0], [0], [1], [0, 0, 1, 1], [], []>} : vector<80x256xbf16>, vector<256x256xbf16>, vector<80x256xf32> -> vector<80x256xf32>
    %40 = arith.addf %33, %39 : vector<80x256xf32>
    %c0_32 = arith.constant 0 : index
    %c20 = arith.constant 20 : index
    %c0_33 = arith.constant 0 : index
    %41 = vector.load %arg1[%c0_32, %c20, %c0_33] : memref<1x110x256xf32, #tpu.memory_space<vmem>>, vector<1x80x256xf32>
    %42 = vector.shape_cast %41 : vector<1x80x256xf32> to vector<80x256xf32>
    %43 = arith.truncf %42 : vector<80x256xf32> to vector<80x256xbf16>
    %c6 = arith.constant 6 : index
    %c0_34 = arith.constant 0 : index
    %c0_35 = arith.constant 0 : index
    %44 = vector.load %arg2[%c6, %c0_34, %c0_35] : memref<9x256x256xbf16, #tpu.memory_space<vmem>>, vector<1x256x256xbf16>
    %45 = vector.shape_cast %44 : vector<1x256x256xbf16> to vector<256x256xbf16>
    %cst_36 = arith.constant dense<0.000000e+00> : vector<80x256xf32>
    %46 = tpu.matmul %43, %45, %cst_36 {dimension_numbers = #tpu.dot_dimension_numbers<[1], [0], [0], [1], [0, 0, 1, 1], [], []>} : vector<80x256xbf16>, vector<256x256xbf16>, vector<80x256xf32> -> vector<80x256xf32>
    %47 = arith.addf %40, %46 : vector<80x256xf32>
    %c0_37 = arith.constant 0 : index
    %c21 = arith.constant 21 : index
    %c0_38 = arith.constant 0 : index
    %48 = vector.load %arg1[%c0_37, %c21, %c0_38] : memref<1x110x256xf32, #tpu.memory_space<vmem>>, vector<1x80x256xf32>
    %49 = vector.shape_cast %48 : vector<1x80x256xf32> to vector<80x256xf32>
    %50 = arith.truncf %49 : vector<80x256xf32> to vector<80x256xbf16>
    %c7 = arith.constant 7 : index
    %c0_39 = arith.constant 0 : index
    %c0_40 = arith.constant 0 : index
    %51 = vector.load %arg2[%c7, %c0_39, %c0_40] : memref<9x256x256xbf16, #tpu.memory_space<vmem>>, vector<1x256x256xbf16>
    %52 = vector.shape_cast %51 : vector<1x256x256xbf16> to vector<256x256xbf16>
    %cst_41 = arith.constant dense<0.000000e+00> : vector<80x256xf32>
    %53 = tpu.matmul %50, %52, %cst_41 {dimension_numbers = #tpu.dot_dimension_numbers<[1], [0], [0], [1], [0, 0, 1, 1], [], []>} : vector<80x256xbf16>, vector<256x256xbf16>, vector<80x256xf32> -> vector<80x256xf32>
    %54 = arith.addf %47, %53 : vector<80x256xf32>
    %c0_42 = arith.constant 0 : index
    %c22 = arith.constant 22 : index
    %c0_43 = arith.constant 0 : index
    %55 = vector.load %arg1[%c0_42, %c22, %c0_43] : memref<1x110x256xf32, #tpu.memory_space<vmem>>, vector<1x80x256xf32>
    %56 = vector.shape_cast %55 : vector<1x80x256xf32> to vector<80x256xf32>
    %57 = arith.truncf %56 : vector<80x256xf32> to vector<80x256xbf16>
    %c8 = arith.constant 8 : index
    %c0_44 = arith.constant 0 : index
    %c0_45 = arith.constant 0 : index
    %58 = vector.load %arg2[%c8, %c0_44, %c0_45] : memref<9x256x256xbf16, #tpu.memory_space<vmem>>, vector<1x256x256xbf16>
    %59 = vector.shape_cast %58 : vector<1x256x256xbf16> to vector<256x256xbf16>
    %cst_46 = arith.constant dense<0.000000e+00> : vector<80x256xf32>
    %60 = tpu.matmul %57, %59, %cst_46 {dimension_numbers = #tpu.dot_dimension_numbers<[1], [0], [0], [1], [0, 0, 1, 1], [], []>} : vector<80x256xbf16>, vector<256x256xbf16>, vector<80x256xf32> -> vector<80x256xf32>
    %61 = arith.addf %54, %60 : vector<80x256xf32>
    %c0_47 = arith.constant 0 : index
    %c0_48 = arith.constant 0 : index
    %62 = vector.load %arg3[%c0_47, %c0_48] : memref<1x256xf32, #tpu.memory_space<vmem>>, vector<1x256xf32>
    %63 = vector.broadcast %62 : vector<1x256xf32> to vector<80x256xf32>
    %64 = arith.addf %61, %63 : vector<80x256xf32>
    %cst_49 = arith.constant 0.000000e+00 : f32
    %65 = vector.broadcast %cst_49 : f32 to vector<80x256xf32>
    %66 = arith.maximumf %64, %65 : vector<80x256xf32>
    %67 = arith.truncf %66 : vector<80x256xf32> to vector<80x256xbf16>
    %c0_50 = arith.constant 0 : index
    %c0_51 = arith.constant 0 : index
    %68 = vector.load %arg4[%c0_50, %c0_51] : memref<256x128xbf16, #tpu.memory_space<vmem>>, vector<256x128xbf16>
    %cst_52 = arith.constant dense<0.000000e+00> : vector<80x128xf32>
    %69 = tpu.matmul %67, %68, %cst_52 {dimension_numbers = #tpu.dot_dimension_numbers<[1], [0], [0], [1], [0, 0, 1, 1], [], []>} : vector<80x256xbf16>, vector<256x128xbf16>, vector<80x128xf32> -> vector<80x128xf32>
    %c0_53 = arith.constant 0 : index
    %c0_54 = arith.constant 0 : index
    %70 = vector.load %arg5[%c0_53, %c0_54] : memref<1x128xf32, #tpu.memory_space<vmem>>, vector<1x128xf32>
    %71 = vector.broadcast %70 : vector<1x128xf32> to vector<80x128xf32>
    %72 = arith.addf %69, %71 : vector<80x128xf32>
    %c0_55 = arith.constant 0 : index
    %c0_56 = arith.constant 0 : index
    %c0_57 = arith.constant 0 : index
    %73 = vector.load %arg6[%c0_55, %c0_56, %c0_57] : memref<1x80x128xf32, #tpu.memory_space<vmem>>, vector<1x80x128xf32>
    %74 = vector.shape_cast %73 : vector<1x80x128xf32> to vector<80x128xf32>
    %75 = vector.shape_cast %72 : vector<80x128xf32> to vector<1x80x128xf32>
    tpu.vector_store %arg6[%c0_55, %c0_56, %c0_57], %75 {strides = array<i32>} : memref<1x80x128xf32, #tpu.memory_space<vmem>>, vector<1x80x128xf32>,
    return
  }
  func.func @transform_0(%arg0: i32) -> (i32, i32, i32) {
    %c0_i32 = arith.constant 0 : i32
    %c0_i32_0 = arith.constant 0 : i32
    %c0_i32_1 = arith.constant 0 : i32
    return %arg0, %c0_i32, %c0_i32_0 : i32, i32, i32
  }
  func.func @transform_1(%arg0: i32) -> (i32, i32, i32) {
    %c0_i32 = arith.constant 0 : i32
    %c0_i32_0 = arith.constant 0 : i32
    %c0_i32_1 = arith.constant 0 : i32
    %c0_i32_2 = arith.constant 0 : i32
    return %c0_i32, %c0_i32_0, %c0_i32_1 : i32, i32, i32
  }
  func.func @transform_2(%arg0: i32) -> (i32, i32) {
    %c0_i32 = arith.constant 0 : i32
    %c0_i32_0 = arith.constant 0 : i32
    %c0_i32_1 = arith.constant 0 : i32
    return %c0_i32, %c0_i32_0 : i32, i32
  }
  func.func @transform_3(%arg0: i32) -> (i32, i32) {
    %c0_i32 = arith.constant 0 : i32
    %c0_i32_0 = arith.constant 0 : i32
    %c0_i32_1 = arith.constant 0 : i32
    return %c0_i32, %c0_i32_0 : i32, i32
  }
  func.func @transform_4(%arg0: i32) -> (i32, i32) {
    %c0_i32 = arith.constant 0 : i32
    %c0_i32_0 = arith.constant 0 : i32
    %c0_i32_1 = arith.constant 0 : i32
    return %c0_i32, %c0_i32_0 : i32, i32
  }
  func.func @transform_5(%arg0: i32) -> (i32, i32, i32) {
    %c0_i32 = arith.constant 0 : i32
    %c0_i32_0 = arith.constant 0 : i32
    %c0_i32_1 = arith.constant 0 : i32
    return %arg0, %c0_i32, %c0_i32_0 : i32, i32, i32
  }
}

</mosaic_0001>

<llo_original>
// kernel: decoder_forward.1
$region0: #{decoder_forward.1}
  #allocation0 [shape = 'u32[]', space=smem, size = 0x4, offset = 0x4, fixed_abs, tag = 'smem constant byte address 0x4 - core index']
  #allocation1 [shape = 'u32[72,128]{1,0:T(1,128)}', space=vmem, size = 0x9000, scoped, tag = 'internal scratch']
  %s0 = inlined_call_operand.vmem [shape: f32[2,110,256], index: 0, kind: input, shape index: {}]
  %s1 = inlined_call_operand.vmem [shape: bf16[9,256,256], index: 1, kind: input, shape index: {}]
  %s2 = inlined_call_operand.vmem [shape: f32[1,256], index: 2, kind: input, shape index: {}]
  %s3 = inlined_call_operand.vmem [shape: bf16[256,128], index: 3, kind: input, shape index: {}]
  %s4 = inlined_call_operand.vmem [shape: f32[1,128], index: 4, kind: input, shape index: {}]
  %s5 = inlined_call_operand.vmem [shape: f32[2,80,128], index: 5, kind: output, shape index: {}]
  %s6 = sld [smem:[#allocation0]]
  $region53: #{decoder_forward.1} parent=0
    _
  %s8 = ssub.s32 1, %s6
  %s9 = scalar_select 0, %s8, %s6
  loop: start=0, step=1, limit=4
  $region2: #{decoder_forward.1} parent=0 // loop_pre_header
    _
  $region3: #{decoder_forward.1} parent=0 // loop_header
    %s11 = sphi 0, %s15
    %p12 = scmp.ge.s32.totalorder %s11, 4
    %s21 = sphi 0, %s23
    %s24 = sphi 0, %s21
    %s25 = sphi 0, %s24
    %s41 = sphi 0, %s25
    %s45 = sphi 0, %s45
    %s47 = sphi 0, %s45
    %s48 = sphi 0, %s47
    %s62 = sphi 0, %s48
    %s66 = sphi 0, %s66
    %s68 = sphi 0, %s66
    %s69 = sphi 0, %s68
    %s83 = sphi 0, %s69
    %s87 = sphi 0, %s87
    %s89 = sphi 0, %s87
    %s90 = sphi 0, %s89
    %s104 = sphi 0, %s90
    %s108 = sphi 0, %s108
    %s110 = sphi 0, %s108
    %s111 = sphi 0, %s110
    %s125 = sphi 0, %s111
    %s131 = sphi 0, %s133
    %s134 = sphi 0, %s131
    %s135 = sphi 0, %s134
    %s151 = sphi 0, %s135
  $region4: #{decoder_forward.1} parent=0 // loop_header_branch
    %14 = sbr.rel (%p12) target = $region8
  $region5: #{decoder_forward.1} parent=0 // loop_body
    %s16 = ssub.s32 %s11, 1
    %s17 = ssub.s32 %s11, 2
    %s18 = sadd.s32 %s11, 1
    %s19 = ssub.s32 %s11, %s18
    %p20 = scmp.eq.s32.totalorder %s19, 0
    %s22 = sadd.s32 %s21, 1
    %s23 = scalar_select %p20, %s21, %s22
    %p26 = pneg %p20
    %p27 = scmp.eq.s32.totalorder %s11, 1
    %p28 = por %p26, %p27
    %p29 = scmp.ne.s32.totalorder %s21, %s24
    %p30 = scmp.eq.s32.totalorder %s11, 0
    %p31 = por %p29, %p30
    %p32 = scmp.ne.s32.totalorder %s21, %s24
    %p33 = scmp.eq.s32.totalorder %s16, 1
    %p34 = por %p32, %p33
    %p35 = scmp.ne.s32.totalorder %s24, %s25
    %p36 = scmp.eq.s32.totalorder %s16, 0
    %p37 = por %p35, %p36
    %p38 = scmp.ne.s32.totalorder %s24, %s25
    %p39 = scmp.eq.s32.totalorder %s17, 1
    %p40 = por %p38, %p39
    %p42 = scmp.ne.s32.totalorder %s25, %s41
    %p43 = scmp.eq.s32.totalorder %s17, 0
    %p44 = por %p42, %p43
    %s46 = sadd.s32 %s45, 1
    %p49 = scmp.eq.s32.totalorder %s11, 1
    %p50 = scmp.ne.s32.totalorder %s45, %s47
    %p51 = scmp.eq.s32.totalorder %s11, 0
    %p52 = por %p50, %p51
    %p53 = scmp.ne.s32.totalorder %s45, %s47
    %p54 = scmp.eq.s32.totalorder %s16, 1
    %p55 = por %p53, %p54
    %p56 = scmp.ne.s32.totalorder %s47, %s48
    %p57 = scmp.eq.s32.totalorder %s16, 0
    %p58 = por %p56, %p57
    %p59 = scmp.ne.s32.totalorder %s47, %s48
    %p60 = scmp.eq.s32.totalorder %s17, 1
    %p61 = por %p59, %p60
    %p63 = scmp.ne.s32.totalorder %s48, %s62
    %p64 = scmp.eq.s32.totalorder %s17, 0
    %p65 = por %p63, %p64
    %s67 = sadd.s32 %s66, 1
    %p70 = scmp.eq.s32.totalorder %s11, 1
    %p71 = scmp.ne.s32.totalorder %s66, %s68
    %p72 = scmp.eq.s32.totalorder %s11, 0
    %p73 = por %p71, %p72
    %p74 = scmp.ne.s32.totalorder %s66, %s68
    %p75 = scmp.eq.s32.totalorder %s16, 1
    %p76 = por %p74, %p75
    %p77 = scmp.ne.s32.totalorder %s68, %s69
    %p78 = scmp.eq.s32.totalorder %s16, 0
    %p79 = por %p77, %p78
    %p80 = scmp.ne.s32.totalorder %s68, %s69
    %p81 = scmp.eq.s32.totalorder %s17, 1
    %p82 = por %p80, %p81
    %p84 = scmp.ne.s32.totalorder %s69, %s83
    %p85 = scmp.eq.s32.totalorder %s17, 0
    %p86 = por %p84, %p85
    %s88 = sadd.s32 %s87, 1
    %p91 = scmp.eq.s32.totalorder %s11, 1
    %p92 = scmp.ne.s32.totalorder %s87, %s89
    %p93 = scmp.eq.s32.totalorder %s11, 0
    %p94 = por %p92, %p93
    %p95 = scmp.ne.s32.totalorder %s87, %s89
    %p96 = scmp.eq.s32.totalorder %s16, 1
    %p97 = por %p95, %p96
    %p98 = scmp.ne.s32.totalorder %s89, %s90
    %p99 = scmp.eq.s32.totalorder %s16, 0
    %p100 = por %p98, %p99
    %p101 = scmp.ne.s32.totalorder %s89, %s90
    %p102 = scmp.eq.s32.totalorder %s17, 1
    %p103 = por %p101, %p102
    %p105 = scmp.ne.s32.totalorder %s90, %s104
    %p106 = scmp.eq.s32.totalorder %s17, 0
    %p107 = por %p105, %p106
    %s109 = sadd.s32 %s108, 1
    %p112 = scmp.eq.s32.totalorder %s11, 1
    %p113 = scmp.ne.s32.totalorder %s108, %s110
    %p114 = scmp.eq.s32.totalorder %s11, 0
    %p115 = por %p113, %p114
    %p116 = scmp.ne.s32.totalorder %s108, %s110
    %p117 = scmp.eq.s32.totalorder %s16, 1
    %p118 = por %p116, %p117
    %p119 = scmp.ne.s32.totalorder %s110, %s111
    %p120 = scmp.eq.s32.totalorder %s16, 0
    %p121 = por %p119, %p120
    %p122 = scmp.ne.s32.totalorder %s110, %s111
    %p123 = scmp.eq.s32.totalorder %s17, 1
    %p124 = por %p122, %p123
    %p126 = scmp.ne.s32.totalorder %s111, %s125
    %p127 = scmp.eq.s32.totalorder %s17, 0
    %p128 = por %p126, %p127
    %s129 = ssub.s32 %s11, %s18
    %p130 = scmp.eq.s32.totalorder %s129, 0
    %s132 = sadd.s32 %s131, 1
    %s133 = scalar_select %p130, %s131, %s132
    %p136 = pneg %p130
    %p137 = scmp.eq.s32.totalorder %s11, 1
    %p138 = por %p136, %p137
    %p139 = scmp.ne.s32.totalorder %s131, %s134
    %p140 = scmp.eq.s32.totalorder %s11, 0
    %p141 = por %p139, %p140
    %p142 = scmp.ne.s32.totalorder %s131, %s134
    %p143 = scmp.eq.s32.totalorder %s16, 1
    %p144 = por %p142, %p143
    %p145 = scmp.ne.s32.totalorder %s134, %s135
    %p146 = scmp.eq.s32.totalorder %s16, 0
    %p147 = por %p145, %p146
    %p148 = scmp.ne.s32.totalorder %s134, %s135
    %p149 = scmp.eq.s32.totalorder %s17, 1
    %p150 = por %p148, %p149
    %p152 = scmp.ne.s32.totalorder %s135, %s151
    %p153 = scmp.eq.s32.totalorder %s17, 0
    %p154 = por %p152, %p153
    %p155 = scmp.le.s32.totalorder 1, %s11
    %p156 = scmp.lt.s32.totalorder %s11, 3
    %p157 = pnand %p155, %p156
    %p158 = pneg %p157
    // Predicated region
    $region9: #{decoder_forward.1} parent=5 // pred_check
      _
    $region10: #{decoder_forward.1} parent=5 // pred_check_branch
      %160 = sbr.rel (%p157) target = $region12
    $region11: #{decoder_forward.1} parent=5 // pred_region
      %s161 = ssub.s32 %s11, 1
      // Predicated region
      $region13: #{decoder_forward.1} parent=11 // pred_check
        %p162 = pneg %p58
      $region14: #{decoder_forward.1} parent=11 // pred_check_branch
        %164 = sbr.rel (%p162) target = $region16
      $region15: #{decoder_forward.1} parent=11 // pred_region
        _
      $region16: #{decoder_forward.1} parent=11 // pred_fallthru
        _
      // Predicated region
      $region17: #{decoder_forward.1} parent=11 // pred_check
        %p165 = pneg %p79
      $region18: #{decoder_forward.1} parent=11 // pred_check_branch
        %167 = sbr.rel (%p165) target = $region20
      $region19: #{decoder_forward.1} parent=11 // pred_region
        _
      $region20: #{decoder_forward.1} parent=11 // pred_fallthru
        _
      // Predicated region
      $region21: #{decoder_forward.1} parent=11 // pred_check
        %p168 = pneg %p100
      $region22: #{decoder_forward.1} parent=11 // pred_check_branch
        %170 = sbr.rel (%p168) target = $region24
      $region23: #{decoder_forward.1} parent=11 // pred_region
        _
      $region24: #{decoder_forward.1} parent=11 // pred_fallthru
        _
      // Predicated region
      $region25: #{decoder_forward.1} parent=11 // pred_check
        %p171 = pneg %p121
      $region26: #{decoder_forward.1} parent=11 // pred_check_branch
        %173 = sbr.rel (%p171) target = $region28
      $region27: #{decoder_forward.1} parent=11 // pred_region
        _
      $region28: #{decoder_forward.1} parent=11 // pred_fallthru
        _
    $region12: #{decoder_forward.1} parent=5 // pred_fallthru
      _
    %p174 = scmp.lt.s32.totalorder %s11, 2
    // Predicated region
    $region29: #{decoder_forward.1} parent=5 // pred_check
      %p175 = pneg %p174
    $region30: #{decoder_forward.1} parent=5 // pred_check_branch
      %177 = sbr.rel (%p175) target = $region32
    $region31: #{decoder_forward.1} parent=5 // pred_region
      // Predicated region
      $region33: #{decoder_forward.1} parent=31 // pred_check
        %p178 = pneg %p31
      $region34: #{decoder_forward.1} parent=31 // pred_check_branch
        %180 = sbr.rel (%p178) target = $region36
      $region35: #{decoder_forward.1} parent=31 // pred_region
        %p181 = scmp.lt.s32.totalorder %s11, 1
        %s182 = scalar_select %p181, %s11, 1
        %s183 = smul.addr %s182, 28
        %s184 = smul.addr %s183, 8
        %s185 = scalar_lea.vmem %s0, %s184
      $region36: #{decoder_forward.1} parent=31 // pred_fallthru
        _
    $region32: #{decoder_forward.1} parent=5 // pred_fallthru
      _
    %p186 = scmp.le.s32.totalorder 1, %s11
    %p187 = scmp.lt.s32.totalorder %s11, 3
    %p188 = pnand %p186, %p187
    %p189 = pneg %p188
    // Predicated region
    $region37: #{decoder_forward.1} parent=5 // pred_check
      _
    $region38: #{decoder_forward.1} parent=5 // pred_check_branch
      %191 = sbr.rel (%p188) target = $region40
    $region39: #{decoder_forward.1} parent=5 // pred_region
      %s192 = ssub.s32 %s11, 1
      %p193 = scmp.lt.s32.totalorder %s16, 1
      %s194 = scalar_select %p193, %s16, 1
      %s195 = smul.addr %s194, 28
      %s196 = smul.addr %s195, 8
      %s197 = scalar_lea.vmem %s0, %s196
      %p198 = pneg %p37
      %p199 = pneg %p34
      %p200 = pneg %p58
      %p201 = pneg %p55
      %p202 = pneg %p79
      %p203 = pneg %p76
      %p204 = pneg %p100
      %p205 = pneg %p97
      %p206 = pneg %p121
      %p207 = pneg %p118
      %p208 = pneg %p147
      %p209 = pneg %p144
      %p210 = scmp.lt.s32.totalorder %s16, 1
      %s211 = scalar_select %p210, %s16, 1
      %s212 = smul.addr %s211, 10
      %s213 = smul.addr %s212, 8
      %s214 = scalar_lea.vmem %s5, %s213
      %p215 = scmp.lt.s32.totalorder %s16, 1
      %s216 = scalar_select %p215, %s16, 1
      %s217 = smul.addr %s216, 28
      %s218 = smul.addr %s217, 8
      %s219 = scalar_lea.vmem %s0, %s218
      %p220 = scmp.lt.s32.totalorder %s16, 1
      %s221 = scalar_select %p220, %s16, 1
      %s222 = smul.addr %s221, 10
      %s223 = smul.addr %s222, 8
      %s224 = scalar_lea.vmem %s5, %s223
      %v225 = vld [vmem:[%s219] sm:$0xff]
      %v226 = vld [vmem:[%s219 + $0x8] sm:$0xff]
      %v227 = vld [vmem:[%s219 + $0x10] sm:$0xff]
      %v228 = vld [vmem:[%s219 + $0x18] sm:$0xff]
      %v229 = vld [vmem:[%s219 + $0x20] sm:$0xff]
      %v230 = vld [vmem:[%s219 + $0x28] sm:$0xff]
      %v231 = vld [vmem:[%s219 + $0x30] sm:$0xff]
      %v232 = vld [vmem:[%s219 + $0x38] sm:$0xff]
      %v233 = vld [vmem:[%s219 + $0x40] sm:$0xff]
      %v234 = vld [vmem:[%s219 + $0x48] sm:$0xff]
      %v235 = vld [vmem:[%s219 + $0x50] sm:$0xff]
      %v236 = vld [vmem:[%s219 + $0x58] sm:$0xff]
      %v237 = vld [vmem:[%s219 + $0x60] sm:$0xff]
      %v238 = vld [vmem:[%s219 + $0x68] sm:$0xff]
      %v239 = vld [vmem:[%s219 + $0x70] sm:$0xff]
      %v240 = vld [vmem:[%s219 + $0x78] sm:$0xff]
      %v241 = vld [vmem:[%s219 + $0x80] sm:$0xff]
      %v242 = vld [vmem:[%s219 + $0x88] sm:$0xff]
      %v243 = vld [vmem:[%s219 + $0x90] sm:$0xff]
      %v244 = vld [vmem:[%s219 + $0x98] sm:$0xff]
      %v245 = vpack.c.bf16 %v227, %v225
      %v246 = vpack.c.bf16 %v228, %v226
      %v247 = vpack.c.bf16 %v231, %v229
      %v248 = vpack.c.bf16 %v232, %v230
      %v249 = vpack.c.bf16 %v235, %v233
      %v250 = vpack.c.bf16 %v236, %v234
      %v251 = vpack.c.bf16 %v239, %v237
      %v252 = vpack.c.bf16 %v240, %v238
      %v253 = vpack.c.bf16 %v243, %v241
      %v254 = vpack.c.bf16 %v244, %v242
      %v255 = vld [vmem:[%s1] sm:$0xff]
      %v256 = vld [vmem:[%s1 + $0x8] sm:$0xff]
      %v257 = vld [vmem:[%s1 + $0x10] sm:$0xff]
      %v258 = vld [vmem:[%s1 + $0x18] sm:$0xff]
      %v259 = vld [vmem:[%s1 + $0x20] sm:$0xff]
      %v260 = vld [vmem:[%s1 + $0x28] sm:$0xff]
      %v261 = vld [vmem:[%s1 + $0x30] sm:$0xff]
      %v262 = vld [vmem:[%s1 + $0x38] sm:$0xff]
      %v263 = vld [vmem:[%s1 + $0x40] sm:$0xff]
      %v264 = vld [vmem:[%s1 + $0x48] sm:$0xff]
      %v265 = vld [vmem:[%s1 + $0x50] sm:$0xff]
      %v266 = vld [vmem:[%s1 + $0x58] sm:$0xff]
      %v267 = vld [vmem:[%s1 + $0x60] sm:$0xff]
      %v268 = vld [vmem:[%s1 + $0x68] sm:$0xff]
      %v269 = vld [vmem:[%s1 + $0x70] sm:$0xff]
      %v270 = vld [vmem:[%s1 + $0x78] sm:$0xff]
      %v271 = vld [vmem:[%s1 + $0x80] sm:$0xff]
      %v272 = vld [vmem:[%s1 + $0x88] sm:$0xff]
      %v273 = vld [vmem:[%s1 + $0x90] sm:$0xff]
      %v274 = vld [vmem:[%s1 + $0x98] sm:$0xff]
      %v275 = vld [vmem:[%s1 + $0xa0] sm:$0xff]
      %v276 = vld [vmem:[%s1 + $0xa8] sm:$0xff]
      %v277 = vld [vmem:[%s1 + $0xb0] sm:$0xff]
      %v278 = vld [vmem:[%s1 + $0xb8] sm:$0xff]
      %v279 = vld [vmem:[%s1 + $0xc0] sm:$0xff]
      %v280 = vld [vmem:[%s1 + $0xc8] sm:$0xff]
      %v281 = vld [vmem:[%s1 + $0xd0] sm:$0xff]
      %v282 = vld [vmem:[%s1 + $0xd8] sm:$0xff]
      %v283 = vld [vmem:[%s1 + $0xe0] sm:$0xff]
      %v284 = vld [vmem:[%s1 + $0xe8] sm:$0xff]
      %v285 = vld [vmem:[%s1 + $0xf0] sm:$0xff]
      %v286 = vld [vmem:[%s1 + $0xf8] sm:$0xff]
      %v287 = vld [vmem:[%s219] sm:$0xfe]
      %v288 = vld [vmem:[%s219 + $0x8] sm:$0xfe]
      %v289 = vld [vmem:[%s219 + $0xa0] sm:$0x1]
      %v290 = vld [vmem:[%s219 + $0xa8] sm:$0x1]
      %v291 = vpack.c.bf16 %v227, %v287
      %v292 = vpack.c.bf16 %v228, %v288
      %v293 = vpack.c.bf16 %v289, %v289
      %v294 = vpack.c.bf16 %v290, %v290
      %s295 = scalar_lea.vmem %s1, 256
      %v296 = vld [vmem:[%s295] sm:$0xff]
      %v297 = vld [vmem:[%s295 + $0x8] sm:$0xff]
      %v298 = vld [vmem:[%s295 + $0x10] sm:$0xff]
      %v299 = vld [vmem:[%s295 + $0x18] sm:$0xff]
      %v300 = vld [vmem:[%s295 + $0x20] sm:$0xff]
      %v301 = vld [vmem:[%s295 + $0x28] sm:$0xff]
      %v302 = vld [vmem:[%s295 + $0x30] sm:$0xff]
      %v303 = vld [vmem:[%s295 + $0x38] sm:$0xff]
      %v304 = vld [vmem:[%s295 + $0x40] sm:$0xff]
      %v305 = vld [vmem:[%s295 + $0x48] sm:$0xff]
      %v306 = vld [vmem:[%s295 + $0x50] sm:$0xff]
      %v307 = vld [vmem:[%s295 + $0x58] sm:$0xff]
      %v308 = vld [vmem:[%s295 + $0x60] sm:$0xff]
      %v309 = vld [vmem:[%s295 + $0x68] sm:$0xff]
      %v310 = vld [vmem:[%s295 + $0x70] sm:$0xff]
      %v311 = vld [vmem:[%s295 + $0x78] sm:$0xff]
      %v312 = vld [vmem:[%s295 + $0x80] sm:$0xff]
      %v313 = vld [vmem:[%s295 + $0x88] sm:$0xff]
      %v314 = vld [vmem:[%s295 + $0x90] sm:$0xff]
      %v315 = vld [vmem:[%s295 + $0x98] sm:$0xff]
      %v316 = vld [vmem:[%s295 + $0xa0] sm:$0xff]
      %v317 = vld [vmem:[%s295 + $0xa8] sm:$0xff]
      %v318 = vld [vmem:[%s295 + $0xb0] sm:$0xff]
      %v319 = vld [vmem:[%s295 + $0xb8] sm:$0xff]
      %v320 = vld [vmem:[%s295 + $0xc0] sm:$0xff]
      %v321 = vld [vmem:[%s295 + $0xc8] sm:$0xff]
      %v322 = vld [vmem:[%s295 + $0xd0] sm:$0xff]
      %v323 = vld [vmem:[%s295 + $0xd8] sm:$0xff]
      %v324 = vld [vmem:[%s295 + $0xe0] sm:$0xff]
      %v325 = vld [vmem:[%s295 + $0xe8] sm:$0xff]
      %v326 = vld [vmem:[%s295 + $0xf0] sm:$0xff]
      %v327 = vld [vmem:[%s295 + $0xf8] sm:$0xff]
      %vm328 = vsmask.f32 7424
      %v330 = vshrl.u32 %v291, 16
      %v332 = vshll.u32 %v291, 16
      %v334 = vrot.slane %v332, 1
      %v335 = vor.u32 %v330, %v334
      %v337 = vshll.u32 %v247, 16
      %v339 = vrot.slane %v337, 1
      %v340 = vsel %vm328, %v335, %v339
      %v342 = vshrl.u32 %v292, 16
      %v344 = vshll.u32 %v292, 16
      %v346 = vrot.slane %v344, 1
      %v347 = vor.u32 %v342, %v346
      %v349 = vshll.u32 %v248, 16
      %v351 = vrot.slane %v349, 1
      %v352 = vsel %vm328, %v347, %v351
      %v353 = vshrl.u32 %v247, 16
      %v355 = vor.u32 %v353, %v339
      %v357 = vshll.u32 %v249, 16
      %v359 = vrot.slane %v357, 1
      %v360 = vsel %vm328, %v355, %v359
      %v361 = vshrl.u32 %v248, 16
      %v363 = vor.u32 %v361, %v351
      %v365 = vshll.u32 %v250, 16
      %v367 = vrot.slane %v365, 1
      %v368 = vsel %vm328, %v363, %v367
      %v369 = vshrl.u32 %v249, 16
      %v371 = vor.u32 %v369, %v359
      %v373 = vshll.u32 %v251, 16
      %v375 = vrot.slane %v373, 1
      %v376 = vsel %vm328, %v371, %v375
      %v377 = vshrl.u32 %v250, 16
      %v379 = vor.u32 %v377, %v367
      %v381 = vshll.u32 %v252, 16
      %v383 = vrot.slane %v381, 1
      %v384 = vsel %vm328, %v379, %v383
      %v385 = vshrl.u32 %v251, 16
      %v387 = vor.u32 %v385, %v375
      %v389 = vshll.u32 %v253, 16
      %v391 = vrot.slane %v389, 1
      %v392 = vsel %vm328, %v387, %v391
      %v393 = vshrl.u32 %v252, 16
      %v395 = vor.u32 %v393, %v383
      %v397 = vshll.u32 %v254, 16
      %v399 = vrot.slane %v397, 1
      %v400 = vsel %vm328, %v395, %v399
      %v401 = vshrl.u32 %v253, 16
      %v403 = vor.u32 %v401, %v391
      %v405 = vshll.u32 %v293, 16
      %v407 = vrot.slane %v405, 1
      %v408 = vsel %vm328, %v403, %v407
      %v409 = vshrl.u32 %v254, 16
      %v411 = vor.u32 %v409, %v399
      %v413 = vshll.u32 %v294, 16
      %v415 = vrot.slane %v413, 1
      %v416 = vsel %vm328, %v411, %v415
      %v459 = vunpack.c.l.b16 %v296
      %v460 = vunpack.c.h.b16 %v296
      %v461 = vunpack.c.l.b16 %v297
      %v462 = vunpack.c.h.b16 %v297
      %v463 = vunpack.c.l.b16 %v298
      %v464 = vunpack.c.h.b16 %v298
      %v465 = vunpack.c.l.b16 %v299
      %v466 = vunpack.c.h.b16 %v299
      %v467 = vunpack.c.l.b16 %v300
      %v468 = vunpack.c.h.b16 %v300
      %v469 = vunpack.c.l.b16 %v301
      %v470 = vunpack.c.h.b16 %v301
      %v471 = vunpack.c.l.b16 %v302
      %v472 = vunpack.c.h.b16 %v302
      %v473 = vunpack.c.l.b16 %v303
      %v474 = vunpack.c.h.b16 %v303
      %v475 = vunpack.c.l.b16 %v304
      %v476 = vunpack.c.h.b16 %v304
      %v477 = vunpack.c.l.b16 %v305
      %v478 = vunpack.c.h.b16 %v305
      %v479 = vunpack.c.l.b16 %v306
      %v480 = vunpack.c.h.b16 %v306
      %v481 = vunpack.c.l.b16 %v307
      %v482 = vunpack.c.h.b16 %v307
      %v483 = vunpack.c.l.b16 %v308
      %v484 = vunpack.c.h.b16 %v308
      %v485 = vunpack.c.l.b16 %v309
      %v486 = vunpack.c.h.b16 %v309
      %v487 = vunpack.c.l.b16 %v310
      %v488 = vunpack.c.h.b16 %v310
      %v489 = vunpack.c.l.b16 %v311
      %v490 = vunpack.c.h.b16 %v311
      %v491 = vunpack.c.l.b16 %v312
      %v492 = vunpack.c.h.b16 %v312
      %v493 = vunpack.c.l.b16 %v313
      %v494 = vunpack.c.h.b16 %v313
      %v495 = vunpack.c.l.b16 %v314
      %v496 = vunpack.c.h.b16 %v314
      %v497 = vunpack.c.l.b16 %v315
      %v498 = vunpack.c.h.b16 %v315
      %v499 = vunpack.c.l.b16 %v316
      %v500 = vunpack.c.h.b16 %v316
      %v501 = vunpack.c.l.b16 %v317
      %v502 = vunpack.c.h.b16 %v317
      %v503 = vunpack.c.l.b16 %v318
      %v504 = vunpack.c.h.b16 %v318
      %v505 = vunpack.c.l.b16 %v319
      %v506 = vunpack.c.h.b16 %v319
      %v507 = vunpack.c.l.b16 %v320
      %v508 = vunpack.c.h.b16 %v320
      %v509 = vunpack.c.l.b16 %v321
      %v510 = vunpack.c.h.b16 %v321
      %v511 = vunpack.c.l.b16 %v322
      %v512 = vunpack.c.h.b16 %v322
      %v513 = vunpack.c.l.b16 %v323
      %v514 = vunpack.c.h.b16 %v323
      %v515 = vunpack.c.l.b16 %v324
      %v516 = vunpack.c.h.b16 %v324
      %v517 = vunpack.c.l.b16 %v325
      %v518 = vunpack.c.h.b16 %v325
      %v519 = vunpack.c.l.b16 %v326
      %v520 = vunpack.c.h.b16 %v326
      %v521 = vunpack.c.l.b16 %v327
      %v522 = vunpack.c.h.b16 %v327
      %v523 = vpack.c.b16 %v461, %v459
      %v524 = vpack.c.b16 %v462, %v460
      %v525 = vpack.c.b16 %v465, %v463
      %v526 = vpack.c.b16 %v466, %v464
      %v527 = vpack.c.b16 %v469, %v467
      %v528 = vpack.c.b16 %v470, %v468
      %v529 = vpack.c.b16 %v473, %v471
      %v530 = vpack.c.b16 %v474, %v472
      %v531 = vpack.c.b16 %v477, %v475
      %v532 = vpack.c.b16 %v478, %v476
      %v533 = vpack.c.b16 %v481, %v479
      %v534 = vpack.c.b16 %v482, %v480
      %v535 = vpack.c.b16 %v485, %v483
      %v536 = vpack.c.b16 %v486, %v484
      %v537 = vpack.c.b16 %v489, %v487
      %v538 = vpack.c.b16 %v490, %v488
      %v539 = vpack.c.b16 %v493, %v491
      %v540 = vpack.c.b16 %v494, %v492
      %v541 = vpack.c.b16 %v497, %v495
      %v542 = vpack.c.b16 %v498, %v496
      %v543 = vpack.c.b16 %v501, %v499
      %v544 = vpack.c.b16 %v502, %v500
      %v545 = vpack.c.b16 %v505, %v503
      %v546 = vpack.c.b16 %v506, %v504
      %v547 = vpack.c.b16 %v509, %v507
      %v548 = vpack.c.b16 %v510, %v508
      %v549 = vpack.c.b16 %v513, %v511
      %v550 = vpack.c.b16 %v514, %v512
      %v551 = vpack.c.b16 %v517, %v515
      %v552 = vpack.c.b16 %v518, %v516
      %v553 = vpack.c.b16 %v521, %v519
      %v554 = vpack.c.b16 %v522, %v520
      %587 = vmatpush.bf16.msra.mxu0 %v537
      %588 = vmatpush.bf16.msra.mxu0 %v535
      %589 = vmatpush.bf16.msra.mxu0 %v533
      %590 = vmatpush.bf16.msra.mxu0 %v531
      %591 = vmatpush.bf16.msra.mxu0 %v529
      %592 = vmatpush.bf16.msra.mxu0 %v527
      %593 = vmatpush.bf16.msra.mxu0 %v525
      %594 = vmatpush.bf16.msra.mxu0 %v523
      %595 = vmatmul.bf16.gmra.mxu0 %v340
      %v596 = vpop.f32.mrf.mxu0
      %v597 = vadd.f32 0.0, %v596
      %v598 = vpop.f32.mrf.mxu0
      %v599 = vadd.f32 0.0, %v598
      %600 = vmatmul.bf16.gmra.mxu0 %v360
      %v601 = vpop.f32.mrf.mxu0
      %v602 = vadd.f32 0.0, %v601
      %v603 = vpop.f32.mrf.mxu0
      %v604 = vadd.f32 0.0, %v603
      %605 = vmatmul.bf16.gmra.mxu0 %v376
      %v606 = vpop.f32.mrf.mxu0
      %v607 = vadd.f32 0.0, %v606
      %v608 = vpop.f32.mrf.mxu0
      %v609 = vadd.f32 0.0, %v608
      %610 = vmatmul.bf16.gmra.mxu0 %v392
      %v611 = vpop.f32.mrf.mxu0
      %v612 = vadd.f32 0.0, %v611
      %v613 = vpop.f32.mrf.mxu0
      %v614 = vadd.f32 0.0, %v613
      %615 = vmatmul.bf16.gmra.mxu0 %v408
      %v616 = vpop.f32.mrf.mxu0
      %v617 = vadd.f32 0.0, %v616
      %v618 = vpop.f32.mrf.mxu0
      %v619 = vadd.f32 0.0, %v618
      %620 = vdwg.mxu0
      %621 = vmatpush.bf16.msra.mxu0 %v553
      %622 = vmatpush.bf16.msra.mxu0 %v551
      %623 = vmatpush.bf16.msra.mxu0 %v549
      %624 = vmatpush.bf16.msra.mxu0 %v547
      %625 = vmatpush.bf16.msra.mxu0 %v545
      %626 = vmatpush.bf16.msra.mxu0 %v543
      %627 = vmatpush.bf16.msra.mxu0 %v541
      %628 = vmatpush.bf16.msra.mxu0 %v539
      %629 = vmatmul.bf16.gmra.mxu0 %v352
      %v630 = vpop.f32.mrf.mxu0
      %v631 = vadd.f32 %v597, %v630
      %v632 = vpop.f32.mrf.mxu0
      %v633 = vadd.f32 %v599, %v632
      %634 = vmatmul.bf16.gmra.mxu0 %v368
      %v635 = vpop.f32.mrf.mxu0
      %v636 = vadd.f32 %v602, %v635
      %v637 = vpop.f32.mrf.mxu0
      %v638 = vadd.f32 %v604, %v637
      %639 = vmatmul.bf16.gmra.mxu0 %v384
      %v640 = vpop.f32.mrf.mxu0
      %v641 = vadd.f32 %v607, %v640
      %v642 = vpop.f32.mrf.mxu0
      %v643 = vadd.f32 %v609, %v642
      %644 = vmatmul.bf16.gmra.mxu0 %v400
      %v645 = vpop.f32.mrf.mxu0
      %v646 = vadd.f32 %v612, %v645
      %v647 = vpop.f32.mrf.mxu0
      %v648 = vadd.f32 %v614, %v647
      %649 = vmatmul.bf16.gmra.mxu0 %v416
      %v650 = vpop.f32.mrf.mxu0
      %v651 = vadd.f32 %v617, %v650
      %v652 = vpop.f32.mrf.mxu0
      %v653 = vadd.f32 %v619, %v652
      %654 = vdwg.mxu0
      %655 = vmatpush.bf16.msra.mxu0 %v538
      %656 = vmatpush.bf16.msra.mxu0 %v536
      %657 = vmatpush.bf16.msra.mxu0 %v534
      %658 = vmatpush.bf16.msra.mxu0 %v532
      %659 = vmatpush.bf16.msra.mxu0 %v530
      %660 = vmatpush.bf16.msra.mxu0 %v528
      %661 = vmatpush.bf16.msra.mxu0 %v526
      %662 = vmatpush.bf16.msra.mxu0 %v524
      %663 = vmatmul.bf16.gmra.mxu0 %v340
      %v664 = vpop.f32.mrf.mxu0
      %v665 = vadd.f32 0.0, %v664
      %v666 = vpop.f32.mrf.mxu0
      %v667 = vadd.f32 0.0, %v666
      %668 = vmatmul.bf16.gmra.mxu0 %v360
      %v669 = vpop.f32.mrf.mxu0
      %v670 = vadd.f32 0.0, %v669
      %v671 = vpop.f32.mrf.mxu0
      %v672 = vadd.f32 0.0, %v671
      %673 = vmatmul.bf16.gmra.mxu0 %v376
      %v674 = vpop.f32.mrf.mxu0
      %v675 = vadd.f32 0.0, %v674
      %v676 = vpop.f32.mrf.mxu0
      %v677 = vadd.f32 0.0, %v676
      %678 = vmatmul.bf16.gmra.mxu0 %v392
      %v679 = vpop.f32.mrf.mxu0
      %v680 = vadd.f32 0.0, %v679
      %v681 = vpop.f32.mrf.mxu0
      %v682 = vadd.f32 0.0, %v681
      %683 = vmatmul.bf16.gmra.mxu0 %v408
      %v684 = vpop.f32.mrf.mxu0
      %v685 = vadd.f32 0.0, %v684
      %v686 = vpop.f32.mrf.mxu0
      %v687 = vadd.f32 0.0, %v686
      %688 = vdwg.mxu0
      %689 = vmatpush.bf16.msra.mxu0 %v554
      %690 = vmatpush.bf16.msra.mxu0 %v552
      %691 = vmatpush.bf16.msra.mxu0 %v550
      %692 = vmatpush.bf16.msra.mxu0 %v548
      %693 = vmatpush.bf16.msra.mxu0 %v546
      %694 = vmatpush.bf16.msra.mxu0 %v544
      %695 = vmatpush.bf16.msra.mxu0 %v542
      %696 = vmatpush.bf16.msra.mxu0 %v540
      %697 = vmatmul.bf16.gmra.mxu0 %v352
      %v698 = vpop.f32.mrf.mxu0
      %v699 = vadd.f32 %v665, %v698
      %v700 = vpop.f32.mrf.mxu0
      %v701 = vadd.f32 %v667, %v700
      %702 = vmatmul.bf16.gmra.mxu0 %v368
      %v703 = vpop.f32.mrf.mxu0
      %v704 = vadd.f32 %v670, %v703
      %v705 = vpop.f32.mrf.mxu0
      %v706 = vadd.f32 %v672, %v705
      %707 = vmatmul.bf16.gmra.mxu0 %v384
      %v708 = vpop.f32.mrf.mxu0
      %v709 = vadd.f32 %v675, %v708
      %v710 = vpop.f32.mrf.mxu0
      %v711 = vadd.f32 %v677, %v710
      %712 = vmatmul.bf16.gmra.mxu0 %v400
      %v713 = vpop.f32.mrf.mxu0
      %v714 = vadd.f32 %v680, %v713
      %v715 = vpop.f32.mrf.mxu0
      %v716 = vadd.f32 %v682, %v715
      %717 = vmatmul.bf16.gmra.mxu0 %v416
      %v718 = vpop.f32.mrf.mxu0
      %v719 = vadd.f32 %v685, %v718
      %v720 = vpop.f32.mrf.mxu0
      %v721 = vadd.f32 %v687, %v720
      %722 = vdwg.mxu0
      %v755 = vunpack.c.l.b16 %v255
      %v756 = vunpack.c.h.b16 %v255
      %v757 = vunpack.c.l.b16 %v256
      %v758 = vunpack.c.h.b16 %v256
      %v759 = vunpack.c.l.b16 %v257
      %v760 = vunpack.c.h.b16 %v257
      %v761 = vunpack.c.l.b16 %v258
      %v762 = vunpack.c.h.b16 %v258
      %v763 = vunpack.c.l.b16 %v259
      %v764 = vunpack.c.h.b16 %v259
      %v765 = vunpack.c.l.b16 %v260
      %v766 = vunpack.c.h.b16 %v260
      %v767 = vunpack.c.l.b16 %v261
      %v768 = vunpack.c.h.b16 %v261
      %v769 = vunpack.c.l.b16 %v262
      %v770 = vunpack.c.h.b16 %v262
      %v771 = vunpack.c.l.b16 %v263
      %v772 = vunpack.c.h.b16 %v263
      %v773 = vunpack.c.l.b16 %v264
      %v774 = vunpack.c.h.b16 %v264
      %v775 = vunpack.c.l.b16 %v265
      %v776 = vunpack.c.h.b16 %v265
      %v777 = vunpack.c.l.b16 %v266
      %v778 = vunpack.c.h.b16 %v266
      %v779 = vunpack.c.l.b16 %v267
      %v780 = vunpack.c.h.b16 %v267
      %v781 = vunpack.c.l.b16 %v268
      %v782 = vunpack.c.h.b16 %v268
      %v783 = vunpack.c.l.b16 %v269
      %v784 = vunpack.c.h.b16 %v269
      %v785 = vunpack.c.l.b16 %v270
      %v786 = vunpack.c.h.b16 %v270
      %v787 = vunpack.c.l.b16 %v271
      %v788 = vunpack.c.h.b16 %v271
      %v789 = vunpack.c.l.b16 %v272
      %v790 = vunpack.c.h.b16 %v272
      %v791 = vunpack.c.l.b16 %v273
      %v792 = vunpack.c.h.b16 %v273
      %v793 = vunpack.c.l.b16 %v274
      %v794 = vunpack.c.h.b16 %v274
      %v795 = vunpack.c.l.b16 %v275
      %v796 = vunpack.c.h.b16 %v275
      %v797 = vunpack.c.l.b16 %v276
      %v798 = vunpack.c.h.b16 %v276
      %v799 = vunpack.c.l.b16 %v277
      %v800 = vunpack.c.h.b16 %v277
      %v801 = vunpack.c.l.b16 %v278
      %v802 = vunpack.c.h.b16 %v278
      %v803 = vunpack.c.l.b16 %v279
      %v804 = vunpack.c.h.b16 %v279
      %v805 = vunpack.c.l.b16 %v280
      %v806 = vunpack.c.h.b16 %v280
      %v807 = vunpack.c.l.b16 %v281
      %v808 = vunpack.c.h.b16 %v281
      %v809 = vunpack.c.l.b16 %v282
      %v810 = vunpack.c.h.b16 %v282
      %v811 = vunpack.c.l.b16 %v283
      %v812 = vunpack.c.h.b16 %v283
      %v813 = vunpack.c.l.b16 %v284
      %v814 = vunpack.c.h.b16 %v284
      %v815 = vunpack.c.l.b16 %v285
      %v816 = vunpack.c.h.b16 %v285
      %v817 = vunpack.c.l.b16 %v286
      %v818 = vunpack.c.h.b16 %v286
      %v819 = vpack.c.b16 %v757, %v755
      %v820 = vpack.c.b16 %v758, %v756
      %v821 = vpack.c.b16 %v761, %v759
      %v822 = vpack.c.b16 %v762, %v760
      %v823 = vpack.c.b16 %v765, %v763
      %v824 = vpack.c.b16 %v766, %v764
      %v825 = vpack.c.b16 %v769, %v767
      %v826 = vpack.c.b16 %v770, %v768
      %v827 = vpack.c.b16 %v773, %v771
      %v828 = vpack.c.b16 %v774, %v772
      %v829 = vpack.c.b16 %v777, %v775
      %v830 = vpack.c.b16 %v778, %v776
      %v831 = vpack.c.b16 %v781, %v779
      %v832 = vpack.c.b16 %v782, %v780
      %v833 = vpack.c.b16 %v785, %v783
      %v834 = vpack.c.b16 %v786, %v784
      %v835 = vpack.c.b16 %v789, %v787
      %v836 = vpack.c.b16 %v790, %v788
      %v837 = vpack.c.b16 %v793, %v791
      %v838 = vpack.c.b16 %v794, %v792
      %v839 = vpack.c.b16 %v797, %v795
      %v840 = vpack.c.b16 %v798, %v796
      %v841 = vpack.c.b16 %v801, %v799
      %v842 = vpack.c.b16 %v802, %v800
      %v843 = vpack.c.b16 %v805, %v803
      %v844 = vpack.c.b16 %v806, %v804
      %v845 = vpack.c.b16 %v809, %v807
      %v846 = vpack.c.b16 %v810, %v808
      %v847 = vpack.c.b16 %v813, %v811
      %v848 = vpack.c.b16 %v814, %v812
      %v849 = vpack.c.b16 %v817, %v815
      %v850 = vpack.c.b16 %v818, %v816
      %883 = vmatpush.bf16.msra.mxu0 %v833
      %884 = vmatpush.bf16.msra.mxu0 %v831
      %885 = vmatpush.bf16.msra.mxu0 %v829
      %886 = vmatpush.bf16.msra.mxu0 %v827
      %887 = vmatpush.bf16.msra.mxu0 %v825
      %888 = vmatpush.bf16.msra.mxu0 %v823
      %889 = vmatpush.bf16.msra.mxu0 %v821
      %890 = vmatpush.bf16.msra.mxu0 %v819
      %891 = vmatmul.bf16.gmra.mxu0 %v245
      %v892 = vpop.f32.mrf.mxu0
      %v893 = vadd.f32 %v631, %v892
      %v894 = vpop.f32.mrf.mxu0
      %v895 = vadd.f32 %v633, %v894
      %896 = vmatmul.bf16.gmra.mxu0 %v247
      %v897 = vpop.f32.mrf.mxu0
      %v898 = vadd.f32 %v636, %v897
      %v899 = vpop.f32.mrf.mxu0
      %v900 = vadd.f32 %v638, %v899
      %901 = vmatmul.bf16.gmra.mxu0 %v249
      %v902 = vpop.f32.mrf.mxu0
      %v903 = vadd.f32 %v641, %v902
      %v904 = vpop.f32.mrf.mxu0
      %v905 = vadd.f32 %v643, %v904
      %906 = vmatmul.bf16.gmra.mxu0 %v251
      %v907 = vpop.f32.mrf.mxu0
      %v908 = vadd.f32 %v646, %v907
      %v909 = vpop.f32.mrf.mxu0
      %v910 = vadd.f32 %v648, %v909
      %911 = vmatmul.bf16.gmra.mxu0 %v253
      %v912 = vpop.f32.mrf.mxu0
      %v913 = vadd.f32 %v651, %v912
      %v914 = vpop.f32.mrf.mxu0
      %v915 = vadd.f32 %v653, %v914
      %916 = vdwg.mxu0
      %917 = vmatpush.bf16.msra.mxu0 %v849
      %918 = vmatpush.bf16.msra.mxu0 %v847
      %919 = vmatpush.bf16.msra.mxu0 %v845
      %920 = vmatpush.bf16.msra.mxu0 %v843
      %921 = vmatpush.bf16.msra.mxu0 %v841
      %922 = vmatpush.bf16.msra.mxu0 %v839
      %923 = vmatpush.bf16.msra.mxu0 %v837
      %924 = vmatpush.bf16.msra.mxu0 %v835
      %925 = vmatmul.bf16.gmra.mxu0 %v246
      %v926 = vpop.f32.mrf.mxu0
      %v927 = vadd.f32 %v893, %v926
      %v928 = vpop.f32.mrf.mxu0
      %v929 = vadd.f32 %v895, %v928
      %930 = vmatmul.bf16.gmra.mxu0 %v248
      %v931 = vpop.f32.mrf.mxu0
      %v932 = vadd.f32 %v898, %v931
      %v933 = vpop.f32.mrf.mxu0
      %v934 = vadd.f32 %v900, %v933
      %935 = vmatmul.bf16.gmra.mxu0 %v250
      %v936 = vpop.f32.mrf.mxu0
      %v937 = vadd.f32 %v903, %v936
      %v938 = vpop.f32.mrf.mxu0
      %v939 = vadd.f32 %v905, %v938
      %940 = vmatmul.bf16.gmra.mxu0 %v252
      %v941 = vpop.f32.mrf.mxu0
      %v942 = vadd.f32 %v908, %v941
      %v943 = vpop.f32.mrf.mxu0
      %v944 = vadd.f32 %v910, %v943
      %945 = vmatmul.bf16.gmra.mxu0 %v254
      %v946 = vpop.f32.mrf.mxu0
      %v947 = vadd.f32 %v913, %v946
      %v948 = vpop.f32.mrf.mxu0
      %v949 = vadd.f32 %v915, %v948
      %950 = vdwg.mxu0
      %951 = vmatpush.bf16.msra.mxu0 %v834
      %952 = vmatpush.bf16.msra.mxu0 %v832
      %953 = vmatpush.bf16.msra.mxu0 %v830
      %954 = vmatpush.bf16.msra.mxu0 %v828
      %955 = vmatpush.bf16.msra.mxu0 %v826
      %956 = vmatpush.bf16.msra.mxu0 %v824
      %957 = vmatpush.bf16.msra.mxu0 %v822
      %958 = vmatpush.bf16.msra.mxu0 %v820
      %959 = vmatmul.bf16.gmra.mxu0 %v245
      %v960 = vpop.f32.mrf.mxu0
      %v961 = vadd.f32 %v699, %v960
      %v962 = vpop.f32.mrf.mxu0
      %v963 = vadd.f32 %v701, %v962
      %964 = vmatmul.bf16.gmra.mxu0 %v247
      %v965 = vpop.f32.mrf.mxu0
      %v966 = vadd.f32 %v704, %v965
      %v967 = vpop.f32.mrf.mxu0
      %v968 = vadd.f32 %v706, %v967
      %969 = vmatmul.bf16.gmra.mxu0 %v249
      %v970 = vpop.f32.mrf.mxu0
      %v971 = vadd.f32 %v709, %v970
      %v972 = vpop.f32.mrf.mxu0
      %v973 = vadd.f32 %v711, %v972
      %974 = vmatmul.bf16.gmra.mxu0 %v251
      %v975 = vpop.f32.mrf.mxu0
      %v976 = vadd.f32 %v714, %v975
      %v977 = vpop.f32.mrf.mxu0
      %v978 = vadd.f32 %v716, %v977
      %979 = vmatmul.bf16.gmra.mxu0 %v253
      %v980 = vpop.f32.mrf.mxu0
      %v981 = vadd.f32 %v719, %v980
      %v982 = vpop.f32.mrf.mxu0
      %v983 = vadd.f32 %v721, %v982
      %984 = vdwg.mxu0
      %985 = vmatpush.bf16.msra.mxu0 %v850
      %986 = vmatpush.bf16.msra.mxu0 %v848
      %987 = vmatpush.bf16.msra.mxu0 %v846
      %988 = vmatpush.bf16.msra.mxu0 %v844
      %989 = vmatpush.bf16.msra.mxu0 %v842
      %990 = vmatpush.bf16.msra.mxu0 %v840
      %991 = vmatpush.bf16.msra.mxu0 %v838
      %992 = vmatpush.bf16.msra.mxu0 %v836
      %993 = vmatmul.bf16.gmra.mxu0 %v246
      %v994 = vpop.f32.mrf.mxu0
      %v995 = vadd.f32 %v961, %v994
      %v996 = vpop.f32.mrf.mxu0
      %v997 = vadd.f32 %v963, %v996
      %998 = vmatmul.bf16.gmra.mxu0 %v248
      %v999 = vpop.f32.mrf.mxu0
      %v1000 = vadd.f32 %v966, %v999
      %v1001 = vpop.f32.mrf.mxu0
      %v1002 = vadd.f32 %v968, %v1001
      %1003 = vmatmul.bf16.gmra.mxu0 %v250
      %v1004 = vpop.f32.mrf.mxu0
      %v1005 = vadd.f32 %v971, %v1004
      %v1006 = vpop.f32.mrf.mxu0
      %v1007 = vadd.f32 %v973, %v1006
      %1008 = vmatmul.bf16.gmra.mxu0 %v252
      %v1009 = vpop.f32.mrf.mxu0
      %v1010 = vadd.f32 %v976, %v1009
      %v1011 = vpop.f32.mrf.mxu0
      %v1012 = vadd.f32 %v978, %v1011
      %1013 = vmatmul.bf16.gmra.mxu0 %v254
      %v1014 = vpop.f32.mrf.mxu0
      %v1015 = vadd.f32 %v981, %v1014
      %v1016 = vpop.f32.mrf.mxu0
      %v1017 = vadd.f32 %v983, %v1016
      %1018 = vdwg.mxu0
      %v1019 = vld [vmem:[%s219] sm:$0xfc]
      %v1020 = vld [vmem:[%s219 + $0x8] sm:$0xfc]
      %v1021 = vld [vmem:[%s219 + $0xa0] sm:$0x3]
      %v1022 = vld [vmem:[%s219 + $0xa8] sm:$0x3]
      %v1023 = vpack.c.bf16 %v227, %v1019
      %v1024 = vpack.c.bf16 %v228, %v1020
      %v1025 = vpack.c.bf16 %v1021, %v1021
      %v1026 = vpack.c.bf16 %v1022, %v1022
      %s1027 = scalar_lea.vmem %s1, 512
      %v1028 = vld [vmem:[%s1027] sm:$0xff]
      %v1029 = vld [vmem:[%s1027 + $0x8] sm:$0xff]
      %v1030 = vld [vmem:[%s1027 + $0x10] sm:$0xff]
      %v1031 = vld [vmem:[%s1027 + $0x18] sm:$0xff]
      %v1032 = vld [vmem:[%s1027 + $0x20] sm:$0xff]
      %v1033 = vld [vmem:[%s1027 + $0x28] sm:$0xff]
      %v1034 = vld [vmem:[%s1027 + $0x30] sm:$0xff]
      %v1035 = vld [vmem:[%s1027 + $0x38] sm:$0xff]
      %v1036 = vld [vmem:[%s1027 + $0x40] sm:$0xff]
      %v1037 = vld [vmem:[%s1027 + $0x48] sm:$0xff]
      %v1038 = vld [vmem:[%s1027 + $0x50] sm:$0xff]
      %v1039 = vld [vmem:[%s1027 + $0x58] sm:$0xff]
      %v1040 = vld [vmem:[%s1027 + $0x60] sm:$0xff]
      %v1041 = vld [vmem:[%s1027 + $0x68] sm:$0xff]
      %v1042 = vld [vmem:[%s1027 + $0x70] sm:$0xff]
      %v1043 = vld [vmem:[%s1027 + $0x78] sm:$0xff]
      %v1044 = vld [vmem:[%s1027 + $0x80] sm:$0xff]
      %v1045 = vld [vmem:[%s1027 + $0x88] sm:$0xff]
      %v1046 = vld [vmem:[%s1027 + $0x90] sm:$0xff]
      %v1047 = vld [vmem:[%s1027 + $0x98] sm:$0xff]
      %v1048 = vld [vmem:[%s1027 + $0xa0] sm:$0xff]
      %v1049 = vld [vmem:[%s1027 + $0xa8] sm:$0xff]
      %v1050 = vld [vmem:[%s1027 + $0xb0] sm:$0xff]
      %v1051 = vld [vmem:[%s1027 + $0xb8] sm:$0xff]
      %v1052 = vld [vmem:[%s1027 + $0xc0] sm:$0xff]
      %v1053 = vld [vmem:[%s1027 + $0xc8] sm:$0xff]
      %v1054 = vld [vmem:[%s1027 + $0xd0] sm:$0xff]
      %v1055 = vld [vmem:[%s1027 + $0xd8] sm:$0xff]
      %v1056 = vld [vmem:[%s1027 + $0xe0] sm:$0xff]
      %v1057 = vld [vmem:[%s1027 + $0xe8] sm:$0xff]
      %v1058 = vld [vmem:[%s1027 + $0xf0] sm:$0xff]
      %v1059 = vld [vmem:[%s1027 + $0xf8] sm:$0xff]
      %vm1072 = vcmask 1046528
      %v1073 = vrot.slane %v1023, 1
      %v1074 = vrot.slane %v247, 1
      %v1075 = vsel %vm1072, %v1073, %v1074
      %v1076 = vrot.slane %v1024, 1
      %v1077 = vrot.slane %v248, 1
      %v1078 = vsel %vm1072, %v1076, %v1077
      %v1079 = vrot.slane %v249, 1
      %v1080 = vsel %vm1072, %v1074, %v1079
      %v1081 = vrot.slane %v250, 1
      %v1082 = vsel %vm1072, %v1077, %v1081
      %v1083 = vrot.slane %v251, 1
      %v1084 = vsel %vm1072, %v1079, %v1083
      %v1085 = vrot.slane %v252, 1
      %v1086 = vsel %vm1072, %v1081, %v1085
      %v1087 = vrot.slane %v253, 1
      %v1088 = vsel %vm1072, %v1083, %v1087
      %v1089 = vrot.slane %v254, 1
      %v1090 = vsel %vm1072, %v1085, %v1089
      %v1091 = vrot.slane %v1025, 1
      %v1092 = vsel %vm1072, %v1087, %v1091
      %v1093 = vrot.slane %v1026, 1
      %v1094 = vsel %vm1072, %v1089, %v1093
      %v1137 = vunpack.c.l.b16 %v1028
      %v1138 = vunpack.c.h.b16 %v1028
      %v1139 = vunpack.c.l.b16 %v1029
      %v1140 = vunpack.c.h.b16 %v1029
      %v1141 = vunpack.c.l.b16 %v1030
      %v1142 = vunpack.c.h.b16 %v1030
      %v1143 = vunpack.c.l.b16 %v1031
      %v1144 = vunpack.c.h.b16 %v1031
      %v1145 = vunpack.c.l.b16 %v1032
      %v1146 = vunpack.c.h.b16 %v1032
      %v1147 = vunpack.c.l.b16 %v1033
      %v1148 = vunpack.c.h.b16 %v1033
      %v1149 = vunpack.c.l.b16 %v1034
      %v1150 = vunpack.c.h.b16 %v1034
      %v1151 = vunpack.c.l.b16 %v1035
      %v1152 = vunpack.c.h.b16 %v1035
      %v1153 = vunpack.c.l.b16 %v1036
      %v1154 = vunpack.c.h.b16 %v1036
      %v1155 = vunpack.c.l.b16 %v1037
      %v1156 = vunpack.c.h.b16 %v1037
      %v1157 = vunpack.c.l.b16 %v1038
      %v1158 = vunpack.c.h.b16 %v1038
      %v1159 = vunpack.c.l.b16 %v1039
      %v1160 = vunpack.c.h.b16 %v1039
      %v1161 = vunpack.c.l.b16 %v1040
      %v1162 = vunpack.c.h.b16 %v1040
      %v1163 = vunpack.c.l.b16 %v1041
      %v1164 = vunpack.c.h.b16 %v1041
      %v1165 = vunpack.c.l.b16 %v1042
      %v1166 = vunpack.c.h.b16 %v1042
      %v1167 = vunpack.c.l.b16 %v1043
      %v1168 = vunpack.c.h.b16 %v1043
      %v1169 = vunpack.c.l.b16 %v1044
      %v1170 = vunpack.c.h.b16 %v1044
      %v1171 = vunpack.c.l.b16 %v1045
      %v1172 = vunpack.c.h.b16 %v1045
      %v1173 = vunpack.c.l.b16 %v1046
      %v1174 = vunpack.c.h.b16 %v1046
      %v1175 = vunpack.c.l.b16 %v1047
      %v1176 = vunpack.c.h.b16 %v1047
      %v1177 = vunpack.c.l.b16 %v1048
      %v1178 = vunpack.c.h.b16 %v1048
      %v1179 = vunpack.c.l.b16 %v1049
      %v1180 = vunpack.c.h.b16 %v1049
      %v1181 = vunpack.c.l.b16 %v1050
      %v1182 = vunpack.c.h.b16 %v1050
      %v1183 = vunpack.c.l.b16 %v1051
      %v1184 = vunpack.c.h.b16 %v1051
      %v1185 = vunpack.c.l.b16 %v1052
      %v1186 = vunpack.c.h.b16 %v1052
      %v1187 = vunpack.c.l.b16 %v1053
      %v1188 = vunpack.c.h.b16 %v1053
      %v1189 = vunpack.c.l.b16 %v1054
      %v1190 = vunpack.c.h.b16 %v1054
      %v1191 = vunpack.c.l.b16 %v1055
      %v1192 = vunpack.c.h.b16 %v1055
      %v1193 = vunpack.c.l.b16 %v1056
      %v1194 = vunpack.c.h.b16 %v1056
      %v1195 = vunpack.c.l.b16 %v1057
      %v1196 = vunpack.c.h.b16 %v1057
      %v1197 = vunpack.c.l.b16 %v1058
      %v1198 = vunpack.c.h.b16 %v1058
      %v1199 = vunpack.c.l.b16 %v1059
      %v1200 = vunpack.c.h.b16 %v1059
      %v1201 = vpack.c.b16 %v1139, %v1137
      %v1202 = vpack.c.b16 %v1140, %v1138
      %v1203 = vpack.c.b16 %v1143, %v1141
      %v1204 = vpack.c.b16 %v1144, %v1142
      %v1205 = vpack.c.b16 %v1147, %v1145
      %v1206 = vpack.c.b16 %v1148, %v1146
      %v1207 = vpack.c.b16 %v1151, %v1149
      %v1208 = vpack.c.b16 %v1152, %v1150
      %v1209 = vpack.c.b16 %v1155, %v1153
      %v1210 = vpack.c.b16 %v1156, %v1154
      %v1211 = vpack.c.b16 %v1159, %v1157
      %v1212 = vpack.c.b16 %v1160, %v1158
      %v1213 = vpack.c.b16 %v1163, %v1161
      %v1214 = vpack.c.b16 %v1164, %v1162
      %v1215 = vpack.c.b16 %v1167, %v1165
      %v1216 = vpack.c.b16 %v1168, %v1166
      %v1217 = vpack.c.b16 %v1171, %v1169
      %v1218 = vpack.c.b16 %v1172, %v1170
      %v1219 = vpack.c.b16 %v1175, %v1173
      %v1220 = vpack.c.b16 %v1176, %v1174
      %v1221 = vpack.c.b16 %v1179, %v1177
      %v1222 = vpack.c.b16 %v1180, %v1178
      %v1223 = vpack.c.b16 %v1183, %v1181
      %v1224 = vpack.c.b16 %v1184, %v1182
      %v1225 = vpack.c.b16 %v1187, %v1185
      %v1226 = vpack.c.b16 %v1188, %v1186
      %v1227 = vpack.c.b16 %v1191, %v1189
      %v1228 = vpack.c.b16 %v1192, %v1190
      %v1229 = vpack.c.b16 %v1195, %v1193
      %v1230 = vpack.c.b16 %v1196, %v1194
      %v1231 = vpack.c.b16 %v1199, %v1197
      %v1232 = vpack.c.b16 %v1200, %v1198
      %1265 = vmatpush.bf16.msra.mxu0 %v1215
      %1266 = vmatpush.bf16.msra.mxu0 %v1213
      %1267 = vmatpush.bf16.msra.mxu0 %v1211
      %1268 = vmatpush.bf16.msra.mxu0 %v1209
      %1269 = vmatpush.bf16.msra.mxu0 %v1207
      %1270 = vmatpush.bf16.msra.mxu0 %v1205
      %1271 = vmatpush.bf16.msra.mxu0 %v1203
      %1272 = vmatpush.bf16.msra.mxu0 %v1201
      %1273 = vmatmul.bf16.gmra.mxu0 %v1075
      %v1274 = vpop.f32.mrf.mxu0
      %v1275 = vadd.f32 0.0, %v1274
      %v1276 = vpop.f32.mrf.mxu0
      %v1277 = vadd.f32 0.0, %v1276
      %1278 = vmatmul.bf16.gmra.mxu0 %v1080
      %v1279 = vpop.f32.mrf.mxu0
      %v1280 = vadd.f32 0.0, %v1279
      %v1281 = vpop.f32.mrf.mxu0
      %v1282 = vadd.f32 0.0, %v1281
      %1283 = vmatmul.bf16.gmra.mxu0 %v1084
      %v1284 = vpop.f32.mrf.mxu0
      %v1285 = vadd.f32 0.0, %v1284
      %v1286 = vpop.f32.mrf.mxu0
      %v1287 = vadd.f32 0.0, %v1286
      %1288 = vmatmul.bf16.gmra.mxu0 %v1088
      %v1289 = vpop.f32.mrf.mxu0
      %v1290 = vadd.f32 0.0, %v1289
      %v1291 = vpop.f32.mrf.mxu0
      %v1292 = vadd.f32 0.0, %v1291
      %1293 = vmatmul.bf16.gmra.mxu0 %v1092
      %v1294 = vpop.f32.mrf.mxu0
      %v1295 = vadd.f32 0.0, %v1294
      %v1296 = vpop.f32.mrf.mxu0
      %v1297 = vadd.f32 0.0, %v1296
      %1298 = vdwg.mxu0
      %1299 = vmatpush.bf16.msra.mxu0 %v1231
      %1300 = vmatpush.bf16.msra.mxu0 %v1229
      %1301 = vmatpush.bf16.msra.mxu0 %v1227
      %1302 = vmatpush.bf16.msra.mxu0 %v1225
      %1303 = vmatpush.bf16.msra.mxu0 %v1223
      %1304 = vmatpush.bf16.msra.mxu0 %v1221
      %1305 = vmatpush.bf16.msra.mxu0 %v1219
      %1306 = vmatpush.bf16.msra.mxu0 %v1217
      %1307 = vmatmul.bf16.gmra.mxu0 %v1078
      %v1308 = vpop.f32.mrf.mxu0
      %v1309 = vadd.f32 %v1275, %v1308
      %v1310 = vpop.f32.mrf.mxu0
      %v1311 = vadd.f32 %v1277, %v1310
      %1312 = vmatmul.bf16.gmra.mxu0 %v1082
      %v1313 = vpop.f32.mrf.mxu0
      %v1314 = vadd.f32 %v1280, %v1313
      %v1315 = vpop.f32.mrf.mxu0
      %v1316 = vadd.f32 %v1282, %v1315
      %1317 = vmatmul.bf16.gmra.mxu0 %v1086
      %v1318 = vpop.f32.mrf.mxu0
      %v1319 = vadd.f32 %v1285, %v1318
      %v1320 = vpop.f32.mrf.mxu0
      %v1321 = vadd.f32 %v1287, %v1320
      %1322 = vmatmul.bf16.gmra.mxu0 %v1090
      %v1323 = vpop.f32.mrf.mxu0
      %v1324 = vadd.f32 %v1290, %v1323
      %v1325 = vpop.f32.mrf.mxu0
      %v1326 = vadd.f32 %v1292, %v1325
      %1327 = vmatmul.bf16.gmra.mxu0 %v1094
      %v1328 = vpop.f32.mrf.mxu0
      %v1329 = vadd.f32 %v1295, %v1328
      %v1330 = vpop.f32.mrf.mxu0
      %v1331 = vadd.f32 %v1297, %v1330
      %1332 = vdwg.mxu0
      %1333 = vmatpush.bf16.msra.mxu0 %v1216
      %1334 = vmatpush.bf16.msra.mxu0 %v1214
      %1335 = vmatpush.bf16.msra.mxu0 %v1212
      %1336 = vmatpush.bf16.msra.mxu0 %v1210
      %1337 = vmatpush.bf16.msra.mxu0 %v1208
      %1338 = vmatpush.bf16.msra.mxu0 %v1206
      %1339 = vmatpush.bf16.msra.mxu0 %v1204
      %1340 = vmatpush.bf16.msra.mxu0 %v1202
      %1341 = vmatmul.bf16.gmra.mxu0 %v1075
      %v1342 = vpop.f32.mrf.mxu0
      %v1343 = vadd.f32 0.0, %v1342
      %v1344 = vpop.f32.mrf.mxu0
      %v1345 = vadd.f32 0.0, %v1344
      %1346 = vmatmul.bf16.gmra.mxu0 %v1080
      %v1347 = vpop.f32.mrf.mxu0
      %v1348 = vadd.f32 0.0, %v1347
      %v1349 = vpop.f32.mrf.mxu0
      %v1350 = vadd.f32 0.0, %v1349
      %1351 = vmatmul.bf16.gmra.mxu0 %v1084
      %v1352 = vpop.f32.mrf.mxu0
      %v1353 = vadd.f32 0.0, %v1352
      %v1354 = vpop.f32.mrf.mxu0
      %v1355 = vadd.f32 0.0, %v1354
      %1356 = vmatmul.bf16.gmra.mxu0 %v1088
      %v1357 = vpop.f32.mrf.mxu0
      %v1358 = vadd.f32 0.0, %v1357
      %v1359 = vpop.f32.mrf.mxu0
      %v1360 = vadd.f32 0.0, %v1359
      %1361 = vmatmul.bf16.gmra.mxu0 %v1092
      %v1362 = vpop.f32.mrf.mxu0
      %v1363 = vadd.f32 0.0, %v1362
      %v1364 = vpop.f32.mrf.mxu0
      %v1365 = vadd.f32 0.0, %v1364
      %1366 = vdwg.mxu0
      %1367 = vmatpush.bf16.msra.mxu0 %v1232
      %1368 = vmatpush.bf16.msra.mxu0 %v1230
      %1369 = vmatpush.bf16.msra.mxu0 %v1228
      %1370 = vmatpush.bf16.msra.mxu0 %v1226
      %1371 = vmatpush.bf16.msra.mxu0 %v1224
      %1372 = vmatpush.bf16.msra.mxu0 %v1222
      %1373 = vmatpush.bf16.msra.mxu0 %v1220
      %1374 = vmatpush.bf16.msra.mxu0 %v1218
      %1375 = vmatmul.bf16.gmra.mxu0 %v1078
      %v1376 = vpop.f32.mrf.mxu0
      %v1377 = vadd.f32 %v1343, %v1376
      %v1378 = vpop.f32.mrf.mxu0
      %v1379 = vadd.f32 %v1345, %v1378
      %1380 = vmatmul.bf16.gmra.mxu0 %v1082
      %v1381 = vpop.f32.mrf.mxu0
      %v1382 = vadd.f32 %v1348, %v1381
      %v1383 = vpop.f32.mrf.mxu0
      %v1384 = vadd.f32 %v1350, %v1383
      %1385 = vmatmul.bf16.gmra.mxu0 %v1086
      %v1386 = vpop.f32.mrf.mxu0
      %v1387 = vadd.f32 %v1353, %v1386
      %v1388 = vpop.f32.mrf.mxu0
      %v1389 = vadd.f32 %v1355, %v1388
      %1390 = vmatmul.bf16.gmra.mxu0 %v1090
      %v1391 = vpop.f32.mrf.mxu0
      %v1392 = vadd.f32 %v1358, %v1391
      %v1393 = vpop.f32.mrf.mxu0
      %v1394 = vadd.f32 %v1360, %v1393
      %1395 = vmatmul.bf16.gmra.mxu0 %v1094
      %v1396 = vpop.f32.mrf.mxu0
      %v1397 = vadd.f32 %v1363, %v1396
      %v1398 = vpop.f32.mrf.mxu0
      %v1399 = vadd.f32 %v1365, %v1398
      %1400 = vdwg.mxu0
      %v1401 = vadd.f32 %v927, %v1309
      %v1402 = vadd.f32 %v995, %v1377
      %v1403 = vadd.f32 %v929, %v1311
      %v1404 = vadd.f32 %v997, %v1379
      %v1405 = vadd.f32 %v932, %v1314
      %v1406 = vadd.f32 %v1000, %v1382
      %v1407 = vadd.f32 %v934, %v1316
      %v1408 = vadd.f32 %v1002, %v1384
      %v1409 = vadd.f32 %v937, %v1319
      %v1410 = vadd.f32 %v1005, %v1387
      %v1411 = vadd.f32 %v939, %v1321
      %v1412 = vadd.f32 %v1007, %v1389
      %v1413 = vadd.f32 %v942, %v1324
      %v1414 = vadd.f32 %v1010, %v1392
      %v1415 = vadd.f32 %v944, %v1326
      %v1416 = vadd.f32 %v1012, %v1394
      %v1417 = vadd.f32 %v947, %v1329
      %v1418 = vadd.f32 %v1015, %v1397
      %v1419 = vadd.f32 %v949, %v1331
      %v1420 = vadd.f32 %v1017, %v1399
      %v1421 = vld [vmem:[%s219 + $0x10] sm:$0xfc]
      %v1422 = vld [vmem:[%s219 + $0x18] sm:$0xfc]
      %v1423 = vld [vmem:[%s219 + $0x20] sm:$0xff]
      %v1424 = vld [vmem:[%s219 + $0x28] sm:$0xff]
      %v1425 = vld [vmem:[%s219 + $0x30] sm:$0xff]
      %v1426 = vld [vmem:[%s219 + $0x38] sm:$0xff]
      %v1427 = vld [vmem:[%s219 + $0x40] sm:$0xff]
      %v1428 = vld [vmem:[%s219 + $0x48] sm:$0xff]
      %v1429 = vld [vmem:[%s219 + $0x50] sm:$0xff]
      %v1430 = vld [vmem:[%s219 + $0x58] sm:$0xff]
      %v1431 = vld [vmem:[%s219 + $0x60] sm:$0xff]
      %v1432 = vld [vmem:[%s219 + $0x68] sm:$0xff]
      %v1433 = vld [vmem:[%s219 + $0x70] sm:$0xff]
      %v1434 = vld [vmem:[%s219 + $0x78] sm:$0xff]
      %v1435 = vld [vmem:[%s219 + $0x80] sm:$0xff]
      %v1436 = vld [vmem:[%s219 + $0x88] sm:$0xff]
      %v1437 = vld [vmem:[%s219 + $0x90] sm:$0xff]
      %v1438 = vld [vmem:[%s219 + $0x98] sm:$0xff]
      %v1439 = vld [vmem:[%s219 + $0xa0] sm:$0xff]
      %v1440 = vld [vmem:[%s219 + $0xa8] sm:$0xff]
      %v1441 = vld [vmem:[%s219 + $0xb0] sm:$0x3]
      %v1442 = vld [vmem:[%s219 + $0xb8] sm:$0x3]
      %v1443 = vpack.c.bf16 %v1423, %v1421
      %v1444 = vpack.c.bf16 %v1424, %v1422
      %v1445 = vpack.c.bf16 %v1427, %v1425
      %v1446 = vpack.c.bf16 %v1428, %v1426
      %v1447 = vpack.c.bf16 %v1431, %v1429
      %v1448 = vpack.c.bf16 %v1432, %v1430
      %v1449 = vpack.c.bf16 %v1435, %v1433
      %v1450 = vpack.c.bf16 %v1436, %v1434
      %v1451 = vpack.c.bf16 %v1439, %v1437
      %v1452 = vpack.c.bf16 %v1440, %v1438
      %v1453 = vpack.c.bf16 %v1441, %v1441
      %v1454 = vpack.c.bf16 %v1442, %v1442
      %s1455 = scalar_lea.vmem %s1, 768
      %v1456 = vld [vmem:[%s1455] sm:$0xff]
      %v1457 = vld [vmem:[%s1455 + $0x8] sm:$0xff]
      %v1458 = vld [vmem:[%s1455 + $0x10] sm:$0xff]
      %v1459 = vld [vmem:[%s1455 + $0x18] sm:$0xff]
      %v1460 = vld [vmem:[%s1455 + $0x20] sm:$0xff]
      %v1461 = vld [vmem:[%s1455 + $0x28] sm:$0xff]
      %v1462 = vld [vmem:[%s1455 + $0x30] sm:$0xff]
      %v1463 = vld [vmem:[%s1455 + $0x38] sm:$0xff]
      %v1464 = vld [vmem:[%s1455 + $0x40] sm:$0xff]
      %v1465 = vld [vmem:[%s1455 + $0x48] sm:$0xff]
      %v1466 = vld [vmem:[%s1455 + $0x50] sm:$0xff]
      %v1467 = vld [vmem:[%s1455 + $0x58] sm:$0xff]
      %v1468 = vld [vmem:[%s1455 + $0x60] sm:$0xff]
      %v1469 = vld [vmem:[%s1455 + $0x68] sm:$0xff]
      %v1470 = vld [vmem:[%s1455 + $0x70] sm:$0xff]
      %v1471 = vld [vmem:[%s1455 + $0x78] sm:$0xff]
      %v1472 = vld [vmem:[%s1455 + $0x80] sm:$0xff]
      %v1473 = vld [vmem:[%s1455 + $0x88] sm:$0xff]
      %v1474 = vld [vmem:[%s1455 + $0x90] sm:$0xff]
      %v1475 = vld [vmem:[%s1455 + $0x98] sm:$0xff]
      %v1476 = vld [vmem:[%s1455 + $0xa0] sm:$0xff]
      %v1477 = vld [vmem:[%s1455 + $0xa8] sm:$0xff]
      %v1478 = vld [vmem:[%s1455 + $0xb0] sm:$0xff]
      %v1479 = vld [vmem:[%s1455 + $0xb8] sm:$0xff]
      %v1480 = vld [vmem:[%s1455 + $0xc0] sm:$0xff]
      %v1481 = vld [vmem:[%s1455 + $0xc8] sm:$0xff]
      %v1482 = vld [vmem:[%s1455 + $0xd0] sm:$0xff]
      %v1483 = vld [vmem:[%s1455 + $0xd8] sm:$0xff]
      %v1484 = vld [vmem:[%s1455 + $0xe0] sm:$0xff]
      %v1485 = vld [vmem:[%s1455 + $0xe8] sm:$0xff]
      %v1486 = vld [vmem:[%s1455 + $0xf0] sm:$0xff]
      %v1487 = vld [vmem:[%s1455 + $0xf8] sm:$0xff]
      %v1500 = vrot.slane %v1443, 1
      %v1501 = vrot.slane %v1445, 1
      %v1502 = vsel %vm1072, %v1500, %v1501
      %v1503 = vrot.slane %v1444, 1
      %v1504 = vrot.slane %v1446, 1
      %v1505 = vsel %vm1072, %v1503, %v1504
      %v1506 = vrot.slane %v1447, 1
      %v1507 = vsel %vm1072, %v1501, %v1506
      %v1508 = vrot.slane %v1448, 1
      %v1509 = vsel %vm1072, %v1504, %v1508
      %v1510 = vrot.slane %v1449, 1
      %v1511 = vsel %vm1072, %v1506, %v1510
      %v1512 = vrot.slane %v1450, 1
      %v1513 = vsel %vm1072, %v1508, %v1512
      %v1514 = vrot.slane %v1451, 1
      %v1515 = vsel %vm1072, %v1510, %v1514
      %v1516 = vrot.slane %v1452, 1
      %v1517 = vsel %vm1072, %v1512, %v1516
      %v1518 = vrot.slane %v1453, 1
      %v1519 = vsel %vm1072, %v1514, %v1518
      %v1520 = vrot.slane %v1454, 1
      %v1521 = vsel %vm1072, %v1516, %v1520
      %v1564 = vunpack.c.l.b16 %v1456
      %v1565 = vunpack.c.h.b16 %v1456
      %v1566 = vunpack.c.l.b16 %v1457
      %v1567 = vunpack.c.h.b16 %v1457
      %v1568 = vunpack.c.l.b16 %v1458
      %v1569 = vunpack.c.h.b16 %v1458
      %v1570 = vunpack.c.l.b16 %v1459
      %v1571 = vunpack.c.h.b16 %v1459
      %v1572 = vunpack.c.l.b16 %v1460
      %v1573 = vunpack.c.h.b16 %v1460
      %v1574 = vunpack.c.l.b16 %v1461
      %v1575 = vunpack.c.h.b16 %v1461
      %v1576 = vunpack.c.l.b16 %v1462
      %v1577 = vunpack.c.h.b16 %v1462
      %v1578 = vunpack.c.l.b16 %v1463
      %v1579 = vunpack.c.h.b16 %v1463
      %v1580 = vunpack.c.l.b16 %v1464
      %v1581 = vunpack.c.h.b16 %v1464
      %v1582 = vunpack.c.l.b16 %v1465
      %v1583 = vunpack.c.h.b16 %v1465
      %v1584 = vunpack.c.l.b16 %v1466
      %v1585 = vunpack.c.h.b16 %v1466
      %v1586 = vunpack.c.l.b16 %v1467
      %v1587 = vunpack.c.h.b16 %v1467
      %v1588 = vunpack.c.l.b16 %v1468
      %v1589 = vunpack.c.h.b16 %v1468
      %v1590 = vunpack.c.l.b16 %v1469
      %v1591 = vunpack.c.h.b16 %v1469
      %v1592 = vunpack.c.l.b16 %v1470
      %v1593 = vunpack.c.h.b16 %v1470
      %v1594 = vunpack.c.l.b16 %v1471
      %v1595 = vunpack.c.h.b16 %v1471
      %v1596 = vunpack.c.l.b16 %v1472
      %v1597 = vunpack.c.h.b16 %v1472
      %v1598 = vunpack.c.l.b16 %v1473
      %v1599 = vunpack.c.h.b16 %v1473
      %v1600 = vunpack.c.l.b16 %v1474
      %v1601 = vunpack.c.h.b16 %v1474
      %v1602 = vunpack.c.l.b16 %v1475
      %v1603 = vunpack.c.h.b16 %v1475
      %v1604 = vunpack.c.l.b16 %v1476
      %v1605 = vunpack.c.h.b16 %v1476
      %v1606 = vunpack.c.l.b16 %v1477
      %v1607 = vunpack.c.h.b16 %v1477
      %v1608 = vunpack.c.l.b16 %v1478
      %v1609 = vunpack.c.h.b16 %v1478
      %v1610 = vunpack.c.l.b16 %v1479
      %v1611 = vunpack.c.h.b16 %v1479
      %v1612 = vunpack.c.l.b16 %v1480
      %v1613 = vunpack.c.h.b16 %v1480
      %v1614 = vunpack.c.l.b16 %v1481
      %v1615 = vunpack.c.h.b16 %v1481
      %v1616 = vunpack.c.l.b16 %v1482
      %v1617 = vunpack.c.h.b16 %v1482
      %v1618 = vunpack.c.l.b16 %v1483
      %v1619 = vunpack.c.h.b16 %v1483
      %v1620 = vunpack.c.l.b16 %v1484
      %v1621 = vunpack.c.h.b16 %v1484
      %v1622 = vunpack.c.l.b16 %v1485
      %v1623 = vunpack.c.h.b16 %v1485
      %v1624 = vunpack.c.l.b16 %v1486
      %v1625 = vunpack.c.h.b16 %v1486
      %v1626 = vunpack.c.l.b16 %v1487
      %v1627 = vunpack.c.h.b16 %v1487
      %v1628 = vpack.c.b16 %v1566, %v1564
      %v1629 = vpack.c.b16 %v1567, %v1565
      %v1630 = vpack.c.b16 %v1570, %v1568
      %v1631 = vpack.c.b16 %v1571, %v1569
      %v1632 = vpack.c.b16 %v1574, %v1572
      %v1633 = vpack.c.b16 %v1575, %v1573
      %v1634 = vpack.c.b16 %v1578, %v1576
      %v1635 = vpack.c.b16 %v1579, %v1577
      %v1636 = vpack.c.b16 %v1582, %v1580
      %v1637 = vpack.c.b16 %v1583, %v1581
      %v1638 = vpack.c.b16 %v1586, %v1584
      %v1639 = vpack.c.b16 %v1587, %v1585
      %v1640 = vpack.c.b16 %v1590, %v1588
      %v1641 = vpack.c.b16 %v1591, %v1589
      %v1642 = vpack.c.b16 %v1594, %v1592
      %v1643 = vpack.c.b16 %v1595, %v1593
      %v1644 = vpack.c.b16 %v1598, %v1596
      %v1645 = vpack.c.b16 %v1599, %v1597
      %v1646 = vpack.c.b16 %v1602, %v1600
      %v1647 = vpack.c.b16 %v1603, %v1601
      %v1648 = vpack.c.b16 %v1606, %v1604
      %v1649 = vpack.c.b16 %v1607, %v1605
      %v1650 = vpack.c.b16 %v1610, %v1608
      %v1651 = vpack.c.b16 %v1611, %v1609
      %v1652 = vpack.c.b16 %v1614, %v1612
      %v1653 = vpack.c.b16 %v1615, %v1613
      %v1654 = vpack.c.b16 %v1618, %v1616
      %v1655 = vpack.c.b16 %v1619, %v1617
      %v1656 = vpack.c.b16 %v1622, %v1620
      %v1657 = vpack.c.b16 %v1623, %v1621
      %v1658 = vpack.c.b16 %v1626, %v1624
      %v1659 = vpack.c.b16 %v1627, %v1625
      %1692 = vmatpush.bf16.msra.mxu0 %v1642
      %1693 = vmatpush.bf16.msra.mxu0 %v1640
      %1694 = vmatpush.bf16.msra.mxu0 %v1638
      %1695 = vmatpush.bf16.msra.mxu0 %v1636
      %1696 = vmatpush.bf16.msra.mxu0 %v1634
      %1697 = vmatpush.bf16.msra.mxu0 %v1632
      %1698 = vmatpush.bf16.msra.mxu0 %v1630
      %1699 = vmatpush.bf16.msra.mxu0 %v1628
      %1700 = vmatmul.bf16.gmra.mxu0 %v1502
      %v1701 = vpop.f32.mrf.mxu0
      %v1702 = vadd.f32 0.0, %v1701
      %v1703 = vpop.f32.mrf.mxu0
      %v1704 = vadd.f32 0.0, %v1703
      %1705 = vmatmul.bf16.gmra.mxu0 %v1507
      %v1706 = vpop.f32.mrf.mxu0
      %v1707 = vadd.f32 0.0, %v1706
      %v1708 = vpop.f32.mrf.mxu0
      %v1709 = vadd.f32 0.0, %v1708
      %1710 = vmatmul.bf16.gmra.mxu0 %v1511
      %v1711 = vpop.f32.mrf.mxu0
      %v1712 = vadd.f32 0.0, %v1711
      %v1713 = vpop.f32.mrf.mxu0
      %v1714 = vadd.f32 0.0, %v1713
      %1715 = vmatmul.bf16.gmra.mxu0 %v1515
      %v1716 = vpop.f32.mrf.mxu0
      %v1717 = vadd.f32 0.0, %v1716
      %v1718 = vpop.f32.mrf.mxu0
      %v1719 = vadd.f32 0.0, %v1718
      %1720 = vmatmul.bf16.gmra.mxu0 %v1519
      %v1721 = vpop.f32.mrf.mxu0
      %v1722 = vadd.f32 0.0, %v1721
      %v1723 = vpop.f32.mrf.mxu0
      %v1724 = vadd.f32 0.0, %v1723
      %1725 = vdwg.mxu0
      %1726 = vmatpush.bf16.msra.mxu0 %v1658
      %1727 = vmatpush.bf16.msra.mxu0 %v1656
      %1728 = vmatpush.bf16.msra.mxu0 %v1654
      %1729 = vmatpush.bf16.msra.mxu0 %v1652
      %1730 = vmatpush.bf16.msra.mxu0 %v1650
      %1731 = vmatpush.bf16.msra.mxu0 %v1648
      %1732 = vmatpush.bf16.msra.mxu0 %v1646
      %1733 = vmatpush.bf16.msra.mxu0 %v1644
      %1734 = vmatmul.bf16.gmra.mxu0 %v1505
      %v1735 = vpop.f32.mrf.mxu0
      %v1736 = vadd.f32 %v1702, %v1735
      %v1737 = vpop.f32.mrf.mxu0
      %v1738 = vadd.f32 %v1704, %v1737
      %1739 = vmatmul.bf16.gmra.mxu0 %v1509
      %v1740 = vpop.f32.mrf.mxu0
      %v1741 = vadd.f32 %v1707, %v1740
      %v1742 = vpop.f32.mrf.mxu0
      %v1743 = vadd.f32 %v1709, %v1742
      %1744 = vmatmul.bf16.gmra.mxu0 %v1513
      %v1745 = vpop.f32.mrf.mxu0
      %v1746 = vadd.f32 %v1712, %v1745
      %v1747 = vpop.f32.mrf.mxu0
      %v1748 = vadd.f32 %v1714, %v1747
      %1749 = vmatmul.bf16.gmra.mxu0 %v1517
      %v1750 = vpop.f32.mrf.mxu0
      %v1751 = vadd.f32 %v1717, %v1750
      %v1752 = vpop.f32.mrf.mxu0
      %v1753 = vadd.f32 %v1719, %v1752
      %1754 = vmatmul.bf16.gmra.mxu0 %v1521
      %v1755 = vpop.f32.mrf.mxu0
      %v1756 = vadd.f32 %v1722, %v1755
      %v1757 = vpop.f32.mrf.mxu0
      %v1758 = vadd.f32 %v1724, %v1757
      %1759 = vdwg.mxu0
      %1760 = vmatpush.bf16.msra.mxu0 %v1643
      %1761 = vmatpush.bf16.msra.mxu0 %v1641
      %1762 = vmatpush.bf16.msra.mxu0 %v1639
      %1763 = vmatpush.bf16.msra.mxu0 %v1637
      %1764 = vmatpush.bf16.msra.mxu0 %v1635
      %1765 = vmatpush.bf16.msra.mxu0 %v1633
      %1766 = vmatpush.bf16.msra.mxu0 %v1631
      %1767 = vmatpush.bf16.msra.mxu0 %v1629
      %1768 = vmatmul.bf16.gmra.mxu0 %v1502
      %v1769 = vpop.f32.mrf.mxu0
      %v1770 = vadd.f32 0.0, %v1769
      %v1771 = vpop.f32.mrf.mxu0
      %v1772 = vadd.f32 0.0, %v1771
      %1773 = vmatmul.bf16.gmra.mxu0 %v1507
      %v1774 = vpop.f32.mrf.mxu0
      %v1775 = vadd.f32 0.0, %v1774
      %v1776 = vpop.f32.mrf.mxu0
      %v1777 = vadd.f32 0.0, %v1776
      %1778 = vmatmul.bf16.gmra.mxu0 %v1511
      %v1779 = vpop.f32.mrf.mxu0
      %v1780 = vadd.f32 0.0, %v1779
      %v1781 = vpop.f32.mrf.mxu0
      %v1782 = vadd.f32 0.0, %v1781
      %1783 = vmatmul.bf16.gmra.mxu0 %v1515
      %v1784 = vpop.f32.mrf.mxu0
      %v1785 = vadd.f32 0.0, %v1784
      %v1786 = vpop.f32.mrf.mxu0
      %v1787 = vadd.f32 0.0, %v1786
      %1788 = vmatmul.bf16.gmra.mxu0 %v1519
      %v1789 = vpop.f32.mrf.mxu0
      %v1790 = vadd.f32 0.0, %v1789
      %v1791 = vpop.f32.mrf.mxu0
      %v1792 = vadd.f32 0.0, %v1791
      %1793 = vdwg.mxu0
      %1794 = vmatpush.bf16.msra.mxu0 %v1659
      %1795 = vmatpush.bf16.msra.mxu0 %v1657
      %1796 = vmatpush.bf16.msra.mxu0 %v1655
      %1797 = vmatpush.bf16.msra.mxu0 %v1653
      %1798 = vmatpush.bf16.msra.mxu0 %v1651
      %1799 = vmatpush.bf16.msra.mxu0 %v1649
      %1800 = vmatpush.bf16.msra.mxu0 %v1647
      %1801 = vmatpush.bf16.msra.mxu0 %v1645
      %1802 = vmatmul.bf16.gmra.mxu0 %v1505
      %v1803 = vpop.f32.mrf.mxu0
      %v1804 = vadd.f32 %v1770, %v1803
      %v1805 = vpop.f32.mrf.mxu0
      %v1806 = vadd.f32 %v1772, %v1805
      %1807 = vmatmul.bf16.gmra.mxu0 %v1509
      %v1808 = vpop.f32.mrf.mxu0
      %v1809 = vadd.f32 %v1775, %v1808
      %v1810 = vpop.f32.mrf.mxu0
      %v1811 = vadd.f32 %v1777, %v1810
      %1812 = vmatmul.bf16.gmra.mxu0 %v1513
      %v1813 = vpop.f32.mrf.mxu0
      %v1814 = vadd.f32 %v1780, %v1813
      %v1815 = vpop.f32.mrf.mxu0
      %v1816 = vadd.f32 %v1782, %v1815
      %1817 = vmatmul.bf16.gmra.mxu0 %v1517
      %v1818 = vpop.f32.mrf.mxu0
      %v1819 = vadd.f32 %v1785, %v1818
      %v1820 = vpop.f32.mrf.mxu0
      %v1821 = vadd.f32 %v1787, %v1820
      %1822 = vmatmul.bf16.gmra.mxu0 %v1521
      %v1823 = vpop.f32.mrf.mxu0
      %v1824 = vadd.f32 %v1790, %v1823
      %v1825 = vpop.f32.mrf.mxu0
      %v1826 = vadd.f32 %v1792, %v1825
      %1827 = vdwg.mxu0
      %v1828 = vadd.f32 %v1401, %v1736
      %v1829 = vadd.f32 %v1402, %v1804
      %v1830 = vadd.f32 %v1403, %v1738
      %v1831 = vadd.f32 %v1404, %v1806
      %v1832 = vadd.f32 %v1405, %v1741
      %v1833 = vadd.f32 %v1406, %v1809
      %v1834 = vadd.f32 %v1407, %v1743
      %v1835 = vadd.f32 %v1408, %v1811
      %v1836 = vadd.f32 %v1409, %v1746
      %v1837 = vadd.f32 %v1410, %v1814
      %v1838 = vadd.f32 %v1411, %v1748
      %v1839 = vadd.f32 %v1412, %v1816
      %v1840 = vadd.f32 %v1413, %v1751
      %v1841 = vadd.f32 %v1414, %v1819
      %v1842 = vadd.f32 %v1415, %v1753
      %v1843 = vadd.f32 %v1416, %v1821
      %v1844 = vadd.f32 %v1417, %v1756
      %v1845 = vadd.f32 %v1418, %v1824
      %v1846 = vadd.f32 %v1419, %v1758
      %v1847 = vadd.f32 %v1420, %v1826
      %v1848 = vld [vmem:[%s219 + $0x10] sm:$0xf8]
      %v1849 = vld [vmem:[%s219 + $0x18] sm:$0xf8]
      %v1850 = vld [vmem:[%s219 + $0xb0] sm:$0x7]
      %v1851 = vld [vmem:[%s219 + $0xb8] sm:$0x7]
      %v1852 = vpack.c.bf16 %v1423, %v1848
      %v1853 = vpack.c.bf16 %v1424, %v1849
      %v1854 = vpack.c.bf16 %v1850, %v1850
      %v1855 = vpack.c.bf16 %v1851, %v1851
      %s1856 = scalar_lea.vmem %s1, 1024
      %v1857 = vld [vmem:[%s1856] sm:$0xff]
      %v1858 = vld [vmem:[%s1856 + $0x8] sm:$0xff]
      %v1859 = vld [vmem:[%s1856 + $0x10] sm:$0xff]
      %v1860 = vld [vmem:[%s1856 + $0x18] sm:$0xff]
      %v1861 = vld [vmem:[%s1856 + $0x20] sm:$0xff]
      %v1862 = vld [vmem:[%s1856 + $0x28] sm:$0xff]
      %v1863 = vld [vmem:[%s1856 + $0x30] sm:$0xff]
      %v1864 = vld [vmem:[%s1856 + $0x38] sm:$0xff]
      %v1865 = vld [vmem:[%s1856 + $0x40] sm:$0xff]
      %v1866 = vld [vmem:[%s1856 + $0x48] sm:$0xff]
      %v1867 = vld [vmem:[%s1856 + $0x50] sm:$0xff]
      %v1868 = vld [vmem:[%s1856 + $0x58] sm:$0xff]
      %v1869 = vld [vmem:[%s1856 + $0x60] sm:$0xff]
      %v1870 = vld [vmem:[%s1856 + $0x68] sm:$0xff]
      %v1871 = vld [vmem:[%s1856 + $0x70] sm:$0xff]
      %v1872 = vld [vmem:[%s1856 + $0x78] sm:$0xff]
      %v1873 = vld [vmem:[%s1856 + $0x80] sm:$0xff]
      %v1874 = vld [vmem:[%s1856 + $0x88] sm:$0xff]
      %v1875 = vld [vmem:[%s1856 + $0x90] sm:$0xff]
      %v1876 = vld [vmem:[%s1856 + $0x98] sm:$0xff]
      %v1877 = vld [vmem:[%s1856 + $0xa0] sm:$0xff]
      %v1878 = vld [vmem:[%s1856 + $0xa8] sm:$0xff]
      %v1879 = vld [vmem:[%s1856 + $0xb0] sm:$0xff]
      %v1880 = vld [vmem:[%s1856 + $0xb8] sm:$0xff]
      %v1881 = vld [vmem:[%s1856 + $0xc0] sm:$0xff]
      %v1882 = vld [vmem:[%s1856 + $0xc8] sm:$0xff]
      %v1883 = vld [vmem:[%s1856 + $0xd0] sm:$0xff]
      %v1884 = vld [vmem:[%s1856 + $0xd8] sm:$0xff]
      %v1885 = vld [vmem:[%s1856 + $0xe0] sm:$0xff]
      %v1886 = vld [vmem:[%s1856 + $0xe8] sm:$0xff]
      %v1887 = vld [vmem:[%s1856 + $0xf0] sm:$0xff]
      %v1888 = vld [vmem:[%s1856 + $0xf8] sm:$0xff]
      %vm1889 = vsmask.f32 6400
      %v1891 = vshrl.u32 %v1852, 16
      %v1893 = vrot.slane %v1891, 1
      %v1894 = vshll.u32 %v1852, 16
      %v1896 = vrot.slane %v1894, 2
      %v1897 = vor.u32 %v1893, %v1896
      %v1899 = vshrl.u32 %v1445, 16
      %v1901 = vrot.slane %v1899, 1
      %v1902 = vshll.u32 %v1445, 16
      %v1904 = vrot.slane %v1902, 2
      %v1905 = vor.u32 %v1901, %v1904
      %v1906 = vsel %vm1889, %v1897, %v1905
      %v1908 = vshrl.u32 %v1853, 16
      %v1910 = vrot.slane %v1908, 1
      %v1911 = vshll.u32 %v1853, 16
      %v1913 = vrot.slane %v1911, 2
      %v1914 = vor.u32 %v1910, %v1913
      %v1916 = vshrl.u32 %v1446, 16
      %v1918 = vrot.slane %v1916, 1
      %v1919 = vshll.u32 %v1446, 16
      %v1921 = vrot.slane %v1919, 2
      %v1922 = vor.u32 %v1918, %v1921
      %v1923 = vsel %vm1889, %v1914, %v1922
      %v1925 = vshrl.u32 %v1447, 16
      %v1927 = vrot.slane %v1925, 1
      %v1928 = vshll.u32 %v1447, 16
      %v1930 = vrot.slane %v1928, 2
      %v1931 = vor.u32 %v1927, %v1930
      %v1932 = vsel %vm1889, %v1905, %v1931
      %v1934 = vshrl.u32 %v1448, 16
      %v1936 = vrot.slane %v1934, 1
      %v1937 = vshll.u32 %v1448, 16
      %v1939 = vrot.slane %v1937, 2
      %v1940 = vor.u32 %v1936, %v1939
      %v1941 = vsel %vm1889, %v1922, %v1940
      %v1943 = vshrl.u32 %v1449, 16
      %v1945 = vrot.slane %v1943, 1
      %v1946 = vshll.u32 %v1449, 16
      %v1948 = vrot.slane %v1946, 2
      %v1949 = vor.u32 %v1945, %v1948
      %v1950 = vsel %vm1889, %v1931, %v1949
      %v1952 = vshrl.u32 %v1450, 16
      %v1954 = vrot.slane %v1952, 1
      %v1955 = vshll.u32 %v1450, 16
      %v1957 = vrot.slane %v1955, 2
      %v1958 = vor.u32 %v1954, %v1957
      %v1959 = vsel %vm1889, %v1940, %v1958
      %v1961 = vshrl.u32 %v1451, 16
      %v1963 = vrot.slane %v1961, 1
      %v1964 = vshll.u32 %v1451, 16
      %v1966 = vrot.slane %v1964, 2
      %v1967 = vor.u32 %v1963, %v1966
      %v1968 = vsel %vm1889, %v1949, %v1967
      %v1970 = vshrl.u32 %v1452, 16
      %v1972 = vrot.slane %v1970, 1
      %v1973 = vshll.u32 %v1452, 16
      %v1975 = vrot.slane %v1973, 2
      %v1976 = vor.u32 %v1972, %v1975
      %v1977 = vsel %vm1889, %v1958, %v1976
      %v1979 = vshrl.u32 %v1854, 16
      %v1981 = vrot.slane %v1979, 1
      %v1982 = vshll.u32 %v1854, 16
      %v1984 = vrot.slane %v1982, 2
      %v1985 = vor.u32 %v1981, %v1984
      %v1986 = vsel %vm1889, %v1967, %v1985
      %v1988 = vshrl.u32 %v1855, 16
      %v1990 = vrot.slane %v1988, 1
      %v1991 = vshll.u32 %v1855, 16
      %v1993 = vrot.slane %v1991, 2
      %v1994 = vor.u32 %v1990, %v1993
      %v1995 = vsel %vm1889, %v1976, %v1994
      %v2038 = vunpack.c.l.b16 %v1857
      %v2039 = vunpack.c.h.b16 %v1857
      %v2040 = vunpack.c.l.b16 %v1858
      %v2041 = vunpack.c.h.b16 %v1858
      %v2042 = vunpack.c.l.b16 %v1859
      %v2043 = vunpack.c.h.b16 %v1859
      %v2044 = vunpack.c.l.b16 %v1860
      %v2045 = vunpack.c.h.b16 %v1860
      %v2046 = vunpack.c.l.b16 %v1861
      %v2047 = vunpack.c.h.b16 %v1861
      %v2048 = vunpack.c.l.b16 %v1862
      %v2049 = vunpack.c.h.b16 %v1862
      %v2050 = vunpack.c.l.b16 %v1863
      %v2051 = vunpack.c.h.b16 %v1863
      %v2052 = vunpack.c.l.b16 %v1864
      %v2053 = vunpack.c.h.b16 %v1864
      %v2054 = vunpack.c.l.b16 %v1865
      %v2055 = vunpack.c.h.b16 %v1865
      %v2056 = vunpack.c.l.b16 %v1866
      %v2057 = vunpack.c.h.b16 %v1866
      %v2058 = vunpack.c.l.b16 %v1867
      %v2059 = vunpack.c.h.b16 %v1867
      %v2060 = vunpack.c.l.b16 %v1868
      %v2061 = vunpack.c.h.b16 %v1868
      %v2062 = vunpack.c.l.b16 %v1869
      %v2063 = vunpack.c.h.b16 %v1869
      %v2064 = vunpack.c.l.b16 %v1870
      %v2065 = vunpack.c.h.b16 %v1870
      %v2066 = vunpack.c.l.b16 %v1871
      %v2067 = vunpack.c.h.b16 %v1871
      %v2068 = vunpack.c.l.b16 %v1872
      %v2069 = vunpack.c.h.b16 %v1872
      %v2070 = vunpack.c.l.b16 %v1873
      %v2071 = vunpack.c.h.b16 %v1873
      %v2072 = vunpack.c.l.b16 %v1874
      %v2073 = vunpack.c.h.b16 %v1874
      %v2074 = vunpack.c.l.b16 %v1875
      %v2075 = vunpack.c.h.b16 %v1875
      %v2076 = vunpack.c.l.b16 %v1876
      %v2077 = vunpack.c.h.b16 %v1876
      %v2078 = vunpack.c.l.b16 %v1877
      %v2079 = vunpack.c.h.b16 %v1877
      %v2080 = vunpack.c.l.b16 %v1878
      %v2081 = vunpack.c.h.b16 %v1878
      %v2082 = vunpack.c.l.b16 %v1879
      %v2083 = vunpack.c.h.b16 %v1879
      %v2084 = vunpack.c.l.b16 %v1880
      %v2085 = vunpack.c.h.b16 %v1880
      %v2086 = vunpack.c.l.b16 %v1881
      %v2087 = vunpack.c.h.b16 %v1881
      %v2088 = vunpack.c.l.b16 %v1882
      %v2089 = vunpack.c.h.b16 %v1882
      %v2090 = vunpack.c.l.b16 %v1883
      %v2091 = vunpack.c.h.b16 %v1883
      %v2092 = vunpack.c.l.b16 %v1884
      %v2093 = vunpack.c.h.b16 %v1884
      %v2094 = vunpack.c.l.b16 %v1885
      %v2095 = vunpack.c.h.b16 %v1885
      %v2096 = vunpack.c.l.b16 %v1886
      %v2097 = vunpack.c.h.b16 %v1886
      %v2098 = vunpack.c.l.b16 %v1887
      %v2099 = vunpack.c.h.b16 %v1887
      %v2100 = vunpack.c.l.b16 %v1888
      %v2101 = vunpack.c.h.b16 %v1888
      %v2102 = vpack.c.b16 %v2040, %v2038
      %v2103 = vpack.c.b16 %v2041, %v2039
      %v2104 = vpack.c.b16 %v2044, %v2042
      %v2105 = vpack.c.b16 %v2045, %v2043
      %v2106 = vpack.c.b16 %v2048, %v2046
      %v2107 = vpack.c.b16 %v2049, %v2047
      %v2108 = vpack.c.b16 %v2052, %v2050
      %v2109 = vpack.c.b16 %v2053, %v2051
      %v2110 = vpack.c.b16 %v2056, %v2054
      %v2111 = vpack.c.b16 %v2057, %v2055
      %v2112 = vpack.c.b16 %v2060, %v2058
      %v2113 = vpack.c.b16 %v2061, %v2059
      %v2114 = vpack.c.b16 %v2064, %v2062
      %v2115 = vpack.c.b16 %v2065, %v2063
      %v2116 = vpack.c.b16 %v2068, %v2066
      %v2117 = vpack.c.b16 %v2069, %v2067
      %v2118 = vpack.c.b16 %v2072, %v2070
      %v2119 = vpack.c.b16 %v2073, %v2071
      %v2120 = vpack.c.b16 %v2076, %v2074
      %v2121 = vpack.c.b16 %v2077, %v2075
      %v2122 = vpack.c.b16 %v2080, %v2078
      %v2123 = vpack.c.b16 %v2081, %v2079
      %v2124 = vpack.c.b16 %v2084, %v2082
      %v2125 = vpack.c.b16 %v2085, %v2083
      %v2126 = vpack.c.b16 %v2088, %v2086
      %v2127 = vpack.c.b16 %v2089, %v2087
      %v2128 = vpack.c.b16 %v2092, %v2090
      %v2129 = vpack.c.b16 %v2093, %v2091
      %v2130 = vpack.c.b16 %v2096, %v2094
      %v2131 = vpack.c.b16 %v2097, %v2095
      %v2132 = vpack.c.b16 %v2100, %v2098
      %v2133 = vpack.c.b16 %v2101, %v2099
      %2166 = vmatpush.bf16.msra.mxu0 %v2116
      %2167 = vmatpush.bf16.msra.mxu0 %v2114
      %2168 = vmatpush.bf16.msra.mxu0 %v2112
      %2169 = vmatpush.bf16.msra.mxu0 %v2110
      %2170 = vmatpush.bf16.msra.mxu0 %v2108
      %2171 = vmatpush.bf16.msra.mxu0 %v2106
      %2172 = vmatpush.bf16.msra.mxu0 %v2104
      %2173 = vmatpush.bf16.msra.mxu0 %v2102
      %2174 = vmatmul.bf16.gmra.mxu0 %v1906
      %v2175 = vpop.f32.mrf.mxu0
      %v2176 = vadd.f32 0.0, %v2175
      %v2177 = vpop.f32.mrf.mxu0
      %v2178 = vadd.f32 0.0, %v2177
      %2179 = vmatmul.bf16.gmra.mxu0 %v1932
      %v2180 = vpop.f32.mrf.mxu0
      %v2181 = vadd.f32 0.0, %v2180
      %v2182 = vpop.f32.mrf.mxu0
      %v2183 = vadd.f32 0.0, %v2182
      %2184 = vmatmul.bf16.gmra.mxu0 %v1950
      %v2185 = vpop.f32.mrf.mxu0
      %v2186 = vadd.f32 0.0, %v2185
      %v2187 = vpop.f32.mrf.mxu0
      %v2188 = vadd.f32 0.0, %v2187
      %2189 = vmatmul.bf16.gmra.mxu0 %v1968
      %v2190 = vpop.f32.mrf.mxu0
      %v2191 = vadd.f32 0.0, %v2190
      %v2192 = vpop.f32.mrf.mxu0
      %v2193 = vadd.f32 0.0, %v2192
      %2194 = vmatmul.bf16.gmra.mxu0 %v1986
      %v2195 = vpop.f32.mrf.mxu0
      %v2196 = vadd.f32 0.0, %v2195
      %v2197 = vpop.f32.mrf.mxu0
      %v2198 = vadd.f32 0.0, %v2197
      %2199 = vdwg.mxu0
      %2200 = vmatpush.bf16.msra.mxu0 %v2132
      %2201 = vmatpush.bf16.msra.mxu0 %v2130
      %2202 = vmatpush.bf16.msra.mxu0 %v2128
      %2203 = vmatpush.bf16.msra.mxu0 %v2126
      %2204 = vmatpush.bf16.msra.mxu0 %v2124
      %2205 = vmatpush.bf16.msra.mxu0 %v2122
      %2206 = vmatpush.bf16.msra.mxu0 %v2120
      %2207 = vmatpush.bf16.msra.mxu0 %v2118
      %2208 = vmatmul.bf16.gmra.mxu0 %v1923
      %v2209 = vpop.f32.mrf.mxu0
      %v2210 = vadd.f32 %v2176, %v2209
      %v2211 = vpop.f32.mrf.mxu0
      %v2212 = vadd.f32 %v2178, %v2211
      %2213 = vmatmul.bf16.gmra.mxu0 %v1941
      %v2214 = vpop.f32.mrf.mxu0
      %v2215 = vadd.f32 %v2181, %v2214
      %v2216 = vpop.f32.mrf.mxu0
      %v2217 = vadd.f32 %v2183, %v2216
      %2218 = vmatmul.bf16.gmra.mxu0 %v1959
      %v2219 = vpop.f32.mrf.mxu0
      %v2220 = vadd.f32 %v2186, %v2219
      %v2221 = vpop.f32.mrf.mxu0
      %v2222 = vadd.f32 %v2188, %v2221
      %2223 = vmatmul.bf16.gmra.mxu0 %v1977
      %v2224 = vpop.f32.mrf.mxu0
      %v2225 = vadd.f32 %v2191, %v2224
      %v2226 = vpop.f32.mrf.mxu0
      %v2227 = vadd.f32 %v2193, %v2226
      %2228 = vmatmul.bf16.gmra.mxu0 %v1995
      %v2229 = vpop.f32.mrf.mxu0
      %v2230 = vadd.f32 %v2196, %v2229
      %v2231 = vpop.f32.mrf.mxu0
      %v2232 = vadd.f32 %v2198, %v2231
      %2233 = vdwg.mxu0
      %2234 = vmatpush.bf16.msra.mxu0 %v2117
      %2235 = vmatpush.bf16.msra.mxu0 %v2115
      %2236 = vmatpush.bf16.msra.mxu0 %v2113
      %2237 = vmatpush.bf16.msra.mxu0 %v2111
      %2238 = vmatpush.bf16.msra.mxu0 %v2109
      %2239 = vmatpush.bf16.msra.mxu0 %v2107
      %2240 = vmatpush.bf16.msra.mxu0 %v2105
      %2241 = vmatpush.bf16.msra.mxu0 %v2103
      %2242 = vmatmul.bf16.gmra.mxu0 %v1906
      %v2243 = vpop.f32.mrf.mxu0
      %v2244 = vadd.f32 0.0, %v2243
      %v2245 = vpop.f32.mrf.mxu0
      %v2246 = vadd.f32 0.0, %v2245
      %2247 = vmatmul.bf16.gmra.mxu0 %v1932
      %v2248 = vpop.f32.mrf.mxu0
      %v2249 = vadd.f32 0.0, %v2248
      %v2250 = vpop.f32.mrf.mxu0
      %v2251 = vadd.f32 0.0, %v2250
      %2252 = vmatmul.bf16.gmra.mxu0 %v1950
      %v2253 = vpop.f32.mrf.mxu0
      %v2254 = vadd.f32 0.0, %v2253
      %v2255 = vpop.f32.mrf.mxu0
      %v2256 = vadd.f32 0.0, %v2255
      %2257 = vmatmul.bf16.gmra.mxu0 %v1968
      %v2258 = vpop.f32.mrf.mxu0
      %v2259 = vadd.f32 0.0, %v2258
      %v2260 = vpop.f32.mrf.mxu0
      %v2261 = vadd.f32 0.0, %v2260
      %2262 = vmatmul.bf16.gmra.mxu0 %v1986
      %v2263 = vpop.f32.mrf.mxu0
      %v2264 = vadd.f32 0.0, %v2263
      %v2265 = vpop.f32.mrf.mxu0
      %v2266 = vadd.f32 0.0, %v2265
      %2267 = vdwg.mxu0
      %2268 = vmatpush.bf16.msra.mxu0 %v2133
      %2269 = vmatpush.bf16.msra.mxu0 %v2131
      %2270 = vmatpush.bf16.msra.mxu0 %v2129
      %2271 = vmatpush.bf16.msra.mxu0 %v2127
      %2272 = vmatpush.bf16.msra.mxu0 %v2125
      %2273 = vmatpush.bf16.msra.mxu0 %v2123
      %2274 = vmatpush.bf16.msra.mxu0 %v2121
      %2275 = vmatpush.bf16.msra.mxu0 %v2119
      %2276 = vmatmul.bf16.gmra.mxu0 %v1923
      %v2277 = vpop.f32.mrf.mxu0
      %v2278 = vadd.f32 %v2244, %v2277
      %v2279 = vpop.f32.mrf.mxu0
      %v2280 = vadd.f32 %v2246, %v2279
      %2281 = vmatmul.bf16.gmra.mxu0 %v1941
      %v2282 = vpop.f32.mrf.mxu0
      %v2283 = vadd.f32 %v2249, %v2282
      %v2284 = vpop.f32.mrf.mxu0
      %v2285 = vadd.f32 %v2251, %v2284
      %2286 = vmatmul.bf16.gmra.mxu0 %v1959
      %v2287 = vpop.f32.mrf.mxu0
      %v2288 = vadd.f32 %v2254, %v2287
      %v2289 = vpop.f32.mrf.mxu0
      %v2290 = vadd.f32 %v2256, %v2289
      %2291 = vmatmul.bf16.gmra.mxu0 %v1977
      %v2292 = vpop.f32.mrf.mxu0
      %v2293 = vadd.f32 %v2259, %v2292
      %v2294 = vpop.f32.mrf.mxu0
      %v2295 = vadd.f32 %v2261, %v2294
      %2296 = vmatmul.bf16.gmra.mxu0 %v1995
      %v2297 = vpop.f32.mrf.mxu0
      %v2298 = vadd.f32 %v2264, %v2297
      %v2299 = vpop.f32.mrf.mxu0
      %v2300 = vadd.f32 %v2266, %v2299
      %2301 = vdwg.mxu0
      %v2302 = vadd.f32 %v1828, %v2210
      %v2303 = vadd.f32 %v1829, %v2278
      %v2304 = vadd.f32 %v1830, %v2212
      %v2305 = vadd.f32 %v1831, %v2280
      %v2306 = vadd.f32 %v1832, %v2215
      %v2307 = vadd.f32 %v1833, %v2283
      %v2308 = vadd.f32 %v1834, %v2217
      %v2309 = vadd.f32 %v1835, %v2285
      %v2310 = vadd.f32 %v1836, %v2220
      %v2311 = vadd.f32 %v1837, %v2288
      %v2312 = vadd.f32 %v1838, %v2222
      %v2313 = vadd.f32 %v1839, %v2290
      %v2314 = vadd.f32 %v1840, %v2225
      %v2315 = vadd.f32 %v1841, %v2293
      %v2316 = vadd.f32 %v1842, %v2227
      %v2317 = vadd.f32 %v1843, %v2295
      %v2318 = vadd.f32 %v1844, %v2230
      %v2319 = vadd.f32 %v1845, %v2298
      %v2320 = vadd.f32 %v1846, %v2232
      %v2321 = vadd.f32 %v1847, %v2300
      %v2322 = vld [vmem:[%s219 + $0x10] sm:$0xf0]
      %v2323 = vld [vmem:[%s219 + $0x18] sm:$0xf0]
      %v2324 = vld [vmem:[%s219 + $0xb0] sm:$0xf]
      %v2325 = vld [vmem:[%s219 + $0xb8] sm:$0xf]
      %v2326 = vpack.c.bf16 %v1423, %v2322
      %v2327 = vpack.c.bf16 %v1424, %v2323
      %v2328 = vpack.c.bf16 %v2324, %v2324
      %v2329 = vpack.c.bf16 %v2325, %v2325
      %s2330 = scalar_lea.vmem %s1, 1280
      %v2331 = vld [vmem:[%s2330] sm:$0xff]
      %v2332 = vld [vmem:[%s2330 + $0x8] sm:$0xff]
      %v2333 = vld [vmem:[%s2330 + $0x10] sm:$0xff]
      %v2334 = vld [vmem:[%s2330 + $0x18] sm:$0xff]
      %v2335 = vld [vmem:[%s2330 + $0x20] sm:$0xff]
      %v2336 = vld [vmem:[%s2330 + $0x28] sm:$0xff]
      %v2337 = vld [vmem:[%s2330 + $0x30] sm:$0xff]
      %v2338 = vld [vmem:[%s2330 + $0x38] sm:$0xff]
      %v2339 = vld [vmem:[%s2330 + $0x40] sm:$0xff]
      %v2340 = vld [vmem:[%s2330 + $0x48] sm:$0xff]
      %v2341 = vld [vmem:[%s2330 + $0x50] sm:$0xff]
      %v2342 = vld [vmem:[%s2330 + $0x58] sm:$0xff]
      %v2343 = vld [vmem:[%s2330 + $0x60] sm:$0xff]
      %v2344 = vld [vmem:[%s2330 + $0x68] sm:$0xff]
      %v2345 = vld [vmem:[%s2330 + $0x70] sm:$0xff]
      %v2346 = vld [vmem:[%s2330 + $0x78] sm:$0xff]
      %v2347 = vld [vmem:[%s2330 + $0x80] sm:$0xff]
      %v2348 = vld [vmem:[%s2330 + $0x88] sm:$0xff]
      %v2349 = vld [vmem:[%s2330 + $0x90] sm:$0xff]
      %v2350 = vld [vmem:[%s2330 + $0x98] sm:$0xff]
      %v2351 = vld [vmem:[%s2330 + $0xa0] sm:$0xff]
      %v2352 = vld [vmem:[%s2330 + $0xa8] sm:$0xff]
      %v2353 = vld [vmem:[%s2330 + $0xb0] sm:$0xff]
      %v2354 = vld [vmem:[%s2330 + $0xb8] sm:$0xff]
      %v2355 = vld [vmem:[%s2330 + $0xc0] sm:$0xff]
      %v2356 = vld [vmem:[%s2330 + $0xc8] sm:$0xff]
      %v2357 = vld [vmem:[%s2330 + $0xd0] sm:$0xff]
      %v2358 = vld [vmem:[%s2330 + $0xd8] sm:$0xff]
      %v2359 = vld [vmem:[%s2330 + $0xe0] sm:$0xff]
      %v2360 = vld [vmem:[%s2330 + $0xe8] sm:$0xff]
      %v2361 = vld [vmem:[%s2330 + $0xf0] sm:$0xff]
      %v2362 = vld [vmem:[%s2330 + $0xf8] sm:$0xff]
      %vm2367 = vcmask 1045504
      %v2368 = vrot.slane %v2326, 2
      %v2369 = vrot.slane %v1445, 2
      %v2370 = vsel %vm2367, %v2368, %v2369
      %v2371 = vrot.slane %v2327, 2
      %v2372 = vrot.slane %v1446, 2
      %v2373 = vsel %vm2367, %v2371, %v2372
      %v2374 = vrot.slane %v1447, 2
      %v2375 = vsel %vm2367, %v2369, %v2374
      %v2376 = vrot.slane %v1448, 2
      %v2377 = vsel %vm2367, %v2372, %v2376
      %v2378 = vrot.slane %v1449, 2
      %v2379 = vsel %vm2367, %v2374, %v2378
      %v2380 = vrot.slane %v1450, 2
      %v2381 = vsel %vm2367, %v2376, %v2380
      %v2382 = vrot.slane %v1451, 2
      %v2383 = vsel %vm2367, %v2378, %v2382
      %v2384 = vrot.slane %v1452, 2
      %v2385 = vsel %vm2367, %v2380, %v2384
      %v2386 = vrot.slane %v2328, 2
      %v2387 = vsel %vm2367, %v2382, %v2386
      %v2388 = vrot.slane %v2329, 2
      %v2389 = vsel %vm2367, %v2384, %v2388
      %v2432 = vunpack.c.l.b16 %v2331
      %v2433 = vunpack.c.h.b16 %v2331
      %v2434 = vunpack.c.l.b16 %v2332
      %v2435 = vunpack.c.h.b16 %v2332
      %v2436 = vunpack.c.l.b16 %v2333
      %v2437 = vunpack.c.h.b16 %v2333
      %v2438 = vunpack.c.l.b16 %v2334
      %v2439 = vunpack.c.h.b16 %v2334
      %v2440 = vunpack.c.l.b16 %v2335
      %v2441 = vunpack.c.h.b16 %v2335
      %v2442 = vunpack.c.l.b16 %v2336
      %v2443 = vunpack.c.h.b16 %v2336
      %v2444 = vunpack.c.l.b16 %v2337
      %v2445 = vunpack.c.h.b16 %v2337
      %v2446 = vunpack.c.l.b16 %v2338
      %v2447 = vunpack.c.h.b16 %v2338
      %v2448 = vunpack.c.l.b16 %v2339
      %v2449 = vunpack.c.h.b16 %v2339
      %v2450 = vunpack.c.l.b16 %v2340
      %v2451 = vunpack.c.h.b16 %v2340
      %v2452 = vunpack.c.l.b16 %v2341
      %v2453 = vunpack.c.h.b16 %v2341
      %v2454 = vunpack.c.l.b16 %v2342
      %v2455 = vunpack.c.h.b16 %v2342
      %v2456 = vunpack.c.l.b16 %v2343
      %v2457 = vunpack.c.h.b16 %v2343
      %v2458 = vunpack.c.l.b16 %v2344
      %v2459 = vunpack.c.h.b16 %v2344
      %v2460 = vunpack.c.l.b16 %v2345
      %v2461 = vunpack.c.h.b16 %v2345
      %v2462 = vunpack.c.l.b16 %v2346
      %v2463 = vunpack.c.h.b16 %v2346
      %v2464 = vunpack.c.l.b16 %v2347
      %v2465 = vunpack.c.h.b16 %v2347
      %v2466 = vunpack.c.l.b16 %v2348
      %v2467 = vunpack.c.h.b16 %v2348
      %v2468 = vunpack.c.l.b16 %v2349
      %v2469 = vunpack.c.h.b16 %v2349
      %v2470 = vunpack.c.l.b16 %v2350
      %v2471 = vunpack.c.h.b16 %v2350
      %v2472 = vunpack.c.l.b16 %v2351
      %v2473 = vunpack.c.h.b16 %v2351
      %v2474 = vunpack.c.l.b16 %v2352
      %v2475 = vunpack.c.h.b16 %v2352
      %v2476 = vunpack.c.l.b16 %v2353
      %v2477 = vunpack.c.h.b16 %v2353
      %v2478 = vunpack.c.l.b16 %v2354
      %v2479 = vunpack.c.h.b16 %v2354
      %v2480 = vunpack.c.l.b16 %v2355
      %v2481 = vunpack.c.h.b16 %v2355
      %v2482 = vunpack.c.l.b16 %v2356
      %v2483 = vunpack.c.h.b16 %v2356
      %v2484 = vunpack.c.l.b16 %v2357
      %v2485 = vunpack.c.h.b16 %v2357
      %v2486 = vunpack.c.l.b16 %v2358
      %v2487 = vunpack.c.h.b16 %v2358
      %v2488 = vunpack.c.l.b16 %v2359
      %v2489 = vunpack.c.h.b16 %v2359
      %v2490 = vunpack.c.l.b16 %v2360
      %v2491 = vunpack.c.h.b16 %v2360
      %v2492 = vunpack.c.l.b16 %v2361
      %v2493 = vunpack.c.h.b16 %v2361
      %v2494 = vunpack.c.l.b16 %v2362
      %v2495 = vunpack.c.h.b16 %v2362
      %v2496 = vpack.c.b16 %v2434, %v2432
      %v2497 = vpack.c.b16 %v2435, %v2433
      %v2498 = vpack.c.b16 %v2438, %v2436
      %v2499 = vpack.c.b16 %v2439, %v2437
      %v2500 = vpack.c.b16 %v2442, %v2440
      %v2501 = vpack.c.b16 %v2443, %v2441
      %v2502 = vpack.c.b16 %v2446, %v2444
      %v2503 = vpack.c.b16 %v2447, %v2445
      %v2504 = vpack.c.b16 %v2450, %v2448
      %v2505 = vpack.c.b16 %v2451, %v2449
      %v2506 = vpack.c.b16 %v2454, %v2452
      %v2507 = vpack.c.b16 %v2455, %v2453
      %v2508 = vpack.c.b16 %v2458, %v2456
      %v2509 = vpack.c.b16 %v2459, %v2457
      %v2510 = vpack.c.b16 %v2462, %v2460
      %v2511 = vpack.c.b16 %v2463, %v2461
      %v2512 = vpack.c.b16 %v2466, %v2464
      %v2513 = vpack.c.b16 %v2467, %v2465
      %v2514 = vpack.c.b16 %v2470, %v2468
      %v2515 = vpack.c.b16 %v2471, %v2469
      %v2516 = vpack.c.b16 %v2474, %v2472
      %v2517 = vpack.c.b16 %v2475, %v2473
      %v2518 = vpack.c.b16 %v2478, %v2476
      %v2519 = vpack.c.b16 %v2479, %v2477
      %v2520 = vpack.c.b16 %v2482, %v2480
      %v2521 = vpack.c.b16 %v2483, %v2481
      %v2522 = vpack.c.b16 %v2486, %v2484
      %v2523 = vpack.c.b16 %v2487, %v2485
      %v2524 = vpack.c.b16 %v2490, %v2488
      %v2525 = vpack.c.b16 %v2491, %v2489
      %v2526 = vpack.c.b16 %v2494, %v2492
      %v2527 = vpack.c.b16 %v2495, %v2493
      %2560 = vmatpush.bf16.msra.mxu0 %v2510
      %2561 = vmatpush.bf16.msra.mxu0 %v2508
      %2562 = vmatpush.bf16.msra.mxu0 %v2506
      %2563 = vmatpush.bf16.msra.mxu0 %v2504
      %2564 = vmatpush.bf16.msra.mxu0 %v2502
      %2565 = vmatpush.bf16.msra.mxu0 %v2500
      %2566 = vmatpush.bf16.msra.mxu0 %v2498
      %2567 = vmatpush.bf16.msra.mxu0 %v2496
      %2568 = vmatmul.bf16.gmra.mxu0 %v2370
      %v2569 = vpop.f32.mrf.mxu0
      %v2570 = vadd.f32 0.0, %v2569
      %v2571 = vpop.f32.mrf.mxu0
      %v2572 = vadd.f32 0.0, %v2571
      %2573 = vmatmul.bf16.gmra.mxu0 %v2375
      %v2574 = vpop.f32.mrf.mxu0
      %v2575 = vadd.f32 0.0, %v2574
      %v2576 = vpop.f32.mrf.mxu0
      %v2577 = vadd.f32 0.0, %v2576
      %2578 = vmatmul.bf16.gmra.mxu0 %v2379
      %v2579 = vpop.f32.mrf.mxu0
      %v2580 = vadd.f32 0.0, %v2579
      %v2581 = vpop.f32.mrf.mxu0
      %v2582 = vadd.f32 0.0, %v2581
      %2583 = vmatmul.bf16.gmra.mxu0 %v2383
      %v2584 = vpop.f32.mrf.mxu0
      %v2585 = vadd.f32 0.0, %v2584
      %v2586 = vpop.f32.mrf.mxu0
      %v2587 = vadd.f32 0.0, %v2586
      %2588 = vmatmul.bf16.gmra.mxu0 %v2387
      %v2589 = vpop.f32.mrf.mxu0
      %v2590 = vadd.f32 0.0, %v2589
      %v2591 = vpop.f32.mrf.mxu0
      %v2592 = vadd.f32 0.0, %v2591
      %2593 = vdwg.mxu0
      %2594 = vmatpush.bf16.msra.mxu0 %v2526
      %2595 = vmatpush.bf16.msra.mxu0 %v2524
      %2596 = vmatpush.bf16.msra.mxu0 %v2522
      %2597 = vmatpush.bf16.msra.mxu0 %v2520
      %2598 = vmatpush.bf16.msra.mxu0 %v2518
      %2599 = vmatpush.bf16.msra.mxu0 %v2516
      %2600 = vmatpush.bf16.msra.mxu0 %v2514
      %2601 = vmatpush.bf16.msra.mxu0 %v2512
      %2602 = vmatmul.bf16.gmra.mxu0 %v2373
      %v2603 = vpop.f32.mrf.mxu0
      %v2604 = vadd.f32 %v2570, %v2603
      %v2605 = vpop.f32.mrf.mxu0
      %v2606 = vadd.f32 %v2572, %v2605
      %2607 = vmatmul.bf16.gmra.mxu0 %v2377
      %v2608 = vpop.f32.mrf.mxu0
      %v2609 = vadd.f32 %v2575, %v2608
      %v2610 = vpop.f32.mrf.mxu0
      %v2611 = vadd.f32 %v2577, %v2610
      %2612 = vmatmul.bf16.gmra.mxu0 %v2381
      %v2613 = vpop.f32.mrf.mxu0
      %v2614 = vadd.f32 %v2580, %v2613
      %v2615 = vpop.f32.mrf.mxu0
      %v2616 = vadd.f32 %v2582, %v2615
      %2617 = vmatmul.bf16.gmra.mxu0 %v2385
      %v2618 = vpop.f32.mrf.mxu0
      %v2619 = vadd.f32 %v2585, %v2618
      %v2620 = vpop.f32.mrf.mxu0
      %v2621 = vadd.f32 %v2587, %v2620
      %2622 = vmatmul.bf16.gmra.mxu0 %v2389
      %v2623 = vpop.f32.mrf.mxu0
      %v2624 = vadd.f32 %v2590, %v2623
      %v2625 = vpop.f32.mrf.mxu0
      %v2626 = vadd.f32 %v2592, %v2625
      %2627 = vdwg.mxu0
      %2628 = vmatpush.bf16.msra.mxu0 %v2511
      %2629 = vmatpush.bf16.msra.mxu0 %v2509
      %2630 = vmatpush.bf16.msra.mxu0 %v2507
      %2631 = vmatpush.bf16.msra.mxu0 %v2505
      %2632 = vmatpush.bf16.msra.mxu0 %v2503
      %2633 = vmatpush.bf16.msra.mxu0 %v2501
      %2634 = vmatpush.bf16.msra.mxu0 %v2499
      %2635 = vmatpush.bf16.msra.mxu0 %v2497
      %2636 = vmatmul.bf16.gmra.mxu0 %v2370
      %v2637 = vpop.f32.mrf.mxu0
      %v2638 = vadd.f32 0.0, %v2637
      %v2639 = vpop.f32.mrf.mxu0
      %v2640 = vadd.f32 0.0, %v2639
      %2641 = vmatmul.bf16.gmra.mxu0 %v2375
      %v2642 = vpop.f32.mrf.mxu0
      %v2643 = vadd.f32 0.0, %v2642
      %v2644 = vpop.f32.mrf.mxu0
      %v2645 = vadd.f32 0.0, %v2644
      %2646 = vmatmul.bf16.gmra.mxu0 %v2379
      %v2647 = vpop.f32.mrf.mxu0
      %v2648 = vadd.f32 0.0, %v2647
      %v2649 = vpop.f32.mrf.mxu0
      %v2650 = vadd.f32 0.0, %v2649
      %2651 = vmatmul.bf16.gmra.mxu0 %v2383
      %v2652 = vpop.f32.mrf.mxu0
      %v2653 = vadd.f32 0.0, %v2652
      %v2654 = vpop.f32.mrf.mxu0
      %v2655 = vadd.f32 0.0, %v2654
      %2656 = vmatmul.bf16.gmra.mxu0 %v2387
      %v2657 = vpop.f32.mrf.mxu0
      %v2658 = vadd.f32 0.0, %v2657
      %v2659 = vpop.f32.mrf.mxu0
      %v2660 = vadd.f32 0.0, %v2659
      %2661 = vdwg.mxu0
      %2662 = vmatpush.bf16.msra.mxu0 %v2527
      %2663 = vmatpush.bf16.msra.mxu0 %v2525
      %2664 = vmatpush.bf16.msra.mxu0 %v2523
      %2665 = vmatpush.bf16.msra.mxu0 %v2521
      %2666 = vmatpush.bf16.msra.mxu0 %v2519
      %2667 = vmatpush.bf16.msra.mxu0 %v2517
      %2668 = vmatpush.bf16.msra.mxu0 %v2515
      %2669 = vmatpush.bf16.msra.mxu0 %v2513
      %2670 = vmatmul.bf16.gmra.mxu0 %v2373
      %v2671 = vpop.f32.mrf.mxu0
      %v2672 = vadd.f32 %v2638, %v2671
      %v2673 = vpop.f32.mrf.mxu0
      %v2674 = vadd.f32 %v2640, %v2673
      %2675 = vmatmul.bf16.gmra.mxu0 %v2377
      %v2676 = vpop.f32.mrf.mxu0
      %v2677 = vadd.f32 %v2643, %v2676
      %v2678 = vpop.f32.mrf.mxu0
      %v2679 = vadd.f32 %v2645, %v2678
      %2680 = vmatmul.bf16.gmra.mxu0 %v2381
      %v2681 = vpop.f32.mrf.mxu0
      %v2682 = vadd.f32 %v2648, %v2681
      %v2683 = vpop.f32.mrf.mxu0
      %v2684 = vadd.f32 %v2650, %v2683
      %2685 = vmatmul.bf16.gmra.mxu0 %v2385
      %v2686 = vpop.f32.mrf.mxu0
      %v2687 = vadd.f32 %v2653, %v2686
      %v2688 = vpop.f32.mrf.mxu0
      %v2689 = vadd.f32 %v2655, %v2688
      %2690 = vmatmul.bf16.gmra.mxu0 %v2389
      %v2691 = vpop.f32.mrf.mxu0
      %v2692 = vadd.f32 %v2658, %v2691
      %v2693 = vpop.f32.mrf.mxu0
      %v2694 = vadd.f32 %v2660, %v2693
      %2695 = vdwg.mxu0
      %v2696 = vadd.f32 %v2302, %v2604
      %v2697 = vadd.f32 %v2303, %v2672
      %v2698 = vadd.f32 %v2304, %v2606
      %v2699 = vadd.f32 %v2305, %v2674
      %v2700 = vadd.f32 %v2306, %v2609
      %v2701 = vadd.f32 %v2307, %v2677
      %v2702 = vadd.f32 %v2308, %v2611
      %v2703 = vadd.f32 %v2309, %v2679
      %v2704 = vadd.f32 %v2310, %v2614
      %v2705 = vadd.f32 %v2311, %v2682
      %v2706 = vadd.f32 %v2312, %v2616
      %v2707 = vadd.f32 %v2313, %v2684
      %v2708 = vadd.f32 %v2314, %v2619
      %v2709 = vadd.f32 %v2315, %v2687
      %v2710 = vadd.f32 %v2316, %v2621
      %v2711 = vadd.f32 %v2317, %v2689
      %v2712 = vadd.f32 %v2318, %v2624
      %v2713 = vadd.f32 %v2319, %v2692
      %v2714 = vadd.f32 %v2320, %v2626
      %v2715 = vadd.f32 %v2321, %v2694
      %v2716 = vld [vmem:[%s219 + $0x20] sm:$0xf0]
      %v2717 = vld [vmem:[%s219 + $0x28] sm:$0xf0]
      %v2718 = vld [vmem:[%s219 + $0x30] sm:$0xff]
      %v2719 = vld [vmem:[%s219 + $0x38] sm:$0xff]
      %v2720 = vld [vmem:[%s219 + $0x40] sm:$0xff]
      %v2721 = vld [vmem:[%s219 + $0x48] sm:$0xff]
      %v2722 = vld [vmem:[%s219 + $0x50] sm:$0xff]
      %v2723 = vld [vmem:[%s219 + $0x58] sm:$0xff]
      %v2724 = vld [vmem:[%s219 + $0x60] sm:$0xff]
      %v2725 = vld [vmem:[%s219 + $0x68] sm:$0xff]
      %v2726 = vld [vmem:[%s219 + $0x70] sm:$0xff]
      %v2727 = vld [vmem:[%s219 + $0x78] sm:$0xff]
      %v2728 = vld [vmem:[%s219 + $0x80] sm:$0xff]
      %v2729 = vld [vmem:[%s219 + $0x88] sm:$0xff]
      %v2730 = vld [vmem:[%s219 + $0x90] sm:$0xff]
      %v2731 = vld [vmem:[%s219 + $0x98] sm:$0xff]
      %v2732 = vld [vmem:[%s219 + $0xa0] sm:$0xff]
      %v2733 = vld [vmem:[%s219 + $0xa8] sm:$0xff]
      %v2734 = vld [vmem:[%s219 + $0xb0] sm:$0xff]
      %v2735 = vld [vmem:[%s219 + $0xb8] sm:$0xff]
      %v2736 = vld [vmem:[%s219 + $0xc0] sm:$0xf]
      %v2737 = vld [vmem:[%s219 + $0xc8] sm:$0xf]
      %v2738 = vpack.c.bf16 %v2718, %v2716
      %v2739 = vpack.c.bf16 %v2719, %v2717
      %v2740 = vpack.c.bf16 %v2722, %v2720
      %v2741 = vpack.c.bf16 %v2723, %v2721
      %v2742 = vpack.c.bf16 %v2726, %v2724
      %v2743 = vpack.c.bf16 %v2727, %v2725
      %v2744 = vpack.c.bf16 %v2730, %v2728
      %v2745 = vpack.c.bf16 %v2731, %v2729
      %v2746 = vpack.c.bf16 %v2734, %v2732
      %v2747 = vpack.c.bf16 %v2735, %v2733
      %v2748 = vpack.c.bf16 %v2736, %v2736
      %v2749 = vpack.c.bf16 %v2737, %v2737
      %s2750 = scalar_lea.vmem %s1, 1536
      %v2751 = vld [vmem:[%s2750] sm:$0xff]
      %v2752 = vld [vmem:[%s2750 + $0x8] sm:$0xff]
      %v2753 = vld [vmem:[%s2750 + $0x10] sm:$0xff]
      %v2754 = vld [vmem:[%s2750 + $0x18] sm:$0xff]
      %v2755 = vld [vmem:[%s2750 + $0x20] sm:$0xff]
      %v2756 = vld [vmem:[%s2750 + $0x28] sm:$0xff]
      %v2757 = vld [vmem:[%s2750 + $0x30] sm:$0xff]
      %v2758 = vld [vmem:[%s2750 + $0x38] sm:$0xff]
      %v2759 = vld [vmem:[%s2750 + $0x40] sm:$0xff]
      %v2760 = vld [vmem:[%s2750 + $0x48] sm:$0xff]
      %v2761 = vld [vmem:[%s2750 + $0x50] sm:$0xff]
      %v2762 = vld [vmem:[%s2750 + $0x58] sm:$0xff]
      %v2763 = vld [vmem:[%s2750 + $0x60] sm:$0xff]
      %v2764 = vld [vmem:[%s2750 + $0x68] sm:$0xff]
      %v2765 = vld [vmem:[%s2750 + $0x70] sm:$0xff]
      %v2766 = vld [vmem:[%s2750 + $0x78] sm:$0xff]
      %v2767 = vld [vmem:[%s2750 + $0x80] sm:$0xff]
      %v2768 = vld [vmem:[%s2750 + $0x88] sm:$0xff]
      %v2769 = vld [vmem:[%s2750 + $0x90] sm:$0xff]
      %v2770 = vld [vmem:[%s2750 + $0x98] sm:$0xff]
      %v2771 = vld [vmem:[%s2750 + $0xa0] sm:$0xff]
      %v2772 = vld [vmem:[%s2750 + $0xa8] sm:$0xff]
      %v2773 = vld [vmem:[%s2750 + $0xb0] sm:$0xff]
      %v2774 = vld [vmem:[%s2750 + $0xb8] sm:$0xff]
      %v2775 = vld [vmem:[%s2750 + $0xc0] sm:$0xff]
      %v2776 = vld [vmem:[%s2750 + $0xc8] sm:$0xff]
      %v2777 = vld [vmem:[%s2750 + $0xd0] sm:$0xff]
      %v2778 = vld [vmem:[%s2750 + $0xd8] sm:$0xff]
      %v2779 = vld [vmem:[%s2750 + $0xe0] sm:$0xff]
      %v2780 = vld [vmem:[%s2750 + $0xe8] sm:$0xff]
      %v2781 = vld [vmem:[%s2750 + $0xf0] sm:$0xff]
      %v2782 = vld [vmem:[%s2750 + $0xf8] sm:$0xff]
      %v2795 = vrot.slane %v2738, 2
      %v2796 = vrot.slane %v2740, 2
      %v2797 = vsel %vm2367, %v2795, %v2796
      %v2798 = vrot.slane %v2739, 2
      %v2799 = vrot.slane %v2741, 2
      %v2800 = vsel %vm2367, %v2798, %v2799
      %v2801 = vrot.slane %v2742, 2
      %v2802 = vsel %vm2367, %v2796, %v2801
      %v2803 = vrot.slane %v2743, 2
      %v2804 = vsel %vm2367, %v2799, %v2803
      %v2805 = vrot.slane %v2744, 2
      %v2806 = vsel %vm2367, %v2801, %v2805
      %v2807 = vrot.slane %v2745, 2
      %v2808 = vsel %vm2367, %v2803, %v2807
      %v2809 = vrot.slane %v2746, 2
      %v2810 = vsel %vm2367, %v2805, %v2809
      %v2811 = vrot.slane %v2747, 2
      %v2812 = vsel %vm2367, %v2807, %v2811
      %v2813 = vrot.slane %v2748, 2
      %v2814 = vsel %vm2367, %v2809, %v2813
      %v2815 = vrot.slane %v2749, 2
      %v2816 = vsel %vm2367, %v2811, %v2815
      %v2859 = vunpack.c.l.b16 %v2751
      %v2860 = vunpack.c.h.b16 %v2751
      %v2861 = vunpack.c.l.b16 %v2752
      %v2862 = vunpack.c.h.b16 %v2752
      %v2863 = vunpack.c.l.b16 %v2753
      %v2864 = vunpack.c.h.b16 %v2753
      %v2865 = vunpack.c.l.b16 %v2754
      %v2866 = vunpack.c.h.b16 %v2754
      %v2867 = vunpack.c.l.b16 %v2755
      %v2868 = vunpack.c.h.b16 %v2755
      %v2869 = vunpack.c.l.b16 %v2756
      %v2870 = vunpack.c.h.b16 %v2756
      %v2871 = vunpack.c.l.b16 %v2757
      %v2872 = vunpack.c.h.b16 %v2757
      %v2873 = vunpack.c.l.b16 %v2758
      %v2874 = vunpack.c.h.b16 %v2758
      %v2875 = vunpack.c.l.b16 %v2759
      %v2876 = vunpack.c.h.b16 %v2759
      %v2877 = vunpack.c.l.b16 %v2760
      %v2878 = vunpack.c.h.b16 %v2760
      %v2879 = vunpack.c.l.b16 %v2761
      %v2880 = vunpack.c.h.b16 %v2761
      %v2881 = vunpack.c.l.b16 %v2762
      %v2882 = vunpack.c.h.b16 %v2762
      %v2883 = vunpack.c.l.b16 %v2763
      %v2884 = vunpack.c.h.b16 %v2763
      %v2885 = vunpack.c.l.b16 %v2764
      %v2886 = vunpack.c.h.b16 %v2764
      %v2887 = vunpack.c.l.b16 %v2765
      %v2888 = vunpack.c.h.b16 %v2765
      %v2889 = vunpack.c.l.b16 %v2766
      %v2890 = vunpack.c.h.b16 %v2766
      %v2891 = vunpack.c.l.b16 %v2767
      %v2892 = vunpack.c.h.b16 %v2767
      %v2893 = vunpack.c.l.b16 %v2768
      %v2894 = vunpack.c.h.b16 %v2768
      %v2895 = vunpack.c.l.b16 %v2769
      %v2896 = vunpack.c.h.b16 %v2769
      %v2897 = vunpack.c.l.b16 %v2770
      %v2898 = vunpack.c.h.b16 %v2770
      %v2899 = vunpack.c.l.b16 %v2771
      %v2900 = vunpack.c.h.b16 %v2771
      %v2901 = vunpack.c.l.b16 %v2772
      %v2902 = vunpack.c.h.b16 %v2772
      %v2903 = vunpack.c.l.b16 %v2773
      %v2904 = vunpack.c.h.b16 %v2773
      %v2905 = vunpack.c.l.b16 %v2774
      %v2906 = vunpack.c.h.b16 %v2774
      %v2907 = vunpack.c.l.b16 %v2775
      %v2908 = vunpack.c.h.b16 %v2775
      %v2909 = vunpack.c.l.b16 %v2776
      %v2910 = vunpack.c.h.b16 %v2776
      %v2911 = vunpack.c.l.b16 %v2777
      %v2912 = vunpack.c.h.b16 %v2777
      %v2913 = vunpack.c.l.b16 %v2778
      %v2914 = vunpack.c.h.b16 %v2778
      %v2915 = vunpack.c.l.b16 %v2779
      %v2916 = vunpack.c.h.b16 %v2779
      %v2917 = vunpack.c.l.b16 %v2780
      %v2918 = vunpack.c.h.b16 %v2780
      %v2919 = vunpack.c.l.b16 %v2781
      %v2920 = vunpack.c.h.b16 %v2781
      %v2921 = vunpack.c.l.b16 %v2782
      %v2922 = vunpack.c.h.b16 %v2782
      %v2923 = vpack.c.b16 %v2861, %v2859
      %v2924 = vpack.c.b16 %v2862, %v2860
      %v2925 = vpack.c.b16 %v2865, %v2863
      %v2926 = vpack.c.b16 %v2866, %v2864
      %v2927 = vpack.c.b16 %v2869, %v2867
      %v2928 = vpack.c.b16 %v2870, %v2868
      %v2929 = vpack.c.b16 %v2873, %v2871
      %v2930 = vpack.c.b16 %v2874, %v2872
      %v2931 = vpack.c.b16 %v2877, %v2875
      %v2932 = vpack.c.b16 %v2878, %v2876
      %v2933 = vpack.c.b16 %v2881, %v2879
      %v2934 = vpack.c.b16 %v2882, %v2880
      %v2935 = vpack.c.b16 %v2885, %v2883
      %v2936 = vpack.c.b16 %v2886, %v2884
      %v2937 = vpack.c.b16 %v2889, %v2887
      %v2938 = vpack.c.b16 %v2890, %v2888
      %v2939 = vpack.c.b16 %v2893, %v2891
      %v2940 = vpack.c.b16 %v2894, %v2892
      %v2941 = vpack.c.b16 %v2897, %v2895
      %v2942 = vpack.c.b16 %v2898, %v2896
      %v2943 = vpack.c.b16 %v2901, %v2899
      %v2944 = vpack.c.b16 %v2902, %v2900
      %v2945 = vpack.c.b16 %v2905, %v2903
      %v2946 = vpack.c.b16 %v2906, %v2904
      %v2947 = vpack.c.b16 %v2909, %v2907
      %v2948 = vpack.c.b16 %v2910, %v2908
      %v2949 = vpack.c.b16 %v2913, %v2911
      %v2950 = vpack.c.b16 %v2914, %v2912
      %v2951 = vpack.c.b16 %v2917, %v2915
      %v2952 = vpack.c.b16 %v2918, %v2916
      %v2953 = vpack.c.b16 %v2921, %v2919
      %v2954 = vpack.c.b16 %v2922, %v2920
      %2987 = vmatpush.bf16.msra.mxu0 %v2937
      %2988 = vmatpush.bf16.msra.mxu0 %v2935
      %2989 = vmatpush.bf16.msra.mxu0 %v2933
      %2990 = vmatpush.bf16.msra.mxu0 %v2931
      %2991 = vmatpush.bf16.msra.mxu0 %v2929
      %2992 = vmatpush.bf16.msra.mxu0 %v2927
      %2993 = vmatpush.bf16.msra.mxu0 %v2925
      %2994 = vmatpush.bf16.msra.mxu0 %v2923
      %2995 = vmatmul.bf16.gmra.mxu0 %v2797
      %v2996 = vpop.f32.mrf.mxu0
      %v2997 = vadd.f32 0.0, %v2996
      %v2998 = vpop.f32.mrf.mxu0
      %v2999 = vadd.f32 0.0, %v2998
      %3000 = vmatmul.bf16.gmra.mxu0 %v2802
      %v3001 = vpop.f32.mrf.mxu0
      %v3002 = vadd.f32 0.0, %v3001
      %v3003 = vpop.f32.mrf.mxu0
      %v3004 = vadd.f32 0.0, %v3003
      %3005 = vmatmul.bf16.gmra.mxu0 %v2806
      %v3006 = vpop.f32.mrf.mxu0
      %v3007 = vadd.f32 0.0, %v3006
      %v3008 = vpop.f32.mrf.mxu0
      %v3009 = vadd.f32 0.0, %v3008
      %3010 = vmatmul.bf16.gmra.mxu0 %v2810
      %v3011 = vpop.f32.mrf.mxu0
      %v3012 = vadd.f32 0.0, %v3011
      %v3013 = vpop.f32.mrf.mxu0
      %v3014 = vadd.f32 0.0, %v3013
      %3015 = vmatmul.bf16.gmra.mxu0 %v2814
      %v3016 = vpop.f32.mrf.mxu0
      %v3017 = vadd.f32 0.0, %v3016
      %v3018 = vpop.f32.mrf.mxu0
      %v3019 = vadd.f32 0.0, %v3018
      %3020 = vdwg.mxu0
      %3021 = vmatpush.bf16.msra.mxu0 %v2953
      %3022 = vmatpush.bf16.msra.mxu0 %v2951
      %3023 = vmatpush.bf16.msra.mxu0 %v2949
      %3024 = vmatpush.bf16.msra.mxu0 %v2947
      %3025 = vmatpush.bf16.msra.mxu0 %v2945
      %3026 = vmatpush.bf16.msra.mxu0 %v2943
      %3027 = vmatpush.bf16.msra.mxu0 %v2941
      %3028 = vmatpush.bf16.msra.mxu0 %v2939
      %3029 = vmatmul.bf16.gmra.mxu0 %v2800
      %v3030 = vpop.f32.mrf.mxu0
      %v3031 = vadd.f32 %v2997, %v3030
      %v3032 = vpop.f32.mrf.mxu0
      %v3033 = vadd.f32 %v2999, %v3032
      %3034 = vmatmul.bf16.gmra.mxu0 %v2804
      %v3035 = vpop.f32.mrf.mxu0
      %v3036 = vadd.f32 %v3002, %v3035
      %v3037 = vpop.f32.mrf.mxu0
      %v3038 = vadd.f32 %v3004, %v3037
      %3039 = vmatmul.bf16.gmra.mxu0 %v2808
      %v3040 = vpop.f32.mrf.mxu0
      %v3041 = vadd.f32 %v3007, %v3040
      %v3042 = vpop.f32.mrf.mxu0
      %v3043 = vadd.f32 %v3009, %v3042
      %3044 = vmatmul.bf16.gmra.mxu0 %v2812
      %v3045 = vpop.f32.mrf.mxu0
      %v3046 = vadd.f32 %v3012, %v3045
      %v3047 = vpop.f32.mrf.mxu0
      %v3048 = vadd.f32 %v3014, %v3047
      %3049 = vmatmul.bf16.gmra.mxu0 %v2816
      %v3050 = vpop.f32.mrf.mxu0
      %v3051 = vadd.f32 %v3017, %v3050
      %v3052 = vpop.f32.mrf.mxu0
      %v3053 = vadd.f32 %v3019, %v3052
      %3054 = vdwg.mxu0
      %3055 = vmatpush.bf16.msra.mxu0 %v2938
      %3056 = vmatpush.bf16.msra.mxu0 %v2936
      %3057 = vmatpush.bf16.msra.mxu0 %v2934
      %3058 = vmatpush.bf16.msra.mxu0 %v2932
      %3059 = vmatpush.bf16.msra.mxu0 %v2930
      %3060 = vmatpush.bf16.msra.mxu0 %v2928
      %3061 = vmatpush.bf16.msra.mxu0 %v2926
      %3062 = vmatpush.bf16.msra.mxu0 %v2924
      %3063 = vmatmul.bf16.gmra.mxu0 %v2797
      %v3064 = vpop.f32.mrf.mxu0
      %v3065 = vadd.f32 0.0, %v3064
      %v3066 = vpop.f32.mrf.mxu0
      %v3067 = vadd.f32 0.0, %v3066
      %3068 = vmatmul.bf16.gmra.mxu0 %v2802
      %v3069 = vpop.f32.mrf.mxu0
      %v3070 = vadd.f32 0.0, %v3069
      %v3071 = vpop.f32.mrf.mxu0
      %v3072 = vadd.f32 0.0, %v3071
      %3073 = vmatmul.bf16.gmra.mxu0 %v2806
      %v3074 = vpop.f32.mrf.mxu0
      %v3075 = vadd.f32 0.0, %v3074
      %v3076 = vpop.f32.mrf.mxu0
      %v3077 = vadd.f32 0.0, %v3076
      %3078 = vmatmul.bf16.gmra.mxu0 %v2810
      %v3079 = vpop.f32.mrf.mxu0
      %v3080 = vadd.f32 0.0, %v3079
      %v3081 = vpop.f32.mrf.mxu0
      %v3082 = vadd.f32 0.0, %v3081
      %3083 = vmatmul.bf16.gmra.mxu0 %v2814
      %v3084 = vpop.f32.mrf.mxu0
      %v3085 = vadd.f32 0.0, %v3084
      %v3086 = vpop.f32.mrf.mxu0
      %v3087 = vadd.f32 0.0, %v3086
      %3088 = vdwg.mxu0
      %3089 = vmatpush.bf16.msra.mxu0 %v2954
      %3090 = vmatpush.bf16.msra.mxu0 %v2952
      %3091 = vmatpush.bf16.msra.mxu0 %v2950
      %3092 = vmatpush.bf16.msra.mxu0 %v2948
      %3093 = vmatpush.bf16.msra.mxu0 %v2946
      %3094 = vmatpush.bf16.msra.mxu0 %v2944
      %3095 = vmatpush.bf16.msra.mxu0 %v2942
      %3096 = vmatpush.bf16.msra.mxu0 %v2940
      %3097 = vmatmul.bf16.gmra.mxu0 %v2800
      %v3098 = vpop.f32.mrf.mxu0
      %v3099 = vadd.f32 %v3065, %v3098
      %v3100 = vpop.f32.mrf.mxu0
      %v3101 = vadd.f32 %v3067, %v3100
      %3102 = vmatmul.bf16.gmra.mxu0 %v2804
      %v3103 = vpop.f32.mrf.mxu0
      %v3104 = vadd.f32 %v3070, %v3103
      %v3105 = vpop.f32.mrf.mxu0
      %v3106 = vadd.f32 %v3072, %v3105
      %3107 = vmatmul.bf16.gmra.mxu0 %v2808
      %v3108 = vpop.f32.mrf.mxu0
      %v3109 = vadd.f32 %v3075, %v3108
      %v3110 = vpop.f32.mrf.mxu0
      %v3111 = vadd.f32 %v3077, %v3110
      %3112 = vmatmul.bf16.gmra.mxu0 %v2812
      %v3113 = vpop.f32.mrf.mxu0
      %v3114 = vadd.f32 %v3080, %v3113
      %v3115 = vpop.f32.mrf.mxu0
      %v3116 = vadd.f32 %v3082, %v3115
      %3117 = vmatmul.bf16.gmra.mxu0 %v2816
      %v3118 = vpop.f32.mrf.mxu0
      %v3119 = vadd.f32 %v3085, %v3118
      %v3120 = vpop.f32.mrf.mxu0
      %v3121 = vadd.f32 %v3087, %v3120
      %3122 = vdwg.mxu0
      %v3123 = vadd.f32 %v2696, %v3031
      %v3124 = vadd.f32 %v2697, %v3099
      %v3125 = vadd.f32 %v2698, %v3033
      %v3126 = vadd.f32 %v2699, %v3101
      %v3127 = vadd.f32 %v2700, %v3036
      %v3128 = vadd.f32 %v2701, %v3104
      %v3129 = vadd.f32 %v2702, %v3038
      %v3130 = vadd.f32 %v2703, %v3106
      %v3131 = vadd.f32 %v2704, %v3041
      %v3132 = vadd.f32 %v2705, %v3109
      %v3133 = vadd.f32 %v2706, %v3043
      %v3134 = vadd.f32 %v2707, %v3111
      %v3135 = vadd.f32 %v2708, %v3046
      %v3136 = vadd.f32 %v2709, %v3114
      %v3137 = vadd.f32 %v2710, %v3048
      %v3138 = vadd.f32 %v2711, %v3116
      %v3139 = vadd.f32 %v2712, %v3051
      %v3140 = vadd.f32 %v2713, %v3119
      %v3141 = vadd.f32 %v2714, %v3053
      %v3142 = vadd.f32 %v2715, %v3121
      %v3143 = vld [vmem:[%s219 + $0x20] sm:$0xe0]
      %v3144 = vld [vmem:[%s219 + $0x28] sm:$0xe0]
      %v3145 = vld [vmem:[%s219 + $0xc0] sm:$0x1f]
      %v3146 = vld [vmem:[%s219 + $0xc8] sm:$0x1f]
      %v3147 = vpack.c.bf16 %v2718, %v3143
      %v3148 = vpack.c.bf16 %v2719, %v3144
      %v3149 = vpack.c.bf16 %v3145, %v3145
      %v3150 = vpack.c.bf16 %v3146, %v3146
      %s3151 = scalar_lea.vmem %s1, 1792
      %v3152 = vld [vmem:[%s3151] sm:$0xff]
      %v3153 = vld [vmem:[%s3151 + $0x8] sm:$0xff]
      %v3154 = vld [vmem:[%s3151 + $0x10] sm:$0xff]
      %v3155 = vld [vmem:[%s3151 + $0x18] sm:$0xff]
      %v3156 = vld [vmem:[%s3151 + $0x20] sm:$0xff]
      %v3157 = vld [vmem:[%s3151 + $0x28] sm:$0xff]
      %v3158 = vld [vmem:[%s3151 + $0x30] sm:$0xff]
      %v3159 = vld [vmem:[%s3151 + $0x38] sm:$0xff]
      %v3160 = vld [vmem:[%s3151 + $0x40] sm:$0xff]
      %v3161 = vld [vmem:[%s3151 + $0x48] sm:$0xff]
      %v3162 = vld [vmem:[%s3151 + $0x50] sm:$0xff]
      %v3163 = vld [vmem:[%s3151 + $0x58] sm:$0xff]
      %v3164 = vld [vmem:[%s3151 + $0x60] sm:$0xff]
      %v3165 = vld [vmem:[%s3151 + $0x68] sm:$0xff]
      %v3166 = vld [vmem:[%s3151 + $0x70] sm:$0xff]
      %v3167 = vld [vmem:[%s3151 + $0x78] sm:$0xff]
      %v3168 = vld [vmem:[%s3151 + $0x80] sm:$0xff]
      %v3169 = vld [vmem:[%s3151 + $0x88] sm:$0xff]
      %v3170 = vld [vmem:[%s3151 + $0x90] sm:$0xff]
      %v3171 = vld [vmem:[%s3151 + $0x98] sm:$0xff]
      %v3172 = vld [vmem:[%s3151 + $0xa0] sm:$0xff]
      %v3173 = vld [vmem:[%s3151 + $0xa8] sm:$0xff]
      %v3174 = vld [vmem:[%s3151 + $0xb0] sm:$0xff]
      %v3175 = vld [vmem:[%s3151 + $0xb8] sm:$0xff]
      %v3176 = vld [vmem:[%s3151 + $0xc0] sm:$0xff]
      %v3177 = vld [vmem:[%s3151 + $0xc8] sm:$0xff]
      %v3178 = vld [vmem:[%s3151 + $0xd0] sm:$0xff]
      %v3179 = vld [vmem:[%s3151 + $0xd8] sm:$0xff]
      %v3180 = vld [vmem:[%s3151 + $0xe0] sm:$0xff]
      %v3181 = vld [vmem:[%s3151 + $0xe8] sm:$0xff]
      %v3182 = vld [vmem:[%s3151 + $0xf0] sm:$0xff]
      %v3183 = vld [vmem:[%s3151 + $0xf8] sm:$0xff]
      %vm3184 = vsmask.f32 5376
      %v3186 = vshrl.u32 %v3147, 16
      %v3188 = vrot.slane %v3186, 2
      %v3189 = vshll.u32 %v3147, 16
      %v3191 = vrot.slane %v3189, 3
      %v3192 = vor.u32 %v3188, %v3191
      %v3194 = vshrl.u32 %v2740, 16
      %v3196 = vrot.slane %v3194, 2
      %v3197 = vshll.u32 %v2740, 16
      %v3199 = vrot.slane %v3197, 3
      %v3200 = vor.u32 %v3196, %v3199
      %v3201 = vsel %vm3184, %v3192, %v3200
      %v3203 = vshrl.u32 %v3148, 16
      %v3205 = vrot.slane %v3203, 2
      %v3206 = vshll.u32 %v3148, 16
      %v3208 = vrot.slane %v3206, 3
      %v3209 = vor.u32 %v3205, %v3208
      %v3211 = vshrl.u32 %v2741, 16
      %v3213 = vrot.slane %v3211, 2
      %v3214 = vshll.u32 %v2741, 16
      %v3216 = vrot.slane %v3214, 3
      %v3217 = vor.u32 %v3213, %v3216
      %v3218 = vsel %vm3184, %v3209, %v3217
      %v3220 = vshrl.u32 %v2742, 16
      %v3222 = vrot.slane %v3220, 2
      %v3223 = vshll.u32 %v2742, 16
      %v3225 = vrot.slane %v3223, 3
      %v3226 = vor.u32 %v3222, %v3225
      %v3227 = vsel %vm3184, %v3200, %v3226
      %v3229 = vshrl.u32 %v2743, 16
      %v3231 = vrot.slane %v3229, 2
      %v3232 = vshll.u32 %v2743, 16
      %v3234 = vrot.slane %v3232, 3
      %v3235 = vor.u32 %v3231, %v3234
      %v3236 = vsel %vm3184, %v3217, %v3235
      %v3238 = vshrl.u32 %v2744, 16
      %v3240 = vrot.slane %v3238, 2
      %v3241 = vshll.u32 %v2744, 16
      %v3243 = vrot.slane %v3241, 3
      %v3244 = vor.u32 %v3240, %v3243
      %v3245 = vsel %vm3184, %v3226, %v3244
      %v3247 = vshrl.u32 %v2745, 16
      %v3249 = vrot.slane %v3247, 2
      %v3250 = vshll.u32 %v2745, 16
      %v3252 = vrot.slane %v3250, 3
      %v3253 = vor.u32 %v3249, %v3252
      %v3254 = vsel %vm3184, %v3235, %v3253
      %v3256 = vshrl.u32 %v2746, 16
      %v3258 = vrot.slane %v3256, 2
      %v3259 = vshll.u32 %v2746, 16
      %v3261 = vrot.slane %v3259, 3
      %v3262 = vor.u32 %v3258, %v3261
      %v3263 = vsel %vm3184, %v3244, %v3262
      %v3265 = vshrl.u32 %v2747, 16
      %v3267 = vrot.slane %v3265, 2
      %v3268 = vshll.u32 %v2747, 16
      %v3270 = vrot.slane %v3268, 3
      %v3271 = vor.u32 %v3267, %v3270
      %v3272 = vsel %vm3184, %v3253, %v3271
      %v3274 = vshrl.u32 %v3149, 16
      %v3276 = vrot.slane %v3274, 2
      %v3277 = vshll.u32 %v3149, 16
      %v3279 = vrot.slane %v3277, 3
      %v3280 = vor.u32 %v3276, %v3279
      %v3281 = vsel %vm3184, %v3262, %v3280
      %v3283 = vshrl.u32 %v3150, 16
      %v3285 = vrot.slane %v3283, 2
      %v3286 = vshll.u32 %v3150, 16
      %v3288 = vrot.slane %v3286, 3
      %v3289 = vor.u32 %v3285, %v3288
      %v3290 = vsel %vm3184, %v3271, %v3289
      %v3333 = vunpack.c.l.b16 %v3152
      %v3334 = vunpack.c.h.b16 %v3152
      %v3335 = vunpack.c.l.b16 %v3153
      %v3336 = vunpack.c.h.b16 %v3153
      %v3337 = vunpack.c.l.b16 %v3154
      %v3338 = vunpack.c.h.b16 %v3154
      %v3339 = vunpack.c.l.b16 %v3155
      %v3340 = vunpack.c.h.b16 %v3155
      %v3341 = vunpack.c.l.b16 %v3156
      %v3342 = vunpack.c.h.b16 %v3156
      %v3343 = vunpack.c.l.b16 %v3157
      %v3344 = vunpack.c.h.b16 %v3157
      %v3345 = vunpack.c.l.b16 %v3158
      %v3346 = vunpack.c.h.b16 %v3158
      %v3347 = vunpack.c.l.b16 %v3159
      %v3348 = vunpack.c.h.b16 %v3159
      %v3349 = vunpack.c.l.b16 %v3160
      %v3350 = vunpack.c.h.b16 %v3160
      %v3351 = vunpack.c.l.b16 %v3161
      %v3352 = vunpack.c.h.b16 %v3161
      %v3353 = vunpack.c.l.b16 %v3162
      %v3354 = vunpack.c.h.b16 %v3162
      %v3355 = vunpack.c.l.b16 %v3163
      %v3356 = vunpack.c.h.b16 %v3163
      %v3357 = vunpack.c.l.b16 %v3164
      %v3358 = vunpack.c.h.b16 %v3164
      %v3359 = vunpack.c.l.b16 %v3165
      %v3360 = vunpack.c.h.b16 %v3165
      %v3361 = vunpack.c.l.b16 %v3166
      %v3362 = vunpack.c.h.b16 %v3166
      %v3363 = vunpack.c.l.b16 %v3167
      %v3364 = vunpack.c.h.b16 %v3167
      %v3365 = vunpack.c.l.b16 %v3168
      %v3366 = vunpack.c.h.b16 %v3168
      %v3367 = vunpack.c.l.b16 %v3169
      %v3368 = vunpack.c.h.b16 %v3169
      %v3369 = vunpack.c.l.b16 %v3170
      %v3370 = vunpack.c.h.b16 %v3170
      %v3371 = vunpack.c.l.b16 %v3171
      %v3372 = vunpack.c.h.b16 %v3171
      %v3373 = vunpack.c.l.b16 %v3172
      %v3374 = vunpack.c.h.b16 %v3172
      %v3375 = vunpack.c.l.b16 %v3173
      %v3376 = vunpack.c.h.b16 %v3173
      %v3377 = vunpack.c.l.b16 %v3174
      %v3378 = vunpack.c.h.b16 %v3174
      %v3379 = vunpack.c.l.b16 %v3175
      %v3380 = vunpack.c.h.b16 %v3175
      %v3381 = vunpack.c.l.b16 %v3176
      %v3382 = vunpack.c.h.b16 %v3176
      %v3383 = vunpack.c.l.b16 %v3177
      %v3384 = vunpack.c.h.b16 %v3177
      %v3385 = vunpack.c.l.b16 %v3178
      %v3386 = vunpack.c.h.b16 %v3178
      %v3387 = vunpack.c.l.b16 %v3179
      %v3388 = vunpack.c.h.b16 %v3179
      %v3389 = vunpack.c.l.b16 %v3180
      %v3390 = vunpack.c.h.b16 %v3180
      %v3391 = vunpack.c.l.b16 %v3181
      %v3392 = vunpack.c.h.b16 %v3181
      %v3393 = vunpack.c.l.b16 %v3182
      %v3394 = vunpack.c.h.b16 %v3182
      %v3395 = vunpack.c.l.b16 %v3183
      %v3396 = vunpack.c.h.b16 %v3183
      %v3397 = vpack.c.b16 %v3335, %v3333
      %v3398 = vpack.c.b16 %v3336, %v3334
      %v3399 = vpack.c.b16 %v3339, %v3337
      %v3400 = vpack.c.b16 %v3340, %v3338
      %v3401 = vpack.c.b16 %v3343, %v3341
      %v3402 = vpack.c.b16 %v3344, %v3342
      %v3403 = vpack.c.b16 %v3347, %v3345
      %v3404 = vpack.c.b16 %v3348, %v3346
      %v3405 = vpack.c.b16 %v3351, %v3349
      %v3406 = vpack.c.b16 %v3352, %v3350
      %v3407 = vpack.c.b16 %v3355, %v3353
      %v3408 = vpack.c.b16 %v3356, %v3354
      %v3409 = vpack.c.b16 %v3359, %v3357
      %v3410 = vpack.c.b16 %v3360, %v3358
      %v3411 = vpack.c.b16 %v3363, %v3361
      %v3412 = vpack.c.b16 %v3364, %v3362
      %v3413 = vpack.c.b16 %v3367, %v3365
      %v3414 = vpack.c.b16 %v3368, %v3366
      %v3415 = vpack.c.b16 %v3371, %v3369
      %v3416 = vpack.c.b16 %v3372, %v3370
      %v3417 = vpack.c.b16 %v3375, %v3373
      %v3418 = vpack.c.b16 %v3376, %v3374
      %v3419 = vpack.c.b16 %v3379, %v3377
      %v3420 = vpack.c.b16 %v3380, %v3378
      %v3421 = vpack.c.b16 %v3383, %v3381
      %v3422 = vpack.c.b16 %v3384, %v3382
      %v3423 = vpack.c.b16 %v3387, %v3385
      %v3424 = vpack.c.b16 %v3388, %v3386
      %v3425 = vpack.c.b16 %v3391, %v3389
      %v3426 = vpack.c.b16 %v3392, %v3390
      %v3427 = vpack.c.b16 %v3395, %v3393
      %v3428 = vpack.c.b16 %v3396, %v3394
      %3461 = vmatpush.bf16.msra.mxu0 %v3411
      %3462 = vmatpush.bf16.msra.mxu0 %v3409
      %3463 = vmatpush.bf16.msra.mxu0 %v3407
      %3464 = vmatpush.bf16.msra.mxu0 %v3405
      %3465 = vmatpush.bf16.msra.mxu0 %v3403
      %3466 = vmatpush.bf16.msra.mxu0 %v3401
      %3467 = vmatpush.bf16.msra.mxu0 %v3399
      %3468 = vmatpush.bf16.msra.mxu0 %v3397
      %3469 = vmatmul.bf16.gmra.mxu0 %v3201
      %v3470 = vpop.f32.mrf.mxu0
      %v3471 = vadd.f32 0.0, %v3470
      %v3472 = vpop.f32.mrf.mxu0
      %v3473 = vadd.f32 0.0, %v3472
      %3474 = vmatmul.bf16.gmra.mxu0 %v3227
      %v3475 = vpop.f32.mrf.mxu0
      %v3476 = vadd.f32 0.0, %v3475
      %v3477 = vpop.f32.mrf.mxu0
      %v3478 = vadd.f32 0.0, %v3477
      %3479 = vmatmul.bf16.gmra.mxu0 %v3245
      %v3480 = vpop.f32.mrf.mxu0
      %v3481 = vadd.f32 0.0, %v3480
      %v3482 = vpop.f32.mrf.mxu0
      %v3483 = vadd.f32 0.0, %v3482
      %3484 = vmatmul.bf16.gmra.mxu0 %v3263
      %v3485 = vpop.f32.mrf.mxu0
      %v3486 = vadd.f32 0.0, %v3485
      %v3487 = vpop.f32.mrf.mxu0
      %v3488 = vadd.f32 0.0, %v3487
      %3489 = vmatmul.bf16.gmra.mxu0 %v3281
      %v3490 = vpop.f32.mrf.mxu0
      %v3491 = vadd.f32 0.0, %v3490
      %v3492 = vpop.f32.mrf.mxu0
      %v3493 = vadd.f32 0.0, %v3492
      %3494 = vdwg.mxu0
      %3495 = vmatpush.bf16.msra.mxu0 %v3427
      %3496 = vmatpush.bf16.msra.mxu0 %v3425
      %3497 = vmatpush.bf16.msra.mxu0 %v3423
      %3498 = vmatpush.bf16.msra.mxu0 %v3421
      %3499 = vmatpush.bf16.msra.mxu0 %v3419
      %3500 = vmatpush.bf16.msra.mxu0 %v3417
      %3501 = vmatpush.bf16.msra.mxu0 %v3415
      %3502 = vmatpush.bf16.msra.mxu0 %v3413
      %3503 = vmatmul.bf16.gmra.mxu0 %v3218
      %v3504 = vpop.f32.mrf.mxu0
      %v3505 = vadd.f32 %v3471, %v3504
      %v3506 = vpop.f32.mrf.mxu0
      %v3507 = vadd.f32 %v3473, %v3506
      %3508 = vmatmul.bf16.gmra.mxu0 %v3236
      %v3509 = vpop.f32.mrf.mxu0
      %v3510 = vadd.f32 %v3476, %v3509
      %v3511 = vpop.f32.mrf.mxu0
      %v3512 = vadd.f32 %v3478, %v3511
      %3513 = vmatmul.bf16.gmra.mxu0 %v3254
      %v3514 = vpop.f32.mrf.mxu0
      %v3515 = vadd.f32 %v3481, %v3514
      %v3516 = vpop.f32.mrf.mxu0
      %v3517 = vadd.f32 %v3483, %v3516
      %3518 = vmatmul.bf16.gmra.mxu0 %v3272
      %v3519 = vpop.f32.mrf.mxu0
      %v3520 = vadd.f32 %v3486, %v3519
      %v3521 = vpop.f32.mrf.mxu0
      %v3522 = vadd.f32 %v3488, %v3521
      %3523 = vmatmul.bf16.gmra.mxu0 %v3290
      %v3524 = vpop.f32.mrf.mxu0
      %v3525 = vadd.f32 %v3491, %v3524
      %v3526 = vpop.f32.mrf.mxu0
      %v3527 = vadd.f32 %v3493, %v3526
      %3528 = vdwg.mxu0
      %3529 = vmatpush.bf16.msra.mxu0 %v3412
      %3530 = vmatpush.bf16.msra.mxu0 %v3410
      %3531 = vmatpush.bf16.msra.mxu0 %v3408
      %3532 = vmatpush.bf16.msra.mxu0 %v3406
      %3533 = vmatpush.bf16.msra.mxu0 %v3404
      %3534 = vmatpush.bf16.msra.mxu0 %v3402
      %3535 = vmatpush.bf16.msra.mxu0 %v3400
      %3536 = vmatpush.bf16.msra.mxu0 %v3398
      %3537 = vmatmul.bf16.gmra.mxu0 %v3201
      %v3538 = vpop.f32.mrf.mxu0
      %v3539 = vadd.f32 0.0, %v3538
      %v3540 = vpop.f32.mrf.mxu0
      %v3541 = vadd.f32 0.0, %v3540
      %3542 = vmatmul.bf16.gmra.mxu0 %v3227
      %v3543 = vpop.f32.mrf.mxu0
      %v3544 = vadd.f32 0.0, %v3543
      %v3545 = vpop.f32.mrf.mxu0
      %v3546 = vadd.f32 0.0, %v3545
      %3547 = vmatmul.bf16.gmra.mxu0 %v3245
      %v3548 = vpop.f32.mrf.mxu0
      %v3549 = vadd.f32 0.0, %v3548
      %v3550 = vpop.f32.mrf.mxu0
      %v3551 = vadd.f32 0.0, %v3550
      %3552 = vmatmul.bf16.gmra.mxu0 %v3263
      %v3553 = vpop.f32.mrf.mxu0
      %v3554 = vadd.f32 0.0, %v3553
      %v3555 = vpop.f32.mrf.mxu0
      %v3556 = vadd.f32 0.0, %v3555
      %3557 = vmatmul.bf16.gmra.mxu0 %v3281
      %v3558 = vpop.f32.mrf.mxu0
      %v3559 = vadd.f32 0.0, %v3558
      %v3560 = vpop.f32.mrf.mxu0
      %v3561 = vadd.f32 0.0, %v3560
      %3562 = vdwg.mxu0
      %3563 = vmatpush.bf16.msra.mxu0 %v3428
      %3564 = vmatpush.bf16.msra.mxu0 %v3426
      %3565 = vmatpush.bf16.msra.mxu0 %v3424
      %3566 = vmatpush.bf16.msra.mxu0 %v3422
      %3567 = vmatpush.bf16.msra.mxu0 %v3420
      %3568 = vmatpush.bf16.msra.mxu0 %v3418
      %3569 = vmatpush.bf16.msra.mxu0 %v3416
      %3570 = vmatpush.bf16.msra.mxu0 %v3414
      %3571 = vmatmul.bf16.gmra.mxu0 %v3218
      %v3572 = vpop.f32.mrf.mxu0
      %v3573 = vadd.f32 %v3539, %v3572
      %v3574 = vpop.f32.mrf.mxu0
      %v3575 = vadd.f32 %v3541, %v3574
      %3576 = vmatmul.bf16.gmra.mxu0 %v3236
      %v3577 = vpop.f32.mrf.mxu0
      %v3578 = vadd.f32 %v3544, %v3577
      %v3579 = vpop.f32.mrf.mxu0
      %v3580 = vadd.f32 %v3546, %v3579
      %3581 = vmatmul.bf16.gmra.mxu0 %v3254
      %v3582 = vpop.f32.mrf.mxu0
      %v3583 = vadd.f32 %v3549, %v3582
      %v3584 = vpop.f32.mrf.mxu0
      %v3585 = vadd.f32 %v3551, %v3584
      %3586 = vmatmul.bf16.gmra.mxu0 %v3272
      %v3587 = vpop.f32.mrf.mxu0
      %v3588 = vadd.f32 %v3554, %v3587
      %v3589 = vpop.f32.mrf.mxu0
      %v3590 = vadd.f32 %v3556, %v3589
      %3591 = vmatmul.bf16.gmra.mxu0 %v3290
      %v3592 = vpop.f32.mrf.mxu0
      %v3593 = vadd.f32 %v3559, %v3592
      %v3594 = vpop.f32.mrf.mxu0
      %v3595 = vadd.f32 %v3561, %v3594
      %3596 = vdwg.mxu0
      %v3597 = vadd.f32 %v3123, %v3505
      %v3598 = vadd.f32 %v3124, %v3573
      %v3599 = vadd.f32 %v3125, %v3507
      %v3600 = vadd.f32 %v3126, %v3575
      %v3601 = vadd.f32 %v3127, %v3510
      %v3602 = vadd.f32 %v3128, %v3578
      %v3603 = vadd.f32 %v3129, %v3512
      %v3604 = vadd.f32 %v3130, %v3580
      %v3605 = vadd.f32 %v3131, %v3515
      %v3606 = vadd.f32 %v3132, %v3583
      %v3607 = vadd.f32 %v3133, %v3517
      %v3608 = vadd.f32 %v3134, %v3585
      %v3609 = vadd.f32 %v3135, %v3520
      %v3610 = vadd.f32 %v3136, %v3588
      %v3611 = vadd.f32 %v3137, %v3522
      %v3612 = vadd.f32 %v3138, %v3590
      %v3613 = vadd.f32 %v3139, %v3525
      %v3614 = vadd.f32 %v3140, %v3593
      %v3615 = vadd.f32 %v3141, %v3527
      %v3616 = vadd.f32 %v3142, %v3595
      %v3617 = vld [vmem:[%s219 + $0x20] sm:$0xc0]
      %v3618 = vld [vmem:[%s219 + $0x28] sm:$0xc0]
      %v3619 = vld [vmem:[%s219 + $0xc0] sm:$0x3f]
      %v3620 = vld [vmem:[%s219 + $0xc8] sm:$0x3f]
      %v3621 = vpack.c.bf16 %v2718, %v3617
      %v3622 = vpack.c.bf16 %v2719, %v3618
      %v3623 = vpack.c.bf16 %v3619, %v3619
      %v3624 = vpack.c.bf16 %v3620, %v3620
      %s3625 = scalar_lea.vmem %s1, 2048
      %v3626 = vld [vmem:[%s3625] sm:$0xff]
      %v3627 = vld [vmem:[%s3625 + $0x8] sm:$0xff]
      %v3628 = vld [vmem:[%s3625 + $0x10] sm:$0xff]
      %v3629 = vld [vmem:[%s3625 + $0x18] sm:$0xff]
      %v3630 = vld [vmem:[%s3625 + $0x20] sm:$0xff]
      %v3631 = vld [vmem:[%s3625 + $0x28] sm:$0xff]
      %v3632 = vld [vmem:[%s3625 + $0x30] sm:$0xff]
      %v3633 = vld [vmem:[%s3625 + $0x38] sm:$0xff]
      %v3634 = vld [vmem:[%s3625 + $0x40] sm:$0xff]
      %v3635 = vld [vmem:[%s3625 + $0x48] sm:$0xff]
      %v3636 = vld [vmem:[%s3625 + $0x50] sm:$0xff]
      %v3637 = vld [vmem:[%s3625 + $0x58] sm:$0xff]
      %v3638 = vld [vmem:[%s3625 + $0x60] sm:$0xff]
      %v3639 = vld [vmem:[%s3625 + $0x68] sm:$0xff]
      %v3640 = vld [vmem:[%s3625 + $0x70] sm:$0xff]
      %v3641 = vld [vmem:[%s3625 + $0x78] sm:$0xff]
      %v3642 = vld [vmem:[%s3625 + $0x80] sm:$0xff]
      %v3643 = vld [vmem:[%s3625 + $0x88] sm:$0xff]
      %v3644 = vld [vmem:[%s3625 + $0x90] sm:$0xff]
      %v3645 = vld [vmem:[%s3625 + $0x98] sm:$0xff]
      %v3646 = vld [vmem:[%s3625 + $0xa0] sm:$0xff]
      %v3647 = vld [vmem:[%s3625 + $0xa8] sm:$0xff]
      %v3648 = vld [vmem:[%s3625 + $0xb0] sm:$0xff]
      %v3649 = vld [vmem:[%s3625 + $0xb8] sm:$0xff]
      %v3650 = vld [vmem:[%s3625 + $0xc0] sm:$0xff]
      %v3651 = vld [vmem:[%s3625 + $0xc8] sm:$0xff]
      %v3652 = vld [vmem:[%s3625 + $0xd0] sm:$0xff]
      %v3653 = vld [vmem:[%s3625 + $0xd8] sm:$0xff]
      %v3654 = vld [vmem:[%s3625 + $0xe0] sm:$0xff]
      %v3655 = vld [vmem:[%s3625 + $0xe8] sm:$0xff]
      %v3656 = vld [vmem:[%s3625 + $0xf0] sm:$0xff]
      %v3657 = vld [vmem:[%s3625 + $0xf8] sm:$0xff]
      %vm3662 = vcmask 1044480
      %v3663 = vrot.slane %v3621, 3
      %v3664 = vrot.slane %v2740, 3
      %v3665 = vsel %vm3662, %v3663, %v3664
      %v3666 = vrot.slane %v3622, 3
      %v3667 = vrot.slane %v2741, 3
      %v3668 = vsel %vm3662, %v3666, %v3667
      %v3669 = vrot.slane %v2742, 3
      %v3670 = vsel %vm3662, %v3664, %v3669
      %v3671 = vrot.slane %v2743, 3
      %v3672 = vsel %vm3662, %v3667, %v3671
      %v3673 = vrot.slane %v2744, 3
      %v3674 = vsel %vm3662, %v3669, %v3673
      %v3675 = vrot.slane %v2745, 3
      %v3676 = vsel %vm3662, %v3671, %v3675
      %v3677 = vrot.slane %v2746, 3
      %v3678 = vsel %vm3662, %v3673, %v3677
      %v3679 = vrot.slane %v2747, 3
      %v3680 = vsel %vm3662, %v3675, %v3679
      %v3681 = vrot.slane %v3623, 3
      %v3682 = vsel %vm3662, %v3677, %v3681
      %v3683 = vrot.slane %v3624, 3
      %v3684 = vsel %vm3662, %v3679, %v3683
      %v3727 = vunpack.c.l.b16 %v3626
      %v3728 = vunpack.c.h.b16 %v3626
      %v3729 = vunpack.c.l.b16 %v3627
      %v3730 = vunpack.c.h.b16 %v3627
      %v3731 = vunpack.c.l.b16 %v3628
      %v3732 = vunpack.c.h.b16 %v3628
      %v3733 = vunpack.c.l.b16 %v3629
      %v3734 = vunpack.c.h.b16 %v3629
      %v3735 = vunpack.c.l.b16 %v3630
      %v3736 = vunpack.c.h.b16 %v3630
      %v3737 = vunpack.c.l.b16 %v3631
      %v3738 = vunpack.c.h.b16 %v3631
      %v3739 = vunpack.c.l.b16 %v3632
      %v3740 = vunpack.c.h.b16 %v3632
      %v3741 = vunpack.c.l.b16 %v3633
      %v3742 = vunpack.c.h.b16 %v3633
      %v3743 = vunpack.c.l.b16 %v3634
      %v3744 = vunpack.c.h.b16 %v3634
      %v3745 = vunpack.c.l.b16 %v3635
      %v3746 = vunpack.c.h.b16 %v3635
      %v3747 = vunpack.c.l.b16 %v3636
      %v3748 = vunpack.c.h.b16 %v3636
      %v3749 = vunpack.c.l.b16 %v3637
      %v3750 = vunpack.c.h.b16 %v3637
      %v3751 = vunpack.c.l.b16 %v3638
      %v3752 = vunpack.c.h.b16 %v3638
      %v3753 = vunpack.c.l.b16 %v3639
      %v3754 = vunpack.c.h.b16 %v3639
      %v3755 = vunpack.c.l.b16 %v3640
      %v3756 = vunpack.c.h.b16 %v3640
      %v3757 = vunpack.c.l.b16 %v3641
      %v3758 = vunpack.c.h.b16 %v3641
      %v3759 = vunpack.c.l.b16 %v3642
      %v3760 = vunpack.c.h.b16 %v3642
      %v3761 = vunpack.c.l.b16 %v3643
      %v3762 = vunpack.c.h.b16 %v3643
      %v3763 = vunpack.c.l.b16 %v3644
      %v3764 = vunpack.c.h.b16 %v3644
      %v3765 = vunpack.c.l.b16 %v3645
      %v3766 = vunpack.c.h.b16 %v3645
      %v3767 = vunpack.c.l.b16 %v3646
      %v3768 = vunpack.c.h.b16 %v3646
      %v3769 = vunpack.c.l.b16 %v3647
      %v3770 = vunpack.c.h.b16 %v3647
      %v3771 = vunpack.c.l.b16 %v3648
      %v3772 = vunpack.c.h.b16 %v3648
      %v3773 = vunpack.c.l.b16 %v3649
      %v3774 = vunpack.c.h.b16 %v3649
      %v3775 = vunpack.c.l.b16 %v3650
      %v3776 = vunpack.c.h.b16 %v3650
      %v3777 = vunpack.c.l.b16 %v3651
      %v3778 = vunpack.c.h.b16 %v3651
      %v3779 = vunpack.c.l.b16 %v3652
      %v3780 = vunpack.c.h.b16 %v3652
      %v3781 = vunpack.c.l.b16 %v3653
      %v3782 = vunpack.c.h.b16 %v3653
      %v3783 = vunpack.c.l.b16 %v3654
      %v3784 = vunpack.c.h.b16 %v3654
      %v3785 = vunpack.c.l.b16 %v3655
      %v3786 = vunpack.c.h.b16 %v3655
      %v3787 = vunpack.c.l.b16 %v3656
      %v3788 = vunpack.c.h.b16 %v3656
      %v3789 = vunpack.c.l.b16 %v3657
      %v3790 = vunpack.c.h.b16 %v3657
      %v3791 = vpack.c.b16 %v3729, %v3727
      %v3792 = vpack.c.b16 %v3730, %v3728
      %v3793 = vpack.c.b16 %v3733, %v3731
      %v3794 = vpack.c.b16 %v3734, %v3732
      %v3795 = vpack.c.b16 %v3737, %v3735
      %v3796 = vpack.c.b16 %v3738, %v3736
      %v3797 = vpack.c.b16 %v3741, %v3739
      %v3798 = vpack.c.b16 %v3742, %v3740
      %v3799 = vpack.c.b16 %v3745, %v3743
      %v3800 = vpack.c.b16 %v3746, %v3744
      %v3801 = vpack.c.b16 %v3749, %v3747
      %v3802 = vpack.c.b16 %v3750, %v3748
      %v3803 = vpack.c.b16 %v3753, %v3751
      %v3804 = vpack.c.b16 %v3754, %v3752
      %v3805 = vpack.c.b16 %v3757, %v3755
      %v3806 = vpack.c.b16 %v3758, %v3756
      %v3807 = vpack.c.b16 %v3761, %v3759
      %v3808 = vpack.c.b16 %v3762, %v3760
      %v3809 = vpack.c.b16 %v3765, %v3763
      %v3810 = vpack.c.b16 %v3766, %v3764
      %v3811 = vpack.c.b16 %v3769, %v3767
      %v3812 = vpack.c.b16 %v3770, %v3768
      %v3813 = vpack.c.b16 %v3773, %v3771
      %v3814 = vpack.c.b16 %v3774, %v3772
      %v3815 = vpack.c.b16 %v3777, %v3775
      %v3816 = vpack.c.b16 %v3778, %v3776
      %v3817 = vpack.c.b16 %v3781, %v3779
      %v3818 = vpack.c.b16 %v3782, %v3780
      %v3819 = vpack.c.b16 %v3785, %v3783
      %v3820 = vpack.c.b16 %v3786, %v3784
      %v3821 = vpack.c.b16 %v3789, %v3787
      %v3822 = vpack.c.b16 %v3790, %v3788
      %3855 = vmatpush.bf16.msra.mxu0 %v3805
      %3856 = vmatpush.bf16.msra.mxu0 %v3803
      %3857 = vmatpush.bf16.msra.mxu0 %v3801
      %3858 = vmatpush.bf16.msra.mxu0 %v3799
      %3859 = vmatpush.bf16.msra.mxu0 %v3797
      %3860 = vmatpush.bf16.msra.mxu0 %v3795
      %3861 = vmatpush.bf16.msra.mxu0 %v3793
      %3862 = vmatpush.bf16.msra.mxu0 %v3791
      %3863 = vmatmul.bf16.gmra.mxu0 %v3665
      %v3864 = vpop.f32.mrf.mxu0
      %v3865 = vadd.f32 0.0, %v3864
      %v3866 = vpop.f32.mrf.mxu0
      %v3867 = vadd.f32 0.0, %v3866
      %3868 = vmatmul.bf16.gmra.mxu0 %v3670
      %v3869 = vpop.f32.mrf.mxu0
      %v3870 = vadd.f32 0.0, %v3869
      %v3871 = vpop.f32.mrf.mxu0
      %v3872 = vadd.f32 0.0, %v3871
      %3873 = vmatmul.bf16.gmra.mxu0 %v3674
      %v3874 = vpop.f32.mrf.mxu0
      %v3875 = vadd.f32 0.0, %v3874
      %v3876 = vpop.f32.mrf.mxu0
      %v3877 = vadd.f32 0.0, %v3876
      %3878 = vmatmul.bf16.gmra.mxu0 %v3678
      %v3879 = vpop.f32.mrf.mxu0
      %v3880 = vadd.f32 0.0, %v3879
      %v3881 = vpop.f32.mrf.mxu0
      %v3882 = vadd.f32 0.0, %v3881
      %3883 = vmatmul.bf16.gmra.mxu0 %v3682
      %v3884 = vpop.f32.mrf.mxu0
      %v3885 = vadd.f32 0.0, %v3884
      %v3886 = vpop.f32.mrf.mxu0
      %v3887 = vadd.f32 0.0, %v3886
      %3888 = vdwg.mxu0
      %3889 = vmatpush.bf16.msra.mxu0 %v3821
      %3890 = vmatpush.bf16.msra.mxu0 %v3819
      %3891 = vmatpush.bf16.msra.mxu0 %v3817
      %3892 = vmatpush.bf16.msra.mxu0 %v3815
      %3893 = vmatpush.bf16.msra.mxu0 %v3813
      %3894 = vmatpush.bf16.msra.mxu0 %v3811
      %3895 = vmatpush.bf16.msra.mxu0 %v3809
      %3896 = vmatpush.bf16.msra.mxu0 %v3807
      %3897 = vmatmul.bf16.gmra.mxu0 %v3668
      %v3898 = vpop.f32.mrf.mxu0
      %v3899 = vadd.f32 %v3865, %v3898
      %v3900 = vpop.f32.mrf.mxu0
      %v3901 = vadd.f32 %v3867, %v3900
      %3902 = vmatmul.bf16.gmra.mxu0 %v3672
      %v3903 = vpop.f32.mrf.mxu0
      %v3904 = vadd.f32 %v3870, %v3903
      %v3905 = vpop.f32.mrf.mxu0
      %v3906 = vadd.f32 %v3872, %v3905
      %3907 = vmatmul.bf16.gmra.mxu0 %v3676
      %v3908 = vpop.f32.mrf.mxu0
      %v3909 = vadd.f32 %v3875, %v3908
      %v3910 = vpop.f32.mrf.mxu0
      %v3911 = vadd.f32 %v3877, %v3910
      %3912 = vmatmul.bf16.gmra.mxu0 %v3680
      %v3913 = vpop.f32.mrf.mxu0
      %v3914 = vadd.f32 %v3880, %v3913
      %v3915 = vpop.f32.mrf.mxu0
      %v3916 = vadd.f32 %v3882, %v3915
      %3917 = vmatmul.bf16.gmra.mxu0 %v3684
      %v3918 = vpop.f32.mrf.mxu0
      %v3919 = vadd.f32 %v3885, %v3918
      %v3920 = vpop.f32.mrf.mxu0
      %v3921 = vadd.f32 %v3887, %v3920
      %3922 = vdwg.mxu0
      %3923 = vmatpush.bf16.msra.mxu0 %v3806
      %3924 = vmatpush.bf16.msra.mxu0 %v3804
      %3925 = vmatpush.bf16.msra.mxu0 %v3802
      %3926 = vmatpush.bf16.msra.mxu0 %v3800
      %3927 = vmatpush.bf16.msra.mxu0 %v3798
      %3928 = vmatpush.bf16.msra.mxu0 %v3796
      %3929 = vmatpush.bf16.msra.mxu0 %v3794
      %3930 = vmatpush.bf16.msra.mxu0 %v3792
      %3931 = vmatmul.bf16.gmra.mxu0 %v3665
      %v3932 = vpop.f32.mrf.mxu0
      %v3933 = vadd.f32 0.0, %v3932
      %v3934 = vpop.f32.mrf.mxu0
      %v3935 = vadd.f32 0.0, %v3934
      %3936 = vmatmul.bf16.gmra.mxu0 %v3670
      %v3937 = vpop.f32.mrf.mxu0
      %v3938 = vadd.f32 0.0, %v3937
      %v3939 = vpop.f32.mrf.mxu0
      %v3940 = vadd.f32 0.0, %v3939
      %3941 = vmatmul.bf16.gmra.mxu0 %v3674
      %v3942 = vpop.f32.mrf.mxu0
      %v3943 = vadd.f32 0.0, %v3942
      %v3944 = vpop.f32.mrf.mxu0
      %v3945 = vadd.f32 0.0, %v3944
      %3946 = vmatmul.bf16.gmra.mxu0 %v3678
      %v3947 = vpop.f32.mrf.mxu0
      %v3948 = vadd.f32 0.0, %v3947
      %v3949 = vpop.f32.mrf.mxu0
      %v3950 = vadd.f32 0.0, %v3949
      %3951 = vmatmul.bf16.gmra.mxu0 %v3682
      %v3952 = vpop.f32.mrf.mxu0
      %v3953 = vadd.f32 0.0, %v3952
      %v3954 = vpop.f32.mrf.mxu0
      %v3955 = vadd.f32 0.0, %v3954
      %3956 = vdwg.mxu0
      %3957 = vmatpush.bf16.msra.mxu0 %v3822
      %3958 = vmatpush.bf16.msra.mxu0 %v3820
      %3959 = vmatpush.bf16.msra.mxu0 %v3818
      %3960 = vmatpush.bf16.msra.mxu0 %v3816
      %3961 = vmatpush.bf16.msra.mxu0 %v3814
      %3962 = vmatpush.bf16.msra.mxu0 %v3812
      %3963 = vmatpush.bf16.msra.mxu0 %v3810
      %3964 = vmatpush.bf16.msra.mxu0 %v3808
      %3965 = vmatmul.bf16.gmra.mxu0 %v3668
      %v3966 = vpop.f32.mrf.mxu0
      %v3967 = vadd.f32 %v3933, %v3966
      %v3968 = vpop.f32.mrf.mxu0
      %v3969 = vadd.f32 %v3935, %v3968
      %3970 = vmatmul.bf16.gmra.mxu0 %v3672
      %v3971 = vpop.f32.mrf.mxu0
      %v3972 = vadd.f32 %v3938, %v3971
      %v3973 = vpop.f32.mrf.mxu0
      %v3974 = vadd.f32 %v3940, %v3973
      %3975 = vmatmul.bf16.gmra.mxu0 %v3676
      %v3976 = vpop.f32.mrf.mxu0
      %v3977 = vadd.f32 %v3943, %v3976
      %v3978 = vpop.f32.mrf.mxu0
      %v3979 = vadd.f32 %v3945, %v3978
      %3980 = vmatmul.bf16.gmra.mxu0 %v3680
      %v3981 = vpop.f32.mrf.mxu0
      %v3982 = vadd.f32 %v3948, %v3981
      %v3983 = vpop.f32.mrf.mxu0
      %v3984 = vadd.f32 %v3950, %v3983
      %3985 = vmatmul.bf16.gmra.mxu0 %v3684
      %v3986 = vpop.f32.mrf.mxu0
      %v3987 = vadd.f32 %v3953, %v3986
      %v3988 = vpop.f32.mrf.mxu0
      %v3989 = vadd.f32 %v3955, %v3988
      %3990 = vdwg.mxu0
      %v3991 = vadd.f32 %v3597, %v3899
      %v3992 = vadd.f32 %v3598, %v3967
      %v3993 = vadd.f32 %v3599, %v3901
      %v3994 = vadd.f32 %v3600, %v3969
      %v3995 = vadd.f32 %v3601, %v3904
      %v3996 = vadd.f32 %v3602, %v3972
      %v3997 = vadd.f32 %v3603, %v3906
      %v3998 = vadd.f32 %v3604, %v3974
      %v3999 = vadd.f32 %v3605, %v3909
      %v4000 = vadd.f32 %v3606, %v3977
      %v4001 = vadd.f32 %v3607, %v3911
      %v4002 = vadd.f32 %v3608, %v3979
      %v4003 = vadd.f32 %v3609, %v3914
      %v4004 = vadd.f32 %v3610, %v3982
      %v4005 = vadd.f32 %v3611, %v3916
      %v4006 = vadd.f32 %v3612, %v3984
      %v4007 = vadd.f32 %v3613, %v3919
      %v4008 = vadd.f32 %v3614, %v3987
      %v4009 = vadd.f32 %v3615, %v3921
      %v4010 = vadd.f32 %v3616, %v3989
      %v4011 = vld [vmem:[%s2] sm:$0x3]
      %v4013 = vperm.slane %v4011, 0
      %v4014 = vperm.slane %v4011, 1
      %v4017 = vadd.f32 %v3991, %v4013
      %v4018 = vadd.f32 %v3992, %v4014
      %v4019 = vadd.f32 %v3993, %v4013
      %v4020 = vadd.f32 %v3994, %v4014
      %v4021 = vadd.f32 %v3995, %v4013
      %v4022 = vadd.f32 %v3996, %v4014
      %v4023 = vadd.f32 %v3997, %v4013
      %v4024 = vadd.f32 %v3998, %v4014
      %v4025 = vadd.f32 %v3999, %v4013
      %v4026 = vadd.f32 %v4000, %v4014
      %v4027 = vadd.f32 %v4001, %v4013
      %v4028 = vadd.f32 %v4002, %v4014
      %v4029 = vadd.f32 %v4003, %v4013
      %v4030 = vadd.f32 %v4004, %v4014
      %v4031 = vadd.f32 %v4005, %v4013
      %v4032 = vadd.f32 %v4006, %v4014
      %v4033 = vadd.f32 %v4007, %v4013
      %v4034 = vadd.f32 %v4008, %v4014
      %v4035 = vadd.f32 %v4009, %v4013
      %v4036 = vadd.f32 %v4010, %v4014
      %v4037 = vmax.f32 %v4017, 0.0
      %v4038 = vmax.f32 %v4018, 0.0
      %v4039 = vmax.f32 %v4019, 0.0
      %v4040 = vmax.f32 %v4020, 0.0
      %v4041 = vmax.f32 %v4021, 0.0
      %v4042 = vmax.f32 %v4022, 0.0
      %v4043 = vmax.f32 %v4023, 0.0
      %v4044 = vmax.f32 %v4024, 0.0
      %v4045 = vmax.f32 %v4025, 0.0
      %v4046 = vmax.f32 %v4026, 0.0
      %v4047 = vmax.f32 %v4027, 0.0
      %v4048 = vmax.f32 %v4028, 0.0
      %v4049 = vmax.f32 %v4029, 0.0
      %v4050 = vmax.f32 %v4030, 0.0
      %v4051 = vmax.f32 %v4031, 0.0
      %v4052 = vmax.f32 %v4032, 0.0
      %v4053 = vmax.f32 %v4033, 0.0
      %v4054 = vmax.f32 %v4034, 0.0
      %v4055 = vmax.f32 %v4035, 0.0
      %v4056 = vmax.f32 %v4036, 0.0
      %v4057 = vpack.c.bf16 %v4039, %v4037
      %v4058 = vpack.c.bf16 %v4040, %v4038
      %v4059 = vpack.c.bf16 %v4043, %v4041
      %v4060 = vpack.c.bf16 %v4044, %v4042
      %v4061 = vpack.c.bf16 %v4047, %v4045
      %v4062 = vpack.c.bf16 %v4048, %v4046
      %v4063 = vpack.c.bf16 %v4051, %v4049
      %v4064 = vpack.c.bf16 %v4052, %v4050
      %v4065 = vpack.c.bf16 %v4055, %v4053
      %v4066 = vpack.c.bf16 %v4056, %v4054
      %v4067 = vld [vmem:[%s3] sm:$0xf]
      %v4068 = vld [vmem:[%s3 + $0x4] sm:$0xf]
      %v4069 = vld [vmem:[%s3 + $0x8] sm:$0xf]
      %v4070 = vld [vmem:[%s3 + $0xc] sm:$0xf]
      %v4071 = vld [vmem:[%s3 + $0x10] sm:$0xf]
      %v4072 = vld [vmem:[%s3 + $0x14] sm:$0xf]
      %v4073 = vld [vmem:[%s3 + $0x18] sm:$0xf]
      %v4074 = vld [vmem:[%s3 + $0x1c] sm:$0xf]
      %v4075 = vld [vmem:[%s3 + $0x20] sm:$0xf]
      %v4076 = vld [vmem:[%s3 + $0x24] sm:$0xf]
      %v4077 = vld [vmem:[%s3 + $0x28] sm:$0xf]
      %v4078 = vld [vmem:[%s3 + $0x2c] sm:$0xf]
      %v4079 = vld [vmem:[%s3 + $0x30] sm:$0xf]
      %v4080 = vld [vmem:[%s3 + $0x34] sm:$0xf]
      %v4081 = vld [vmem:[%s3 + $0x38] sm:$0xf]
      %v4082 = vld [vmem:[%s3 + $0x3c] sm:$0xf]
      %v4083 = vld [vmem:[%s3 + $0x40] sm:$0xf]
      %v4084 = vld [vmem:[%s3 + $0x44] sm:$0xf]
      %v4085 = vld [vmem:[%s3 + $0x48] sm:$0xf]
      %v4086 = vld [vmem:[%s3 + $0x4c] sm:$0xf]
      %v4087 = vld [vmem:[%s3 + $0x50] sm:$0xf]
      %v4088 = vld [vmem:[%s3 + $0x54] sm:$0xf]
      %v4089 = vld [vmem:[%s3 + $0x58] sm:$0xf]
      %v4090 = vld [vmem:[%s3 + $0x5c] sm:$0xf]
      %v4091 = vld [vmem:[%s3 + $0x60] sm:$0xf]
      %v4092 = vld [vmem:[%s3 + $0x64] sm:$0xf]
      %v4093 = vld [vmem:[%s3 + $0x68] sm:$0xf]
      %v4094 = vld [vmem:[%s3 + $0x6c] sm:$0xf]
      %v4095 = vld [vmem:[%s3 + $0x70] sm:$0xf]
      %v4096 = vld [vmem:[%s3 + $0x74] sm:$0xf]
      %v4097 = vld [vmem:[%s3 + $0x78] sm:$0xf]
      %v4098 = vld [vmem:[%s3 + $0x7c] sm:$0xf]
      %v4099 = vld [vmem:[%s4] sm:$0x1]
      %v4101 = vperm.slane %v4099, 0
      %v4135 = vunpack.c.l.b16 %v4067
      %v4136 = vunpack.c.l.b16 %v4068
      %v4137 = vunpack.c.l.b16 %v4069
      %v4138 = vunpack.c.l.b16 %v4070
      %v4139 = vunpack.c.l.b16 %v4071
      %v4140 = vunpack.c.l.b16 %v4072
      %v4141 = vunpack.c.l.b16 %v4073
      %v4142 = vunpack.c.l.b16 %v4074
      %v4143 = vunpack.c.l.b16 %v4075
      %v4144 = vunpack.c.l.b16 %v4076
      %v4145 = vunpack.c.l.b16 %v4077
      %v4146 = vunpack.c.l.b16 %v4078
      %v4147 = vunpack.c.l.b16 %v4079
      %v4148 = vunpack.c.l.b16 %v4080
      %v4149 = vunpack.c.l.b16 %v4081
      %v4150 = vunpack.c.l.b16 %v4082
      %v4151 = vunpack.c.l.b16 %v4083
      %v4152 = vunpack.c.l.b16 %v4084
      %v4153 = vunpack.c.l.b16 %v4085
      %v4154 = vunpack.c.l.b16 %v4086
      %v4155 = vunpack.c.l.b16 %v4087
      %v4156 = vunpack.c.l.b16 %v4088
      %v4157 = vunpack.c.l.b16 %v4089
      %v4158 = vunpack.c.l.b16 %v4090
      %v4159 = vunpack.c.l.b16 %v4091
      %v4160 = vunpack.c.l.b16 %v4092
      %v4161 = vunpack.c.l.b16 %v4093
      %v4162 = vunpack.c.l.b16 %v4094
      %v4163 = vunpack.c.l.b16 %v4095
      %v4164 = vunpack.c.l.b16 %v4096
      %v4165 = vunpack.c.l.b16 %v4097
      %v4166 = vunpack.c.l.b16 %v4098
      %v4167 = vpack.c.b16 %v4136, %v4135
      %v4168 = vpack.c.b16 %v4138, %v4137
      %v4169 = vpack.c.b16 %v4140, %v4139
      %v4170 = vpack.c.b16 %v4142, %v4141
      %v4171 = vpack.c.b16 %v4144, %v4143
      %v4172 = vpack.c.b16 %v4146, %v4145
      %v4173 = vpack.c.b16 %v4148, %v4147
      %v4174 = vpack.c.b16 %v4150, %v4149
      %v4175 = vpack.c.b16 %v4152, %v4151
      %v4176 = vpack.c.b16 %v4154, %v4153
      %v4177 = vpack.c.b16 %v4156, %v4155
      %v4178 = vpack.c.b16 %v4158, %v4157
      %v4179 = vpack.c.b16 %v4160, %v4159
      %v4180 = vpack.c.b16 %v4162, %v4161
      %v4181 = vpack.c.b16 %v4164, %v4163
      %v4182 = vpack.c.b16 %v4166, %v4165
      %4199 = vmatpush.bf16.msra.mxu0 %v4174
      %4200 = vmatpush.bf16.msra.mxu0 %v4173
      %4201 = vmatpush.bf16.msra.mxu0 %v4172
      %4202 = vmatpush.bf16.msra.mxu0 %v4171
      %4203 = vmatpush.bf16.msra.mxu0 %v4170
      %4204 = vmatpush.bf16.msra.mxu0 %v4169
      %4205 = vmatpush.bf16.msra.mxu0 %v4168
      %4206 = vmatpush.bf16.msra.mxu0 %v4167
      %4207 = vmatmul.bf16.gmra.mxu0 %v4057
      %v4208 = vpop.f32.mrf.mxu0
      %v4209 = vadd.f32 %v4101, %v4208
      %v4210 = vpop.f32.mrf.mxu0
      %v4211 = vadd.f32 %v4101, %v4210
      %4212 = vmatmul.bf16.gmra.mxu0 %v4059
      %v4213 = vpop.f32.mrf.mxu0
      %v4214 = vadd.f32 %v4101, %v4213
      %v4215 = vpop.f32.mrf.mxu0
      %v4216 = vadd.f32 %v4101, %v4215
      %4217 = vmatmul.bf16.gmra.mxu0 %v4061
      %v4218 = vpop.f32.mrf.mxu0
      %v4219 = vadd.f32 %v4101, %v4218
      %v4220 = vpop.f32.mrf.mxu0
      %v4221 = vadd.f32 %v4101, %v4220
      %4222 = vmatmul.bf16.gmra.mxu0 %v4063
      %v4223 = vpop.f32.mrf.mxu0
      %v4224 = vadd.f32 %v4101, %v4223
      %v4225 = vpop.f32.mrf.mxu0
      %v4226 = vadd.f32 %v4101, %v4225
      %4227 = vmatmul.bf16.gmra.mxu0 %v4065
      %v4228 = vpop.f32.mrf.mxu0
      %v4229 = vadd.f32 %v4101, %v4228
      %v4230 = vpop.f32.mrf.mxu0
      %v4231 = vadd.f32 %v4101, %v4230
      %4232 = vdwg.mxu0
      %4233 = vmatpush.bf16.msra.mxu0 %v4182
      %4234 = vmatpush.bf16.msra.mxu0 %v4181
      %4235 = vmatpush.bf16.msra.mxu0 %v4180
      %4236 = vmatpush.bf16.msra.mxu0 %v4179
      %4237 = vmatpush.bf16.msra.mxu0 %v4178
      %4238 = vmatpush.bf16.msra.mxu0 %v4177
      %4239 = vmatpush.bf16.msra.mxu0 %v4176
      %4240 = vmatpush.bf16.msra.mxu0 %v4175
      %4241 = vmatmul.bf16.gmra.mxu0 %v4058
      %v4242 = vpop.f32.mrf.mxu0
      %v4243 = vadd.f32 %v4209, %v4242
      %v4244 = vpop.f32.mrf.mxu0
      %v4245 = vadd.f32 %v4211, %v4244
      %4246 = vmatmul.bf16.gmra.mxu0 %v4060
      %v4247 = vpop.f32.mrf.mxu0
      %v4248 = vadd.f32 %v4214, %v4247
      %v4249 = vpop.f32.mrf.mxu0
      %v4250 = vadd.f32 %v4216, %v4249
      %4251 = vmatmul.bf16.gmra.mxu0 %v4062
      %v4252 = vpop.f32.mrf.mxu0
      %v4253 = vadd.f32 %v4219, %v4252
      %v4254 = vpop.f32.mrf.mxu0
      %v4255 = vadd.f32 %v4221, %v4254
      %4256 = vmatmul.bf16.gmra.mxu0 %v4064
      %v4257 = vpop.f32.mrf.mxu0
      %v4258 = vadd.f32 %v4224, %v4257
      %v4259 = vpop.f32.mrf.mxu0
      %v4260 = vadd.f32 %v4226, %v4259
      %4261 = vmatmul.bf16.gmra.mxu0 %v4066
      %v4262 = vpop.f32.mrf.mxu0
      %v4263 = vadd.f32 %v4229, %v4262
      %v4264 = vpop.f32.mrf.mxu0
      %v4265 = vadd.f32 %v4231, %v4264
      %4266 = vdwg.mxu0
      %4267 = vst [vmem:[%s224] sm:$0xff] %v4243
      %4268 = vst [vmem:[%s224 + $0x8] sm:$0xff] %v4245
      %4269 = vst [vmem:[%s224 + $0x10] sm:$0xff] %v4248
      %4270 = vst [vmem:[%s224 + $0x18] sm:$0xff] %v4250
      %4271 = vst [vmem:[%s224 + $0x20] sm:$0xff] %v4253
      %4272 = vst [vmem:[%s224 + $0x28] sm:$0xff] %v4255
      %4273 = vst [vmem:[%s224 + $0x30] sm:$0xff] %v4258
      %4274 = vst [vmem:[%s224 + $0x38] sm:$0xff] %v4260
      %4275 = vst [vmem:[%s224 + $0x40] sm:$0xff] %v4263
      %4276 = vst [vmem:[%s224 + $0x48] sm:$0xff] %v4265
      %p4277 = scmp.lt.s32.totalorder %s16, 1
      %s4278 = scalar_select %p4277, %s16, 1
      %s4279 = smul.addr %s4278, 10
      %s4280 = smul.addr %s4279, 8
      %s4281 = scalar_lea.vmem %s5, %s4280
      // Predicated region
      $region41: #{decoder_forward.1} parent=39 // pred_check
        %p4282 = pneg %p144
      $region42: #{decoder_forward.1} parent=39 // pred_check_branch
        %4284 = sbr.rel (%p4282) target = $region44
      $region43: #{decoder_forward.1} parent=39 // pred_region
        _
      $region44: #{decoder_forward.1} parent=39 // pred_fallthru
        _
    $region40: #{decoder_forward.1} parent=5 // pred_fallthru
      _
    %p4285 = scmp.le.s32.totalorder 2, %s11
    // Predicated region
    $region45: #{decoder_forward.1} parent=5 // pred_check
      %p4286 = pneg %p4285
    $region46: #{decoder_forward.1} parent=5 // pred_check_branch
      %4288 = sbr.rel (%p4286) target = $region48
    $region47: #{decoder_forward.1} parent=5 // pred_region
      %s4289 = ssub.s32 %s11, 2
      // Predicated region
      $region49: #{decoder_forward.1} parent=47 // pred_check
        %p4290 = pneg %p150
      $region50: #{decoder_forward.1} parent=47 // pred_check_branch
        %4292 = sbr.rel (%p4290) target = $region52
      $region51: #{decoder_forward.1} parent=47 // pred_region
        %p4293 = scmp.lt.s32.totalorder %s17, 1
        %s4294 = scalar_select %p4293, %s17, 1
        %s4295 = smul.addr %s4294, 10
        %s4296 = smul.addr %s4295, 8
        %s4297 = scalar_lea.vmem %s5, %s4296
      $region52: #{decoder_forward.1} parent=47 // pred_fallthru
        _
    $region48: #{decoder_forward.1} parent=5 // pred_fallthru
      _
  $region6: #{decoder_forward.1} parent=0 // loop_footer
    %s15 = sadd.s32 1, %s11
  $region7: #{decoder_forward.1} parent=0 // loop_footer_branch
    %10 = sbr.rel target = $region3
  $region8: #{decoder_forward.1} parent=0 // loop_exit
    _

</llo_original>
